<compile_context>
chip_gen: v5e
topology: v5e:2x2
jax: 0.10.0
libtpu: 0.0.40
codegen_flags: <defaults>
</compile_context>

<pallas_src>
import jax
import jax.numpy as jnp
import numpy as np
from jax.experimental import pallas as pl
from jax.experimental.pallas import tpu as pltpu

# ---------------- model hyper-parameters (AllSeqCNN.__init__ defaults) -------
TCR_C, TCR_K, TCR_LEN = 20, 18, 27          # Conv1d(20 -> 1, k=18), L_in=27 -> L_out=10
HLA_C, HLA_K, HLA_LEN = 20, 25, 34          # Conv1d(20 -> 1, k=25), L_in=34 -> L_out=10
EMB = 10                                    # emb_size
H1, H2 = 25, 10                             # mlp_layers_size
TCR_FEAT = TCR_C * TCR_LEN                  # 540
HLA_FEAT = HLA_C * HLA_LEN                  # 680 per HLA stream
OUT_N = 8                                   # narrow lane-count output slab (col 0 real)


def _cdiv(a, b):
    return -(-a // b)


def _round_up(n, m):
    return _cdiv(n, m) * m


# ----------------------------- Pallas kernel ---------------------------------
def allseq_kernel(xt_ref, xh1_ref, xh2_ref, xh3_ref, xh4_ref,
                  wt_ref, wh1_ref, wh2_ref, wh3_ref, wh4_ref,
                  w1h_ref, w2_ref, wl_ref,
                  bh_ref, b1_ref, b2_ref, bl_ref,
                  out_ref):
    f32 = jnp.float32

    # Fused HLA branch: 4x (Conv1d as Toeplitz matmul) + concat + Linear(40->10),
    # expressed as four (680,10) matmuls summed in f32 (no wrapper-side concat).
    hla = jnp.tanh(
        jnp.dot(xh1_ref[...], wh1_ref[...], preferred_element_type=f32)
        + jnp.dot(xh2_ref[...], wh2_ref[...], preferred_element_type=f32)
        + jnp.dot(xh3_ref[...], wh3_ref[...], preferred_element_type=f32)
        + jnp.dot(xh4_ref[...], wh4_ref[...], preferred_element_type=f32)
        + bh_ref[...])                                                    # (TB, 10)

    # Fused TCR branch: Conv1d Toeplitz folded with mlp1's first 10 input rows.
    m = jnp.tanh(
        jnp.dot(xt_ref[...], wt_ref[...], preferred_element_type=f32)
        + jnp.dot(hla, w1h_ref[...], preferred_element_type=f32)
        + b1_ref[...])                                                    # (TB, 25)

    m = jnp.tanh(
        jnp.dot(m, w2_ref[...], preferred_element_type=f32) + b2_ref[...])  # (TB, 10)

    # Head: (10, 1) weight zero-padded to (10, OUT_N); column 0 is the output.
    out_ref[...] = jnp.dot(m, wl_ref[...], preferred_element_type=f32) + bl_ref[...]


# ----------------------------- parameter prep (host, once) -------------------
def conv1d_as_matmul_weight(w_conv, l_in):
    """(1, C, K) Conv1d weight -> (C*l_in, l_out) Toeplitz matmul weight."""
    w_conv = np.asarray(w_conv, dtype=np.float32)
    _, c, k = w_conv.shape
    l_out = l_in - k + 1
    W = np.zeros((c, l_in, l_out), dtype=np.float32)
    for t in range(l_out):
        W[:, t:t + k, t] = w_conv[0]
    return W.reshape(c * l_in, l_out)


def prepare_params(p):
    """Toeplitz-expand and algebraically fuse the weights (one time, float32)."""
    wt = conv1d_as_matmul_weight(p["w_tcr"], TCR_LEN)            # (540, 10)
    wh = conv1d_as_matmul_weight(p["w_hla"], HLA_LEN)            # (680, 10)
    bt = float(np.asarray(p["b_tcr"])[0])
    bh = float(np.asarray(p["b_hla"])[0])
    wm = np.asarray(p["w_hla_mlp"], np.float32)                  # (40, 10)
    bm = np.asarray(p["b_hla_mlp"], np.float32)                  # (1, 10)
    w1 = np.asarray(p["w_mlp1"], np.float32)                     # (20, 25)
    b1 = np.asarray(p["b_mlp1"], np.float32)                     # (1, 25)
    w2 = np.asarray(p["w_mlp2"], np.float32)                     # (25, 10)
    b2 = np.asarray(p["b_mlp2"], np.float32)                     # (1, 10)
    wl = np.asarray(p["w_last"], np.float32)                     # (10, 1)
    bl = np.asarray(p["b_last"], np.float32)                     # (1, 1)

    # HLA fusion:  tanh( concat_i(x_i @ wh + bh) @ wm + bm )
    #            = tanh( sum_i x_i @ (wh @ wm_i) + (bm + bh * (1_{1x40} @ wm)) )
    wh_fused = [wh @ wm[i * EMB:(i + 1) * EMB, :] for i in range(4)]       # 4x (680, 10)
    bh_fused = bm + bh * (np.ones((1, 4 * EMB), np.float32) @ wm)          # (1, 10)

    # TCR fusion into mlp1:
    #   (x1 @ wt + bt) @ w1[:10] = x1 @ (wt @ w1[:10]) + bt * (1_{1x10} @ w1[:10])
    wt_fused = wt @ w1[:EMB, :]                                            # (540, 25)
    b1_fused = b1 + bt * (np.ones((1, EMB), np.float32) @ w1[:EMB, :])     # (1, 25)
    w1h = w1[EMB:, :]                                                      # (10, 25)

    # Head padded to the narrow OUT_N-lane output slab.
    wl_p = np.zeros((H2, OUT_N), np.float32); wl_p[:, :1] = wl
    bl_p = np.zeros((1, OUT_N), np.float32);  bl_p[:, :1] = bl

    return {
        "wt": jnp.asarray(wt_fused),                 # float32 (accuracy: no bf16 quant)
        "wh": [jnp.asarray(w) for w in wh_fused],
        "w1h": jnp.asarray(w1h),
        "w2": jnp.asarray(w2),
        "wl": jnp.asarray(wl_p),
        "bh": jnp.asarray(bh_fused),
        "b1": jnp.asarray(b1_fused),
        "b2": jnp.asarray(b2),
        "bl": jnp.asarray(bl_p),
    }


# ----------------------------- forward wrapper --------------------------------
def allseq_forward(prepped, x1, x2, x3, x4, x5, block_b=1024):
    B = x1.shape[0]
    # Batch tile: multiple of 16, and >= 2 grid steps whenever B > 16 so the
    # "parallel" batch axis can shard across v7x's two TensorCores.
    tb = max(16, min(block_b, _round_up(_cdiv(B, 2), 16)))
    nb = _cdiv(B, tb)

    # Layout-free 2-D views of the activations: no concat / pad / cast, so the
    # only HBM traffic for activations is the kernel's own tiled DMA.  Partial
    # trailing batch blocks rely on Pallas's clipped DMA (row-independent
    # garbage rows; their out-of-bounds writes are discarded).
    xt = x1.reshape(B, TCR_FEAT)
    xh1 = x2.reshape(B, HLA_FEAT)
    xh2 = x3.reshape(B, HLA_FEAT)
    xh3 = x4.reshape(B, HLA_FEAT)
    xh4 = x5.reshape(B, HLA_FEAT)

    act_t = pl.BlockSpec((tb, TCR_FEAT), lambda i: (i, 0))
    act_h = pl.BlockSpec((tb, HLA_FEAT), lambda i: (i, 0))

    def resident(shape):  # grid-invariant weights/biases: same block every step
        return pl.BlockSpec(shape, lambda i: (0, 0))

    grid_spec = pltpu.PrefetchScalarGridSpec(
        num_scalar_prefetch=0,
        grid=(nb,),
        in_specs=[
            act_t, act_h, act_h, act_h, act_h,
            resident((TCR_FEAT, H1)),
            resident((HLA_FEAT, EMB)), resident((HLA_FEAT, EMB)),
            resident((HLA_FEAT, EMB)), resident((HLA_FEAT, EMB)),
            resident((EMB, H1)), resident((H1, H2)), resident((H2, OUT_N)),
            resident((1, EMB)), resident((1, H1)), resident((1, H2)),
            resident((1, OUT_N)),
        ],
        out_specs=pl.BlockSpec((tb, OUT_N), lambda i: (i, 0)),
    )

    weight_bytes = 4 * (TCR_FEAT * H1 + 4 * HLA_FEAT * EMB + EMB * H1
                        + H1 * H2 + H2 * OUT_N + EMB + H1 + H2 + OUT_N)
    cost = pl.CostEstimate(
        flops=2 * B * (TCR_FEAT * H1 + 4 * HLA_FEAT * EMB + EMB * H1
                       + H1 * H2 + H2 * OUT_N),
        transcendentals=B * (EMB + H1 + H2),
        bytes_accessed=4 * B * (TCR_FEAT + 4 * HLA_FEAT + OUT_N) + weight_bytes,
    )

    out = pl.pallas_call(
        allseq_kernel,
        out_shape=jax.ShapeDtypeStruct((B, OUT_N), jnp.float32),
        grid_spec=grid_spec,
        compiler_params=pltpu.CompilerParams(
            dimension_semantics=("parallel",),      # batch is embarrassingly parallel
            vmem_limit_bytes=48 * 1024 * 1024),     # covers tb=1024 f32 double-buffering
        cost_estimate=cost,
    )(xt, xh1, xh2, xh3, xh4,
      prepped["wt"], *prepped["wh"], prepped["w1h"], prepped["w2"], prepped["wl"],
      prepped["bh"], prepped["b1"], prepped["b2"], prepped["bl"])

    return out[:, :1]


# ----------------------------- init & pure-JAX reference ----------------------
def init_params(key):
    def uniform(key, shape, fan_in):
        bound = 1.0 / np.sqrt(fan_in)
        return jax.random.uniform(key, shape, jnp.float32, -bound, bound)

    ks = jax.random.split(key, 12)
    p = {}
    p["w_tcr"] = uniform(ks[0], (1, TCR_C, TCR_K), TCR_C * TCR_K)
    p["b_tcr"] = uniform(ks[1], (1,), TCR_C * TCR_K)
    p["w_hla"] = uniform(ks[2], (1, HLA_C, HLA_K), HLA_C * HLA_K)
    p["b_hla"] = uniform(ks[3], (1,), HLA_C * HLA_K)
    p["w_hla_mlp"] = uniform(ks[4], (4 * EMB, EMB), 4 * EMB)
    p["b_hla_mlp"] = uniform(ks[5], (1, EMB), 4 * EMB)
    p["w_mlp1"] = uniform(ks[6], (2 * EMB, H1), 2 * EMB)
    p["b_mlp1"] = uniform(ks[7], (1, H1), 2 * EMB)
    p["w_mlp2"] = uniform(ks[8], (H1, H2), H1)
    p["b_mlp2"] = uniform(ks[9], (1, H2), H1)
    p["w_last"] = uniform(ks[10], (H2, 1), H2)
    p["b_last"] = uniform(ks[11], (1, 1), H2)
    return p


def _conv1d_ref(x, w, b):
    B, C, L = x.shape
    K = w.shape[2]
    lout = L - K + 1
    cols = jnp.stack([x[:, :, t:t + K] for t in range(lout)], axis=1)  # (B, lout, C, K)
    return jnp.einsum("btck,ck->bt", cols, w[0]) + b[0]


def ref_forward(p, x1, x2, x3, x4, x5):
    tcr = _conv1d_ref(x1, p["w_tcr"], p["b_tcr"])
    h1 = _conv1d_ref(x2, p["w_hla"], p["b_hla"])
    h2 = _conv1d_ref(x3, p["w_hla"], p["b_hla"])
    h3 = _conv1d_ref(x4, p["w_hla"], p["b_hla"])
    h4 = _conv1d_ref(x5, p["w_hla"], p["b_hla"])
    hla = jnp.tanh(jnp.concatenate([h1, h2, h3, h4], axis=1) @ p["w_hla_mlp"] + p["b_hla_mlp"])
    m = jnp.tanh(jnp.concatenate([tcr, hla], axis=1) @ p["w_mlp1"] + p["b_mlp1"])
    m = jnp.tanh(m @ p["w_mlp2"] + p["b_mlp2"])
    return m @ p["w_last"] + p["b_last"]


# ----------------------------------- main --------------------------------------
if __name__ == "__main__":
    key = jax.random.PRNGKey(0)
    kp, k1, k2, k3, k4, k5 = jax.random.split(key, 6)
    params = init_params(kp)
    prepped = prepare_params(params)   # one-time host-side fusion

    B = 256  # two grid steps with the default tiling -> exercises the pipeline
    x1 = jax.random.normal(k1, (B, TCR_C, TCR_LEN), jnp.float32)  # TCR
    x2 = jax.random.normal(k2, (B, HLA_C, HLA_LEN), jnp.float32)  # HLA 1..4
    x3 = jax.random.normal(k3, (B, HLA_C, HLA_LEN), jnp.float32)
    x4 = jax.random.normal(k4, (B, HLA_C, HLA_LEN), jnp.float32)
    x5 = jax.random.normal(k5, (B, HLA_C, HLA_LEN), jnp.float32)

    fwd = jax.jit(allseq_forward)
    out = jax.block_until_ready(fwd(prepped, x1, x2, x3, x4, x5))

    ref = ref_forward(params, x1, x2, x3, x4, x5)
    np.testing.assert_allclose(np.asarray(out), np.asarray(ref), rtol=1e-2, atol=1e-2)
    assert out.shape == (B, 1)

    print("KERNEL_OK")
</pallas_src>

<mosaic_0001>
module attributes {stable_mosaic.version = 11 : i64} {
  func.func @allseq_kernel(%arg0: i32, %arg1: memref<128x540xf32, #tpu.memory_space<vmem>>, %arg2: memref<128x680xf32, #tpu.memory_space<vmem>>, %arg3: memref<128x680xf32, #tpu.memory_space<vmem>>, %arg4: memref<128x680xf32, #tpu.memory_space<vmem>>, %arg5: memref<128x680xf32, #tpu.memory_space<vmem>>, %arg6: memref<540x25xf32, #tpu.memory_space<vmem>>, %arg7: memref<680x10xf32, #tpu.memory_space<vmem>>, %arg8: memref<680x10xf32, #tpu.memory_space<vmem>>, %arg9: memref<680x10xf32, #tpu.memory_space<vmem>>, %arg10: memref<680x10xf32, #tpu.memory_space<vmem>>, %arg11: memref<10x25xf32, #tpu.memory_space<vmem>>, %arg12: memref<25x10xf32, #tpu.memory_space<vmem>>, %arg13: memref<10x8xf32, #tpu.memory_space<vmem>>, %arg14: memref<1x10xf32, #tpu.memory_space<vmem>>, %arg15: memref<1x25xf32, #tpu.memory_space<vmem>>, %arg16: memref<1x10xf32, #tpu.memory_space<vmem>>, %arg17: memref<1x8xf32, #tpu.memory_space<vmem>>, %arg18: memref<128x8xf32, #tpu.memory_space<vmem>>) attributes {dimension_semantics = [#tpu.dimension_semantics<parallel>], iteration_bounds = array<i64: 2>, scalar_prefetch = 0 : i64, scratch_operands = 0 : i64, tpu.core_type = #tpu.core_type<tc>, window_params = [{transform_indices = @transform_0, window_bounds = array<i64: 128, 540>}, {transform_indices = @transform_1, window_bounds = array<i64: 128, 680>}, {transform_indices = @transform_2, window_bounds = array<i64: 128, 680>}, {transform_indices = @transform_3, window_bounds = array<i64: 128, 680>}, {transform_indices = @transform_4, window_bounds = array<i64: 128, 680>}, {pipeline_mode = #tpu.pipeline_mode<synchronous>, transform_indices = @transform_5, window_bounds = array<i64: 540, 25>}, {pipeline_mode = #tpu.pipeline_mode<synchronous>, transform_indices = @transform_6, window_bounds = array<i64: 680, 10>}, {pipeline_mode = #tpu.pipeline_mode<synchronous>, transform_indices = @transform_7, window_bounds = array<i64: 680, 10>}, {pipeline_mode = #tpu.pipeline_mode<synchronous>, transform_indices = @transform_8, window_bounds = array<i64: 680, 10>}, {pipeline_mode = #tpu.pipeline_mode<synchronous>, transform_indices = @transform_9, window_bounds = array<i64: 680, 10>}, {pipeline_mode = #tpu.pipeline_mode<synchronous>, transform_indices = @transform_10, window_bounds = array<i64: 10, 25>}, {pipeline_mode = #tpu.pipeline_mode<synchronous>, transform_indices = @transform_11, window_bounds = array<i64: 25, 10>}, {pipeline_mode = #tpu.pipeline_mode<synchronous>, transform_indices = @transform_12, window_bounds = array<i64: 10, 8>}, {pipeline_mode = #tpu.pipeline_mode<synchronous>, transform_indices = @transform_13, window_bounds = array<i64: 1, 10>}, {pipeline_mode = #tpu.pipeline_mode<synchronous>, transform_indices = @transform_14, window_bounds = array<i64: 1, 25>}, {pipeline_mode = #tpu.pipeline_mode<synchronous>, transform_indices = @transform_15, window_bounds = array<i64: 1, 10>}, {pipeline_mode = #tpu.pipeline_mode<synchronous>, transform_indices = @transform_16, window_bounds = array<i64: 1, 8>}, {transform_indices = @transform_17, window_bounds = array<i64: 128, 8>}]} {
    %c0 = arith.constant 0 : index
    %c0_0 = arith.constant 0 : index
    %0 = vector.load %arg2[%c0, %c0_0] : memref<128x680xf32, #tpu.memory_space<vmem>>, vector<128x680xf32>
    %c0_1 = arith.constant 0 : index
    %c0_2 = arith.constant 0 : index
    %1 = vector.load %arg7[%c0_1, %c0_2] : memref<680x10xf32, #tpu.memory_space<vmem>>, vector<680x10xf32>
    %cst = arith.constant dense<0.000000e+00> : vector<128x10xf32>
    %2 = tpu.matmul %0, %1, %cst {dimension_numbers = #tpu.dot_dimension_numbers<[1], [0], [0], [1], [0, 0, 1, 1], [], []>} : vector<128x680xf32>, vector<680x10xf32>, vector<128x10xf32> -> vector<128x10xf32>
    %c0_3 = arith.constant 0 : index
    %c0_4 = arith.constant 0 : index
    %3 = vector.load %arg3[%c0_3, %c0_4] : memref<128x680xf32, #tpu.memory_space<vmem>>, vector<128x680xf32>
    %c0_5 = arith.constant 0 : index
    %c0_6 = arith.constant 0 : index
    %4 = vector.load %arg8[%c0_5, %c0_6] : memref<680x10xf32, #tpu.memory_space<vmem>>, vector<680x10xf32>
    %cst_7 = arith.constant dense<0.000000e+00> : vector<128x10xf32>
    %5 = tpu.matmul %3, %4, %cst_7 {dimension_numbers = #tpu.dot_dimension_numbers<[1], [0], [0], [1], [0, 0, 1, 1], [], []>} : vector<128x680xf32>, vector<680x10xf32>, vector<128x10xf32> -> vector<128x10xf32>
    %6 = arith.addf %2, %5 : vector<128x10xf32>
    %c0_8 = arith.constant 0 : index
    %c0_9 = arith.constant 0 : index
    %7 = vector.load %arg4[%c0_8, %c0_9] : memref<128x680xf32, #tpu.memory_space<vmem>>, vector<128x680xf32>
    %c0_10 = arith.constant 0 : index
    %c0_11 = arith.constant 0 : index
    %8 = vector.load %arg9[%c0_10, %c0_11] : memref<680x10xf32, #tpu.memory_space<vmem>>, vector<680x10xf32>
    %cst_12 = arith.constant dense<0.000000e+00> : vector<128x10xf32>
    %9 = tpu.matmul %7, %8, %cst_12 {dimension_numbers = #tpu.dot_dimension_numbers<[1], [0], [0], [1], [0, 0, 1, 1], [], []>} : vector<128x680xf32>, vector<680x10xf32>, vector<128x10xf32> -> vector<128x10xf32>
    %10 = arith.addf %6, %9 : vector<128x10xf32>
    %c0_13 = arith.constant 0 : index
    %c0_14 = arith.constant 0 : index
    %11 = vector.load %arg5[%c0_13, %c0_14] : memref<128x680xf32, #tpu.memory_space<vmem>>, vector<128x680xf32>
    %c0_15 = arith.constant 0 : index
    %c0_16 = arith.constant 0 : index
    %12 = vector.load %arg10[%c0_15, %c0_16] : memref<680x10xf32, #tpu.memory_space<vmem>>, vector<680x10xf32>
    %cst_17 = arith.constant dense<0.000000e+00> : vector<128x10xf32>
    %13 = tpu.matmul %11, %12, %cst_17 {dimension_numbers = #tpu.dot_dimension_numbers<[1], [0], [0], [1], [0, 0, 1, 1], [], []>} : vector<128x680xf32>, vector<680x10xf32>, vector<128x10xf32> -> vector<128x10xf32>
    %14 = arith.addf %10, %13 : vector<128x10xf32>
    %c0_18 = arith.constant 0 : index
    %c0_19 = arith.constant 0 : index
    %15 = vector.load %arg14[%c0_18, %c0_19] : memref<1x10xf32, #tpu.memory_space<vmem>>, vector<1x10xf32>
    %16 = vector.broadcast %15 : vector<1x10xf32> to vector<128x10xf32>
    %17 = arith.addf %14, %16 : vector<128x10xf32>
    %18 = math.tanh %17 : vector<128x10xf32>
    %c0_20 = arith.constant 0 : index
    %c0_21 = arith.constant 0 : index
    %19 = vector.load %arg1[%c0_20, %c0_21] : memref<128x540xf32, #tpu.memory_space<vmem>>, vector<128x540xf32>
    %c0_22 = arith.constant 0 : index
    %c0_23 = arith.constant 0 : index
    %20 = vector.load %arg6[%c0_22, %c0_23] : memref<540x25xf32, #tpu.memory_space<vmem>>, vector<540x25xf32>
    %cst_24 = arith.constant dense<0.000000e+00> : vector<128x25xf32>
    %21 = tpu.matmul %19, %20, %cst_24 {dimension_numbers = #tpu.dot_dimension_numbers<[1], [0], [0], [1], [0, 0, 1, 1], [], []>} : vector<128x540xf32>, vector<540x25xf32>, vector<128x25xf32> -> vector<128x25xf32>
    %c0_25 = arith.constant 0 : index
    %c0_26 = arith.constant 0 : index
    %22 = vector.load %arg11[%c0_25, %c0_26] : memref<10x25xf32, #tpu.memory_space<vmem>>, vector<10x25xf32>
    %cst_27 = arith.constant dense<0.000000e+00> : vector<128x25xf32>
    %23 = tpu.matmul %18, %22, %cst_27 {dimension_numbers = #tpu.dot_dimension_numbers<[1], [0], [0], [1], [0, 0, 1, 1], [], []>} : vector<128x10xf32>, vector<10x25xf32>, vector<128x25xf32> -> vector<128x25xf32>
    %24 = arith.addf %21, %23 : vector<128x25xf32>
    %c0_28 = arith.constant 0 : index
    %c0_29 = arith.constant 0 : index
    %25 = vector.load %arg15[%c0_28, %c0_29] : memref<1x25xf32, #tpu.memory_space<vmem>>, vector<1x25xf32>
    %26 = vector.broadcast %25 : vector<1x25xf32> to vector<128x25xf32>
    %27 = arith.addf %24, %26 : vector<128x25xf32>
    %28 = math.tanh %27 : vector<128x25xf32>
    %c0_30 = arith.constant 0 : index
    %c0_31 = arith.constant 0 : index
    %29 = vector.load %arg12[%c0_30, %c0_31] : memref<25x10xf32, #tpu.memory_space<vmem>>, vector<25x10xf32>
    %cst_32 = arith.constant dense<0.000000e+00> : vector<128x10xf32>
    %30 = tpu.matmul %28, %29, %cst_32 {dimension_numbers = #tpu.dot_dimension_numbers<[1], [0], [0], [1], [0, 0, 1, 1], [], []>} : vector<128x25xf32>, vector<25x10xf32>, vector<128x10xf32> -> vector<128x10xf32>
    %c0_33 = arith.constant 0 : index
    %c0_34 = arith.constant 0 : index
    %31 = vector.load %arg16[%c0_33, %c0_34] : memref<1x10xf32, #tpu.memory_space<vmem>>, vector<1x10xf32>
    %32 = vector.broadcast %31 : vector<1x10xf32> to vector<128x10xf32>
    %33 = arith.addf %30, %32 : vector<128x10xf32>
    %34 = math.tanh %33 : vector<128x10xf32>
    %c0_35 = arith.constant 0 : index
    %c0_36 = arith.constant 0 : index
    %35 = vector.load %arg13[%c0_35, %c0_36] : memref<10x8xf32, #tpu.memory_space<vmem>>, vector<10x8xf32>
    %cst_37 = arith.constant dense<0.000000e+00> : vector<128x8xf32>
    %36 = tpu.matmul %34, %35, %cst_37 {dimension_numbers = #tpu.dot_dimension_numbers<[1], [0], [0], [1], [0, 0, 1, 1], [], []>} : vector<128x10xf32>, vector<10x8xf32>, vector<128x8xf32> -> vector<128x8xf32>
    %c0_38 = arith.constant 0 : index
    %c0_39 = arith.constant 0 : index
    %37 = vector.load %arg17[%c0_38, %c0_39] : memref<1x8xf32, #tpu.memory_space<vmem>>, vector<1x8xf32>
    %38 = vector.broadcast %37 : vector<1x8xf32> to vector<128x8xf32>
    %39 = arith.addf %36, %38 : vector<128x8xf32>
    %c0_40 = arith.constant 0 : index
    %c0_41 = arith.constant 0 : index
    %40 = vector.load %arg18[%c0_40, %c0_41] : memref<128x8xf32, #tpu.memory_space<vmem>>, vector<128x8xf32>
    tpu.vector_store %arg18[%c0_40, %c0_41], %39 {strides = array<i32>} : memref<128x8xf32, #tpu.memory_space<vmem>>, vector<128x8xf32>,
    return
  }
  func.func @transform_0(%arg0: i32) -> (i32, i32) {
    %c0_i32 = arith.constant 0 : i32
    %c0_i32_0 = arith.constant 0 : i32
    return %arg0, %c0_i32 : i32, i32
  }
  func.func @transform_1(%arg0: i32) -> (i32, i32) {
    %c0_i32 = arith.constant 0 : i32
    %c0_i32_0 = arith.constant 0 : i32
    return %arg0, %c0_i32 : i32, i32
  }
  func.func @transform_2(%arg0: i32) -> (i32, i32) {
    %c0_i32 = arith.constant 0 : i32
    %c0_i32_0 = arith.constant 0 : i32
    return %arg0, %c0_i32 : i32, i32
  }
  func.func @transform_3(%arg0: i32) -> (i32, i32) {
    %c0_i32 = arith.constant 0 : i32
    %c0_i32_0 = arith.constant 0 : i32
    return %arg0, %c0_i32 : i32, i32
  }
  func.func @transform_4(%arg0: i32) -> (i32, i32) {
    %c0_i32 = arith.constant 0 : i32
    %c0_i32_0 = arith.constant 0 : i32
    return %arg0, %c0_i32 : i32, i32
  }
  func.func @transform_5(%arg0: i32) -> (i32, i32) {
    %c0_i32 = arith.constant 0 : i32
    %c0_i32_0 = arith.constant 0 : i32
    %c0_i32_1 = arith.constant 0 : i32
    return %c0_i32, %c0_i32_0 : i32, i32
  }
  func.func @transform_6(%arg0: i32) -> (i32, i32) {
    %c0_i32 = arith.constant 0 : i32
    %c0_i32_0 = arith.constant 0 : i32
    %c0_i32_1 = arith.constant 0 : i32
    return %c0_i32, %c0_i32_0 : i32, i32
  }
  func.func @transform_7(%arg0: i32) -> (i32, i32) {
    %c0_i32 = arith.constant 0 : i32
    %c0_i32_0 = arith.constant 0 : i32
    %c0_i32_1 = arith.constant 0 : i32
    return %c0_i32, %c0_i32_0 : i32, i32
  }
  func.func @transform_8(%arg0: i32) -> (i32, i32) {
    %c0_i32 = arith.constant 0 : i32
    %c0_i32_0 = arith.constant 0 : i32
    %c0_i32_1 = arith.constant 0 : i32
    return %c0_i32, %c0_i32_0 : i32, i32
  }
  func.func @transform_9(%arg0: i32) -> (i32, i32) {
    %c0_i32 = arith.constant 0 : i32
    %c0_i32_0 = arith.constant 0 : i32
    %c0_i32_1 = arith.constant 0 : i32
    return %c0_i32, %c0_i32_0 : i32, i32
  }
  func.func @transform_10(%arg0: i32) -> (i32, i32) {
    %c0_i32 = arith.constant 0 : i32
    %c0_i32_0 = arith.constant 0 : i32
    %c0_i32_1 = arith.constant 0 : i32
    return %c0_i32, %c0_i32_0 : i32, i32
  }
  func.func @transform_11(%arg0: i32) -> (i32, i32) {
    %c0_i32 = arith.constant 0 : i32
    %c0_i32_0 = arith.constant 0 : i32
    %c0_i32_1 = arith.constant 0 : i32
    return %c0_i32, %c0_i32_0 : i32, i32
  }
  func.func @transform_12(%arg0: i32) -> (i32, i32) {
    %c0_i32 = arith.constant 0 : i32
    %c0_i32_0 = arith.constant 0 : i32
    %c0_i32_1 = arith.constant 0 : i32
    return %c0_i32, %c0_i32_0 : i32, i32
  }
  func.func @transform_13(%arg0: i32) -> (i32, i32) {
    %c0_i32 = arith.constant 0 : i32
    %c0_i32_0 = arith.constant 0 : i32
    %c0_i32_1 = arith.constant 0 : i32
    return %c0_i32, %c0_i32_0 : i32, i32
  }
  func.func @transform_14(%arg0: i32) -> (i32, i32) {
    %c0_i32 = arith.constant 0 : i32
    %c0_i32_0 = arith.constant 0 : i32
    %c0_i32_1 = arith.constant 0 : i32
    return %c0_i32, %c0_i32_0 : i32, i32
  }
  func.func @transform_15(%arg0: i32) -> (i32, i32) {
    %c0_i32 = arith.constant 0 : i32
    %c0_i32_0 = arith.constant 0 : i32
    %c0_i32_1 = arith.constant 0 : i32
    return %c0_i32, %c0_i32_0 : i32, i32
  }
  func.func @transform_16(%arg0: i32) -> (i32, i32) {
    %c0_i32 = arith.constant 0 : i32
    %c0_i32_0 = arith.constant 0 : i32
    %c0_i32_1 = arith.constant 0 : i32
    return %c0_i32, %c0_i32_0 : i32, i32
  }
  func.func @transform_17(%arg0: i32) -> (i32, i32) {
    %c0_i32 = arith.constant 0 : i32
    %c0_i32_0 = arith.constant 0 : i32
    return %arg0, %c0_i32 : i32, i32
  }
}

</mosaic_0001>

<llo_original>
// kernel: allseq_forward.1
$region0: #{allseq_forward.1}
  #allocation0 [shape = 'u32[]', space=smem, size = 0x4, offset = 0x4, fixed_abs, tag = 'smem constant byte address 0x4 - core index']
  #allocation1 [shape = 'u32[72,128]{1,0:T(1,128)}', space=vmem, size = 0x9000, scoped, tag = 'internal scratch']
  %s0 = inlined_call_operand.vmem [shape: f32[256,540], index: 0, kind: input, shape index: {}]
  %s1 = inlined_call_operand.vmem [shape: f32[256,680], index: 1, kind: input, shape index: {}]
  %s2 = inlined_call_operand.vmem [shape: f32[256,680], index: 2, kind: input, shape index: {}]
  %s3 = inlined_call_operand.vmem [shape: f32[256,680], index: 3, kind: input, shape index: {}]
  %s4 = inlined_call_operand.vmem [shape: f32[256,680], index: 4, kind: input, shape index: {}]
  %s5 = inlined_call_operand.vmem [shape: f32[540,25], index: 5, kind: input, shape index: {}]
  %s6 = inlined_call_operand.vmem [shape: f32[680,10], index: 6, kind: input, shape index: {}]
  %s7 = inlined_call_operand.vmem [shape: f32[680,10], index: 7, kind: input, shape index: {}]
  %s8 = inlined_call_operand.vmem [shape: f32[680,10], index: 8, kind: input, shape index: {}]
  %s9 = inlined_call_operand.vmem [shape: f32[680,10], index: 9, kind: input, shape index: {}]
  %s10 = inlined_call_operand.vmem [shape: f32[10,25], index: 10, kind: input, shape index: {}]
  %s11 = inlined_call_operand.vmem [shape: f32[25,10], index: 11, kind: input, shape index: {}]
  %s12 = inlined_call_operand.vmem [shape: f32[10,8], index: 12, kind: input, shape index: {}]
  %s13 = inlined_call_operand.vmem [shape: f32[1,10], index: 13, kind: input, shape index: {}]
  %s14 = inlined_call_operand.vmem [shape: f32[1,25], index: 14, kind: input, shape index: {}]
  %s15 = inlined_call_operand.vmem [shape: f32[1,10], index: 15, kind: input, shape index: {}]
  %s16 = inlined_call_operand.vmem [shape: f32[1,8], index: 16, kind: input, shape index: {}]
  %s17 = inlined_call_operand.vmem [shape: f32[256,8], index: 17, kind: output, shape index: {}]
  %s18 = sld [smem:[#allocation0]]
  $region101: #{allseq_forward.1} parent=0
    _
  %s20 = ssub.s32 1, %s18
  %s21 = scalar_select 0, %s20, %s18
  loop: start=0, step=1, limit=4
  $region2: #{allseq_forward.1} parent=0 // loop_pre_header
    _
  $region3: #{allseq_forward.1} parent=0 // loop_header
    %s23 = sphi 0, %s27
    %p24 = scmp.ge.s32.totalorder %s23, 4
    %s33 = sphi 0, %s35
    %s36 = sphi 0, %s33
    %s37 = sphi 0, %s36
    %s53 = sphi 0, %s37
    %s59 = sphi 0, %s61
    %s62 = sphi 0, %s59
    %s63 = sphi 0, %s62
    %s79 = sphi 0, %s63
    %s85 = sphi 0, %s87
    %s88 = sphi 0, %s85
    %s89 = sphi 0, %s88
    %s105 = sphi 0, %s89
    %s111 = sphi 0, %s113
    %s114 = sphi 0, %s111
    %s115 = sphi 0, %s114
    %s131 = sphi 0, %s115
    %s137 = sphi 0, %s139
    %s140 = sphi 0, %s137
    %s141 = sphi 0, %s140
    %s157 = sphi 0, %s141
    %s161 = sphi 0, %s161
    %s163 = sphi 0, %s161
    %s164 = sphi 0, %s163
    %s178 = sphi 0, %s164
    %s182 = sphi 0, %s182
    %s184 = sphi 0, %s182
    %s185 = sphi 0, %s184
    %s199 = sphi 0, %s185
    %s203 = sphi 0, %s203
    %s205 = sphi 0, %s203
    %s206 = sphi 0, %s205
    %s220 = sphi 0, %s206
    %s224 = sphi 0, %s224
    %s226 = sphi 0, %s224
    %s227 = sphi 0, %s226
    %s241 = sphi 0, %s227
    %s245 = sphi 0, %s245
    %s247 = sphi 0, %s245
    %s248 = sphi 0, %s247
    %s262 = sphi 0, %s248
    %s266 = sphi 0, %s266
    %s268 = sphi 0, %s266
    %s269 = sphi 0, %s268
    %s283 = sphi 0, %s269
    %s287 = sphi 0, %s287
    %s289 = sphi 0, %s287
    %s290 = sphi 0, %s289
    %s304 = sphi 0, %s290
    %s308 = sphi 0, %s308
    %s310 = sphi 0, %s308
    %s311 = sphi 0, %s310
    %s325 = sphi 0, %s311
    %s329 = sphi 0, %s329
    %s331 = sphi 0, %s329
    %s332 = sphi 0, %s331
    %s346 = sphi 0, %s332
    %s350 = sphi 0, %s350
    %s352 = sphi 0, %s350
    %s353 = sphi 0, %s352
    %s367 = sphi 0, %s353
    %s371 = sphi 0, %s371
    %s373 = sphi 0, %s371
    %s374 = sphi 0, %s373
    %s388 = sphi 0, %s374
    %s392 = sphi 0, %s392
    %s394 = sphi 0, %s392
    %s395 = sphi 0, %s394
    %s409 = sphi 0, %s395
    %s415 = sphi 0, %s417
    %s418 = sphi 0, %s415
    %s419 = sphi 0, %s418
    %s435 = sphi 0, %s419
  $region4: #{allseq_forward.1} parent=0 // loop_header_branch
    %26 = sbr.rel (%p24) target = $region8
  $region5: #{allseq_forward.1} parent=0 // loop_body
    %s28 = ssub.s32 %s23, 1
    %s29 = ssub.s32 %s23, 2
    %s30 = sadd.s32 %s23, 1
    %s31 = ssub.s32 %s23, %s30
    %p32 = scmp.eq.s32.totalorder %s31, 0
    %s34 = sadd.s32 %s33, 1
    %s35 = scalar_select %p32, %s33, %s34
    %p38 = pneg %p32
    %p39 = scmp.eq.s32.totalorder %s23, 1
    %p40 = por %p38, %p39
    %p41 = scmp.ne.s32.totalorder %s33, %s36
    %p42 = scmp.eq.s32.totalorder %s23, 0
    %p43 = por %p41, %p42
    %p44 = scmp.ne.s32.totalorder %s33, %s36
    %p45 = scmp.eq.s32.totalorder %s28, 1
    %p46 = por %p44, %p45
    %p47 = scmp.ne.s32.totalorder %s36, %s37
    %p48 = scmp.eq.s32.totalorder %s28, 0
    %p49 = por %p47, %p48
    %p50 = scmp.ne.s32.totalorder %s36, %s37
    %p51 = scmp.eq.s32.totalorder %s29, 1
    %p52 = por %p50, %p51
    %p54 = scmp.ne.s32.totalorder %s37, %s53
    %p55 = scmp.eq.s32.totalorder %s29, 0
    %p56 = por %p54, %p55
    %s57 = ssub.s32 %s23, %s30
    %p58 = scmp.eq.s32.totalorder %s57, 0
    %s60 = sadd.s32 %s59, 1
    %s61 = scalar_select %p58, %s59, %s60
    %p64 = pneg %p58
    %p65 = scmp.eq.s32.totalorder %s23, 1
    %p66 = por %p64, %p65
    %p67 = scmp.ne.s32.totalorder %s59, %s62
    %p68 = scmp.eq.s32.totalorder %s23, 0
    %p69 = por %p67, %p68
    %p70 = scmp.ne.s32.totalorder %s59, %s62
    %p71 = scmp.eq.s32.totalorder %s28, 1
    %p72 = por %p70, %p71
    %p73 = scmp.ne.s32.totalorder %s62, %s63
    %p74 = scmp.eq.s32.totalorder %s28, 0
    %p75 = por %p73, %p74
    %p76 = scmp.ne.s32.totalorder %s62, %s63
    %p77 = scmp.eq.s32.totalorder %s29, 1
    %p78 = por %p76, %p77
    %p80 = scmp.ne.s32.totalorder %s63, %s79
    %p81 = scmp.eq.s32.totalorder %s29, 0
    %p82 = por %p80, %p81
    %s83 = ssub.s32 %s23, %s30
    %p84 = scmp.eq.s32.totalorder %s83, 0
    %s86 = sadd.s32 %s85, 1
    %s87 = scalar_select %p84, %s85, %s86
    %p90 = pneg %p84
    %p91 = scmp.eq.s32.totalorder %s23, 1
    %p92 = por %p90, %p91
    %p93 = scmp.ne.s32.totalorder %s85, %s88
    %p94 = scmp.eq.s32.totalorder %s23, 0
    %p95 = por %p93, %p94
    %p96 = scmp.ne.s32.totalorder %s85, %s88
    %p97 = scmp.eq.s32.totalorder %s28, 1
    %p98 = por %p96, %p97
    %p99 = scmp.ne.s32.totalorder %s88, %s89
    %p100 = scmp.eq.s32.totalorder %s28, 0
    %p101 = por %p99, %p100
    %p102 = scmp.ne.s32.totalorder %s88, %s89
    %p103 = scmp.eq.s32.totalorder %s29, 1
    %p104 = por %p102, %p103
    %p106 = scmp.ne.s32.totalorder %s89, %s105
    %p107 = scmp.eq.s32.totalorder %s29, 0
    %p108 = por %p106, %p107
    %s109 = ssub.s32 %s23, %s30
    %p110 = scmp.eq.s32.totalorder %s109, 0
    %s112 = sadd.s32 %s111, 1
    %s113 = scalar_select %p110, %s111, %s112
    %p116 = pneg %p110
    %p117 = scmp.eq.s32.totalorder %s23, 1
    %p118 = por %p116, %p117
    %p119 = scmp.ne.s32.totalorder %s111, %s114
    %p120 = scmp.eq.s32.totalorder %s23, 0
    %p121 = por %p119, %p120
    %p122 = scmp.ne.s32.totalorder %s111, %s114
    %p123 = scmp.eq.s32.totalorder %s28, 1
    %p124 = por %p122, %p123
    %p125 = scmp.ne.s32.totalorder %s114, %s115
    %p126 = scmp.eq.s32.totalorder %s28, 0
    %p127 = por %p125, %p126
    %p128 = scmp.ne.s32.totalorder %s114, %s115
    %p129 = scmp.eq.s32.totalorder %s29, 1
    %p130 = por %p128, %p129
    %p132 = scmp.ne.s32.totalorder %s115, %s131
    %p133 = scmp.eq.s32.totalorder %s29, 0
    %p134 = por %p132, %p133
    %s135 = ssub.s32 %s23, %s30
    %p136 = scmp.eq.s32.totalorder %s135, 0
    %s138 = sadd.s32 %s137, 1
    %s139 = scalar_select %p136, %s137, %s138
    %p142 = pneg %p136
    %p143 = scmp.eq.s32.totalorder %s23, 1
    %p144 = por %p142, %p143
    %p145 = scmp.ne.s32.totalorder %s137, %s140
    %p146 = scmp.eq.s32.totalorder %s23, 0
    %p147 = por %p145, %p146
    %p148 = scmp.ne.s32.totalorder %s137, %s140
    %p149 = scmp.eq.s32.totalorder %s28, 1
    %p150 = por %p148, %p149
    %p151 = scmp.ne.s32.totalorder %s140, %s141
    %p152 = scmp.eq.s32.totalorder %s28, 0
    %p153 = por %p151, %p152
    %p154 = scmp.ne.s32.totalorder %s140, %s141
    %p155 = scmp.eq.s32.totalorder %s29, 1
    %p156 = por %p154, %p155
    %p158 = scmp.ne.s32.totalorder %s141, %s157
    %p159 = scmp.eq.s32.totalorder %s29, 0
    %p160 = por %p158, %p159
    %s162 = sadd.s32 %s161, 1
    %p165 = scmp.eq.s32.totalorder %s23, 1
    %p166 = scmp.ne.s32.totalorder %s161, %s163
    %p167 = scmp.eq.s32.totalorder %s23, 0
    %p168 = por %p166, %p167
    %p169 = scmp.ne.s32.totalorder %s161, %s163
    %p170 = scmp.eq.s32.totalorder %s28, 1
    %p171 = por %p169, %p170
    %p172 = scmp.ne.s32.totalorder %s163, %s164
    %p173 = scmp.eq.s32.totalorder %s28, 0
    %p174 = por %p172, %p173
    %p175 = scmp.ne.s32.totalorder %s163, %s164
    %p176 = scmp.eq.s32.totalorder %s29, 1
    %p177 = por %p175, %p176
    %p179 = scmp.ne.s32.totalorder %s164, %s178
    %p180 = scmp.eq.s32.totalorder %s29, 0
    %p181 = por %p179, %p180
    %s183 = sadd.s32 %s182, 1
    %p186 = scmp.eq.s32.totalorder %s23, 1
    %p187 = scmp.ne.s32.totalorder %s182, %s184
    %p188 = scmp.eq.s32.totalorder %s23, 0
    %p189 = por %p187, %p188
    %p190 = scmp.ne.s32.totalorder %s182, %s184
    %p191 = scmp.eq.s32.totalorder %s28, 1
    %p192 = por %p190, %p191
    %p193 = scmp.ne.s32.totalorder %s184, %s185
    %p194 = scmp.eq.s32.totalorder %s28, 0
    %p195 = por %p193, %p194
    %p196 = scmp.ne.s32.totalorder %s184, %s185
    %p197 = scmp.eq.s32.totalorder %s29, 1
    %p198 = por %p196, %p197
    %p200 = scmp.ne.s32.totalorder %s185, %s199
    %p201 = scmp.eq.s32.totalorder %s29, 0
    %p202 = por %p200, %p201
    %s204 = sadd.s32 %s203, 1
    %p207 = scmp.eq.s32.totalorder %s23, 1
    %p208 = scmp.ne.s32.totalorder %s203, %s205
    %p209 = scmp.eq.s32.totalorder %s23, 0
    %p210 = por %p208, %p209
    %p211 = scmp.ne.s32.totalorder %s203, %s205
    %p212 = scmp.eq.s32.totalorder %s28, 1
    %p213 = por %p211, %p212
    %p214 = scmp.ne.s32.totalorder %s205, %s206
    %p215 = scmp.eq.s32.totalorder %s28, 0
    %p216 = por %p214, %p215
    %p217 = scmp.ne.s32.totalorder %s205, %s206
    %p218 = scmp.eq.s32.totalorder %s29, 1
    %p219 = por %p217, %p218
    %p221 = scmp.ne.s32.totalorder %s206, %s220
    %p222 = scmp.eq.s32.totalorder %s29, 0
    %p223 = por %p221, %p222
    %s225 = sadd.s32 %s224, 1
    %p228 = scmp.eq.s32.totalorder %s23, 1
    %p229 = scmp.ne.s32.totalorder %s224, %s226
    %p230 = scmp.eq.s32.totalorder %s23, 0
    %p231 = por %p229, %p230
    %p232 = scmp.ne.s32.totalorder %s224, %s226
    %p233 = scmp.eq.s32.totalorder %s28, 1
    %p234 = por %p232, %p233
    %p235 = scmp.ne.s32.totalorder %s226, %s227
    %p236 = scmp.eq.s32.totalorder %s28, 0
    %p237 = por %p235, %p236
    %p238 = scmp.ne.s32.totalorder %s226, %s227
    %p239 = scmp.eq.s32.totalorder %s29, 1
    %p240 = por %p238, %p239
    %p242 = scmp.ne.s32.totalorder %s227, %s241
    %p243 = scmp.eq.s32.totalorder %s29, 0
    %p244 = por %p242, %p243
    %s246 = sadd.s32 %s245, 1
    %p249 = scmp.eq.s32.totalorder %s23, 1
    %p250 = scmp.ne.s32.totalorder %s245, %s247
    %p251 = scmp.eq.s32.totalorder %s23, 0
    %p252 = por %p250, %p251
    %p253 = scmp.ne.s32.totalorder %s245, %s247
    %p254 = scmp.eq.s32.totalorder %s28, 1
    %p255 = por %p253, %p254
    %p256 = scmp.ne.s32.totalorder %s247, %s248
    %p257 = scmp.eq.s32.totalorder %s28, 0
    %p258 = por %p256, %p257
    %p259 = scmp.ne.s32.totalorder %s247, %s248
    %p260 = scmp.eq.s32.totalorder %s29, 1
    %p261 = por %p259, %p260
    %p263 = scmp.ne.s32.totalorder %s248, %s262
    %p264 = scmp.eq.s32.totalorder %s29, 0
    %p265 = por %p263, %p264
    %s267 = sadd.s32 %s266, 1
    %p270 = scmp.eq.s32.totalorder %s23, 1
    %p271 = scmp.ne.s32.totalorder %s266, %s268
    %p272 = scmp.eq.s32.totalorder %s23, 0
    %p273 = por %p271, %p272
    %p274 = scmp.ne.s32.totalorder %s266, %s268
    %p275 = scmp.eq.s32.totalorder %s28, 1
    %p276 = por %p274, %p275
    %p277 = scmp.ne.s32.totalorder %s268, %s269
    %p278 = scmp.eq.s32.totalorder %s28, 0
    %p279 = por %p277, %p278
    %p280 = scmp.ne.s32.totalorder %s268, %s269
    %p281 = scmp.eq.s32.totalorder %s29, 1
    %p282 = por %p280, %p281
    %p284 = scmp.ne.s32.totalorder %s269, %s283
    %p285 = scmp.eq.s32.totalorder %s29, 0
    %p286 = por %p284, %p285
    %s288 = sadd.s32 %s287, 1
    %p291 = scmp.eq.s32.totalorder %s23, 1
    %p292 = scmp.ne.s32.totalorder %s287, %s289
    %p293 = scmp.eq.s32.totalorder %s23, 0
    %p294 = por %p292, %p293
    %p295 = scmp.ne.s32.totalorder %s287, %s289
    %p296 = scmp.eq.s32.totalorder %s28, 1
    %p297 = por %p295, %p296
    %p298 = scmp.ne.s32.totalorder %s289, %s290
    %p299 = scmp.eq.s32.totalorder %s28, 0
    %p300 = por %p298, %p299
    %p301 = scmp.ne.s32.totalorder %s289, %s290
    %p302 = scmp.eq.s32.totalorder %s29, 1
    %p303 = por %p301, %p302
    %p305 = scmp.ne.s32.totalorder %s290, %s304
    %p306 = scmp.eq.s32.totalorder %s29, 0
    %p307 = por %p305, %p306
    %s309 = sadd.s32 %s308, 1
    %p312 = scmp.eq.s32.totalorder %s23, 1
    %p313 = scmp.ne.s32.totalorder %s308, %s310
    %p314 = scmp.eq.s32.totalorder %s23, 0
    %p315 = por %p313, %p314
    %p316 = scmp.ne.s32.totalorder %s308, %s310
    %p317 = scmp.eq.s32.totalorder %s28, 1
    %p318 = por %p316, %p317
    %p319 = scmp.ne.s32.totalorder %s310, %s311
    %p320 = scmp.eq.s32.totalorder %s28, 0
    %p321 = por %p319, %p320
    %p322 = scmp.ne.s32.totalorder %s310, %s311
    %p323 = scmp.eq.s32.totalorder %s29, 1
    %p324 = por %p322, %p323
    %p326 = scmp.ne.s32.totalorder %s311, %s325
    %p327 = scmp.eq.s32.totalorder %s29, 0
    %p328 = por %p326, %p327
    %s330 = sadd.s32 %s329, 1
    %p333 = scmp.eq.s32.totalorder %s23, 1
    %p334 = scmp.ne.s32.totalorder %s329, %s331
    %p335 = scmp.eq.s32.totalorder %s23, 0
    %p336 = por %p334, %p335
    %p337 = scmp.ne.s32.totalorder %s329, %s331
    %p338 = scmp.eq.s32.totalorder %s28, 1
    %p339 = por %p337, %p338
    %p340 = scmp.ne.s32.totalorder %s331, %s332
    %p341 = scmp.eq.s32.totalorder %s28, 0
    %p342 = por %p340, %p341
    %p343 = scmp.ne.s32.totalorder %s331, %s332
    %p344 = scmp.eq.s32.totalorder %s29, 1
    %p345 = por %p343, %p344
    %p347 = scmp.ne.s32.totalorder %s332, %s346
    %p348 = scmp.eq.s32.totalorder %s29, 0
    %p349 = por %p347, %p348
    %s351 = sadd.s32 %s350, 1
    %p354 = scmp.eq.s32.totalorder %s23, 1
    %p355 = scmp.ne.s32.totalorder %s350, %s352
    %p356 = scmp.eq.s32.totalorder %s23, 0
    %p357 = por %p355, %p356
    %p358 = scmp.ne.s32.totalorder %s350, %s352
    %p359 = scmp.eq.s32.totalorder %s28, 1
    %p360 = por %p358, %p359
    %p361 = scmp.ne.s32.totalorder %s352, %s353
    %p362 = scmp.eq.s32.totalorder %s28, 0
    %p363 = por %p361, %p362
    %p364 = scmp.ne.s32.totalorder %s352, %s353
    %p365 = scmp.eq.s32.totalorder %s29, 1
    %p366 = por %p364, %p365
    %p368 = scmp.ne.s32.totalorder %s353, %s367
    %p369 = scmp.eq.s32.totalorder %s29, 0
    %p370 = por %p368, %p369
    %s372 = sadd.s32 %s371, 1
    %p375 = scmp.eq.s32.totalorder %s23, 1
    %p376 = scmp.ne.s32.totalorder %s371, %s373
    %p377 = scmp.eq.s32.totalorder %s23, 0
    %p378 = por %p376, %p377
    %p379 = scmp.ne.s32.totalorder %s371, %s373
    %p380 = scmp.eq.s32.totalorder %s28, 1
    %p381 = por %p379, %p380
    %p382 = scmp.ne.s32.totalorder %s373, %s374
    %p383 = scmp.eq.s32.totalorder %s28, 0
    %p384 = por %p382, %p383
    %p385 = scmp.ne.s32.totalorder %s373, %s374
    %p386 = scmp.eq.s32.totalorder %s29, 1
    %p387 = por %p385, %p386
    %p389 = scmp.ne.s32.totalorder %s374, %s388
    %p390 = scmp.eq.s32.totalorder %s29, 0
    %p391 = por %p389, %p390
    %s393 = sadd.s32 %s392, 1
    %p396 = scmp.eq.s32.totalorder %s23, 1
    %p397 = scmp.ne.s32.totalorder %s392, %s394
    %p398 = scmp.eq.s32.totalorder %s23, 0
    %p399 = por %p397, %p398
    %p400 = scmp.ne.s32.totalorder %s392, %s394
    %p401 = scmp.eq.s32.totalorder %s28, 1
    %p402 = por %p400, %p401
    %p403 = scmp.ne.s32.totalorder %s394, %s395
    %p404 = scmp.eq.s32.totalorder %s28, 0
    %p405 = por %p403, %p404
    %p406 = scmp.ne.s32.totalorder %s394, %s395
    %p407 = scmp.eq.s32.totalorder %s29, 1
    %p408 = por %p406, %p407
    %p410 = scmp.ne.s32.totalorder %s395, %s409
    %p411 = scmp.eq.s32.totalorder %s29, 0
    %p412 = por %p410, %p411
    %s413 = ssub.s32 %s23, %s30
    %p414 = scmp.eq.s32.totalorder %s413, 0
    %s416 = sadd.s32 %s415, 1
    %s417 = scalar_select %p414, %s415, %s416
    %p420 = pneg %p414
    %p421 = scmp.eq.s32.totalorder %s23, 1
    %p422 = por %p420, %p421
    %p423 = scmp.ne.s32.totalorder %s415, %s418
    %p424 = scmp.eq.s32.totalorder %s23, 0
    %p425 = por %p423, %p424
    %p426 = scmp.ne.s32.totalorder %s415, %s418
    %p427 = scmp.eq.s32.totalorder %s28, 1
    %p428 = por %p426, %p427
    %p429 = scmp.ne.s32.totalorder %s418, %s419
    %p430 = scmp.eq.s32.totalorder %s28, 0
    %p431 = por %p429, %p430
    %p432 = scmp.ne.s32.totalorder %s418, %s419
    %p433 = scmp.eq.s32.totalorder %s29, 1
    %p434 = por %p432, %p433
    %p436 = scmp.ne.s32.totalorder %s419, %s435
    %p437 = scmp.eq.s32.totalorder %s29, 0
    %p438 = por %p436, %p437
    %p439 = scmp.le.s32.totalorder 1, %s23
    %p440 = scmp.lt.s32.totalorder %s23, 3
    %p441 = pnand %p439, %p440
    %p442 = pneg %p441
    // Predicated region
    $region9: #{allseq_forward.1} parent=5 // pred_check
      _
    $region10: #{allseq_forward.1} parent=5 // pred_check_branch
      %444 = sbr.rel (%p441) target = $region12
    $region11: #{allseq_forward.1} parent=5 // pred_region
      %s445 = ssub.s32 %s23, 1
      // Predicated region
      $region13: #{allseq_forward.1} parent=11 // pred_check
        %p446 = pneg %p174
      $region14: #{allseq_forward.1} parent=11 // pred_check_branch
        %448 = sbr.rel (%p446) target = $region16
      $region15: #{allseq_forward.1} parent=11 // pred_region
        _
      $region16: #{allseq_forward.1} parent=11 // pred_fallthru
        _
      // Predicated region
      $region17: #{allseq_forward.1} parent=11 // pred_check
        %p449 = pneg %p195
      $region18: #{allseq_forward.1} parent=11 // pred_check_branch
        %451 = sbr.rel (%p449) target = $region20
      $region19: #{allseq_forward.1} parent=11 // pred_region
        _
      $region20: #{allseq_forward.1} parent=11 // pred_fallthru
        _
      // Predicated region
      $region21: #{allseq_forward.1} parent=11 // pred_check
        %p452 = pneg %p216
      $region22: #{allseq_forward.1} parent=11 // pred_check_branch
        %454 = sbr.rel (%p452) target = $region24
      $region23: #{allseq_forward.1} parent=11 // pred_region
        _
      $region24: #{allseq_forward.1} parent=11 // pred_fallthru
        _
      // Predicated region
      $region25: #{allseq_forward.1} parent=11 // pred_check
        %p455 = pneg %p237
      $region26: #{allseq_forward.1} parent=11 // pred_check_branch
        %457 = sbr.rel (%p455) target = $region28
      $region27: #{allseq_forward.1} parent=11 // pred_region
        _
      $region28: #{allseq_forward.1} parent=11 // pred_fallthru
        _
      // Predicated region
      $region29: #{allseq_forward.1} parent=11 // pred_check
        %p458 = pneg %p258
      $region30: #{allseq_forward.1} parent=11 // pred_check_branch
        %460 = sbr.rel (%p458) target = $region32
      $region31: #{allseq_forward.1} parent=11 // pred_region
        _
      $region32: #{allseq_forward.1} parent=11 // pred_fallthru
        _
      // Predicated region
      $region33: #{allseq_forward.1} parent=11 // pred_check
        %p461 = pneg %p279
      $region34: #{allseq_forward.1} parent=11 // pred_check_branch
        %463 = sbr.rel (%p461) target = $region36
      $region35: #{allseq_forward.1} parent=11 // pred_region
        _
      $region36: #{allseq_forward.1} parent=11 // pred_fallthru
        _
      // Predicated region
      $region37: #{allseq_forward.1} parent=11 // pred_check
        %p464 = pneg %p300
      $region38: #{allseq_forward.1} parent=11 // pred_check_branch
        %466 = sbr.rel (%p464) target = $region40
      $region39: #{allseq_forward.1} parent=11 // pred_region
        _
      $region40: #{allseq_forward.1} parent=11 // pred_fallthru
        _
      // Predicated region
      $region41: #{allseq_forward.1} parent=11 // pred_check
        %p467 = pneg %p321
      $region42: #{allseq_forward.1} parent=11 // pred_check_branch
        %469 = sbr.rel (%p467) target = $region44
      $region43: #{allseq_forward.1} parent=11 // pred_region
        _
      $region44: #{allseq_forward.1} parent=11 // pred_fallthru
        _
      // Predicated region
      $region45: #{allseq_forward.1} parent=11 // pred_check
        %p470 = pneg %p342
      $region46: #{allseq_forward.1} parent=11 // pred_check_branch
        %472 = sbr.rel (%p470) target = $region48
      $region47: #{allseq_forward.1} parent=11 // pred_region
        _
      $region48: #{allseq_forward.1} parent=11 // pred_fallthru
        _
      // Predicated region
      $region49: #{allseq_forward.1} parent=11 // pred_check
        %p473 = pneg %p363
      $region50: #{allseq_forward.1} parent=11 // pred_check_branch
        %475 = sbr.rel (%p473) target = $region52
      $region51: #{allseq_forward.1} parent=11 // pred_region
        _
      $region52: #{allseq_forward.1} parent=11 // pred_fallthru
        _
      // Predicated region
      $region53: #{allseq_forward.1} parent=11 // pred_check
        %p476 = pneg %p384
      $region54: #{allseq_forward.1} parent=11 // pred_check_branch
        %478 = sbr.rel (%p476) target = $region56
      $region55: #{allseq_forward.1} parent=11 // pred_region
        _
      $region56: #{allseq_forward.1} parent=11 // pred_fallthru
        _
      // Predicated region
      $region57: #{allseq_forward.1} parent=11 // pred_check
        %p479 = pneg %p405
      $region58: #{allseq_forward.1} parent=11 // pred_check_branch
        %481 = sbr.rel (%p479) target = $region60
      $region59: #{allseq_forward.1} parent=11 // pred_region
        _
      $region60: #{allseq_forward.1} parent=11 // pred_fallthru
        _
    $region12: #{allseq_forward.1} parent=5 // pred_fallthru
      _
    %p482 = scmp.lt.s32.totalorder %s23, 2
    // Predicated region
    $region61: #{allseq_forward.1} parent=5 // pred_check
      %p483 = pneg %p482
    $region62: #{allseq_forward.1} parent=5 // pred_check_branch
      %485 = sbr.rel (%p483) target = $region64
    $region63: #{allseq_forward.1} parent=5 // pred_region
      // Predicated region
      $region65: #{allseq_forward.1} parent=63 // pred_check
        %p486 = pneg %p43
      $region66: #{allseq_forward.1} parent=63 // pred_check_branch
        %488 = sbr.rel (%p486) target = $region68
      $region67: #{allseq_forward.1} parent=63 // pred_region
        %s489 = smul.u32 16, %s23
        %p490 = scmp.lt.s32.totalorder %s489, 31
        %s491 = scalar_select %p490, %s489, 31
        %s492 = smul.addr %s491, 5
        %s493 = smul.addr %s492, 8
        %s494 = scalar_lea.vmem %s0, %s493
        %s495 = smul.u32 16, %s23
      $region68: #{allseq_forward.1} parent=63 // pred_fallthru
        _
      // Predicated region
      $region69: #{allseq_forward.1} parent=63 // pred_check
        %p496 = pneg %p69
      $region70: #{allseq_forward.1} parent=63 // pred_check_branch
        %498 = sbr.rel (%p496) target = $region72
      $region71: #{allseq_forward.1} parent=63 // pred_region
        %s499 = smul.u32 16, %s23
        %p500 = scmp.lt.s32.totalorder %s499, 31
        %s501 = scalar_select %p500, %s499, 31
        %s502 = smul.addr %s501, 6
        %s503 = smul.addr %s502, 8
        %s504 = scalar_lea.vmem %s1, %s503
        %s505 = smul.u32 16, %s23
      $region72: #{allseq_forward.1} parent=63 // pred_fallthru
        _
      // Predicated region
      $region73: #{allseq_forward.1} parent=63 // pred_check
        %p506 = pneg %p95
      $region74: #{allseq_forward.1} parent=63 // pred_check_branch
        %508 = sbr.rel (%p506) target = $region76
      $region75: #{allseq_forward.1} parent=63 // pred_region
        %s509 = smul.u32 16, %s23
        %p510 = scmp.lt.s32.totalorder %s509, 31
        %s511 = scalar_select %p510, %s509, 31
        %s512 = smul.addr %s511, 6
        %s513 = smul.addr %s512, 8
        %s514 = scalar_lea.vmem %s2, %s513
        %s515 = smul.u32 16, %s23
      $region76: #{allseq_forward.1} parent=63 // pred_fallthru
        _
      // Predicated region
      $region77: #{allseq_forward.1} parent=63 // pred_check
        %p516 = pneg %p121
      $region78: #{allseq_forward.1} parent=63 // pred_check_branch
        %518 = sbr.rel (%p516) target = $region80
      $region79: #{allseq_forward.1} parent=63 // pred_region
        %s519 = smul.u32 16, %s23
        %p520 = scmp.lt.s32.totalorder %s519, 31
        %s521 = scalar_select %p520, %s519, 31
        %s522 = smul.addr %s521, 6
        %s523 = smul.addr %s522, 8
        %s524 = scalar_lea.vmem %s3, %s523
        %s525 = smul.u32 16, %s23
      $region80: #{allseq_forward.1} parent=63 // pred_fallthru
        _
      // Predicated region
      $region81: #{allseq_forward.1} parent=63 // pred_check
        %p526 = pneg %p147
      $region82: #{allseq_forward.1} parent=63 // pred_check_branch
        %528 = sbr.rel (%p526) target = $region84
      $region83: #{allseq_forward.1} parent=63 // pred_region
        %s529 = smul.u32 16, %s23
        %p530 = scmp.lt.s32.totalorder %s529, 31
        %s531 = scalar_select %p530, %s529, 31
        %s532 = smul.addr %s531, 6
        %s533 = smul.addr %s532, 8
        %s534 = scalar_lea.vmem %s4, %s533
        %s535 = smul.u32 16, %s23
      $region84: #{allseq_forward.1} parent=63 // pred_fallthru
        _
    $region64: #{allseq_forward.1} parent=5 // pred_fallthru
      _
    %p536 = scmp.le.s32.totalorder 1, %s23
    %p537 = scmp.lt.s32.totalorder %s23, 3
    %p538 = pnand %p536, %p537
    %p539 = pneg %p538
    // Predicated region
    $region85: #{allseq_forward.1} parent=5 // pred_check
      _
    $region86: #{allseq_forward.1} parent=5 // pred_check_branch
      %541 = sbr.rel (%p538) target = $region88
    $region87: #{allseq_forward.1} parent=5 // pred_region
      %s542 = ssub.s32 %s23, 1
      %s543 = smul.u32 16, %s28
      %p544 = scmp.lt.s32.totalorder %s543, 31
      %s545 = scalar_select %p544, %s543, 31
      %s546 = smul.addr %s545, 5
      %s547 = smul.addr %s546, 8
      %s548 = scalar_lea.vmem %s0, %s547
      %p549 = pneg %p49
      %p550 = pneg %p46
      %s551 = smul.u32 16, %s28
      %p552 = scmp.lt.s32.totalorder %s551, 31
      %s553 = scalar_select %p552, %s551, 31
      %s554 = smul.addr %s553, 6
      %s555 = smul.addr %s554, 8
      %s556 = scalar_lea.vmem %s1, %s555
      %p557 = pneg %p75
      %p558 = pneg %p72
      %s559 = smul.u32 16, %s28
      %p560 = scmp.lt.s32.totalorder %s559, 31
      %s561 = scalar_select %p560, %s559, 31
      %s562 = smul.addr %s561, 6
      %s563 = smul.addr %s562, 8
      %s564 = scalar_lea.vmem %s2, %s563
      %p565 = pneg %p101
      %p566 = pneg %p98
      %s567 = smul.u32 16, %s28
      %p568 = scmp.lt.s32.totalorder %s567, 31
      %s569 = scalar_select %p568, %s567, 31
      %s570 = smul.addr %s569, 6
      %s571 = smul.addr %s570, 8
      %s572 = scalar_lea.vmem %s3, %s571
      %p573 = pneg %p127
      %p574 = pneg %p124
      %s575 = smul.u32 16, %s28
      %p576 = scmp.lt.s32.totalorder %s575, 31
      %s577 = scalar_select %p576, %s575, 31
      %s578 = smul.addr %s577, 6
      %s579 = smul.addr %s578, 8
      %s580 = scalar_lea.vmem %s4, %s579
      %p581 = pneg %p153
      %p582 = pneg %p150
      %p583 = pneg %p174
      %p584 = pneg %p171
      %p585 = pneg %p195
      %p586 = pneg %p192
      %p587 = pneg %p216
      %p588 = pneg %p213
      %p589 = pneg %p237
      %p590 = pneg %p234
      %p591 = pneg %p258
      %p592 = pneg %p255
      %p593 = pneg %p279
      %p594 = pneg %p276
      %p595 = pneg %p300
      %p596 = pneg %p297
      %p597 = pneg %p321
      %p598 = pneg %p318
      %p599 = pneg %p342
      %p600 = pneg %p339
      %p601 = pneg %p363
      %p602 = pneg %p360
      %p603 = pneg %p384
      %p604 = pneg %p381
      %p605 = pneg %p405
      %p606 = pneg %p402
      %p607 = pneg %p431
      %p608 = pneg %p428
      %s609 = smul.u32 16, %s28
      %p610 = scmp.lt.s32.totalorder %s609, 31
      %s611 = scalar_select %p610, %s609, 31
      %s612 = smul.addr %s611, 8
      %s613 = scalar_lea.vmem %s17, %s612
      %s614 = smul.u32 16, %s28
      %p615 = scmp.lt.s32.totalorder %s614, 31
      %s616 = scalar_select %p615, %s614, 31
      %s617 = smul.addr %s616, 5
      %s618 = smul.addr %s617, 8
      %s619 = scalar_lea.vmem %s0, %s618
      %s620 = smul.u32 16, %s28
      %s621 = smul.u32 16, %s28
      %p622 = scmp.lt.s32.totalorder %s621, 31
      %s623 = scalar_select %p622, %s621, 31
      %s624 = smul.addr %s623, 6
      %s625 = smul.addr %s624, 8
      %s626 = scalar_lea.vmem %s1, %s625
      %s627 = smul.u32 16, %s28
      %s628 = smul.u32 16, %s28
      %p629 = scmp.lt.s32.totalorder %s628, 31
      %s630 = scalar_select %p629, %s628, 31
      %s631 = smul.addr %s630, 6
      %s632 = smul.addr %s631, 8
      %s633 = scalar_lea.vmem %s2, %s632
      %s634 = smul.u32 16, %s28
      %s635 = smul.u32 16, %s28
      %p636 = scmp.lt.s32.totalorder %s635, 31
      %s637 = scalar_select %p636, %s635, 31
      %s638 = smul.addr %s637, 6
      %s639 = smul.addr %s638, 8
      %s640 = scalar_lea.vmem %s3, %s639
      %s641 = smul.u32 16, %s28
      %s642 = smul.u32 16, %s28
      %p643 = scmp.lt.s32.totalorder %s642, 31
      %s644 = scalar_select %p643, %s642, 31
      %s645 = smul.addr %s644, 6
      %s646 = smul.addr %s645, 8
      %s647 = scalar_lea.vmem %s4, %s646
      %s648 = smul.u32 16, %s28
      %s649 = smul.u32 16, %s28
      %p650 = scmp.lt.s32.totalorder %s649, 31
      %s651 = scalar_select %p650, %s649, 31
      %s652 = smul.addr %s651, 8
      %s653 = scalar_lea.vmem %s17, %s652
      %s654 = smul.u32 16, %s28
      %v655 = vld [vmem:[%s626] sm:$0xff]
      %v656 = vld [vmem:[%s626 + $0x8] sm:$0xff]
      %v657 = vld [vmem:[%s626 + $0x10] sm:$0xff]
      %v658 = vld [vmem:[%s626 + $0x18] sm:$0xff]
      %v659 = vld [vmem:[%s626 + $0x20] sm:$0xff]
      %v660 = vld [vmem:[%s626 + $0x28] sm:$0xff]
      %v661 = vld [vmem:[%s626 + $0x30] sm:$0xff]
      %v662 = vld [vmem:[%s626 + $0x38] sm:$0xff]
      %v663 = vld [vmem:[%s626 + $0x40] sm:$0xff]
      %v664 = vld [vmem:[%s626 + $0x48] sm:$0xff]
      %v665 = vld [vmem:[%s626 + $0x50] sm:$0xff]
      %v666 = vld [vmem:[%s626 + $0x58] sm:$0xff]
      %v667 = vld [vmem:[%s626 + $0x60] sm:$0xff]
      %v668 = vld [vmem:[%s626 + $0x68] sm:$0xff]
      %v669 = vld [vmem:[%s626 + $0x70] sm:$0xff]
      %v670 = vld [vmem:[%s626 + $0x78] sm:$0xff]
      %v671 = vld [vmem:[%s626 + $0x80] sm:$0xff]
      %v672 = vld [vmem:[%s626 + $0x88] sm:$0xff]
      %v673 = vld [vmem:[%s626 + $0x90] sm:$0xff]
      %v674 = vld [vmem:[%s626 + $0x98] sm:$0xff]
      %v675 = vld [vmem:[%s626 + $0xa0] sm:$0xff]
      %v676 = vld [vmem:[%s626 + $0xa8] sm:$0xff]
      %v677 = vld [vmem:[%s626 + $0xb0] sm:$0xff]
      %v678 = vld [vmem:[%s626 + $0xb8] sm:$0xff]
      %v679 = vld [vmem:[%s626 + $0xc0] sm:$0xff]
      %v680 = vld [vmem:[%s626 + $0xc8] sm:$0xff]
      %v681 = vld [vmem:[%s626 + $0xd0] sm:$0xff]
      %v682 = vld [vmem:[%s626 + $0xd8] sm:$0xff]
      %v683 = vld [vmem:[%s626 + $0xe0] sm:$0xff]
      %v684 = vld [vmem:[%s626 + $0xe8] sm:$0xff]
      %v685 = vld [vmem:[%s626 + $0xf0] sm:$0xff]
      %v686 = vld [vmem:[%s626 + $0xf8] sm:$0xff]
      %v687 = vld [vmem:[%s626 + $0x100] sm:$0xff]
      %v688 = vld [vmem:[%s626 + $0x108] sm:$0xff]
      %v689 = vld [vmem:[%s626 + $0x110] sm:$0xff]
      %v690 = vld [vmem:[%s626 + $0x118] sm:$0xff]
      %v691 = vld [vmem:[%s626 + $0x120] sm:$0xff]
      %v692 = vld [vmem:[%s626 + $0x128] sm:$0xff]
      %v693 = vld [vmem:[%s626 + $0x130] sm:$0xff]
      %v694 = vld [vmem:[%s626 + $0x138] sm:$0xff]
      %v695 = vld [vmem:[%s626 + $0x140] sm:$0xff]
      %v696 = vld [vmem:[%s626 + $0x148] sm:$0xff]
      %v697 = vld [vmem:[%s626 + $0x150] sm:$0xff]
      %v698 = vld [vmem:[%s626 + $0x158] sm:$0xff]
      %v699 = vld [vmem:[%s626 + $0x160] sm:$0xff]
      %v700 = vld [vmem:[%s626 + $0x168] sm:$0xff]
      %v701 = vld [vmem:[%s626 + $0x170] sm:$0xff]
      %v702 = vld [vmem:[%s626 + $0x178] sm:$0xff]
      %v703 = vld [vmem:[%s626 + $0x180] sm:$0xff]
      %v704 = vld [vmem:[%s626 + $0x188] sm:$0xff]
      %v705 = vld [vmem:[%s626 + $0x190] sm:$0xff]
      %v706 = vld [vmem:[%s626 + $0x198] sm:$0xff]
      %v707 = vld [vmem:[%s626 + $0x1a0] sm:$0xff]
      %v708 = vld [vmem:[%s626 + $0x1a8] sm:$0xff]
      %v709 = vld [vmem:[%s626 + $0x1b0] sm:$0xff]
      %v710 = vld [vmem:[%s626 + $0x1b8] sm:$0xff]
      %v711 = vld [vmem:[%s626 + $0x1c0] sm:$0xff]
      %v712 = vld [vmem:[%s626 + $0x1c8] sm:$0xff]
      %v713 = vld [vmem:[%s626 + $0x1d0] sm:$0xff]
      %v714 = vld [vmem:[%s626 + $0x1d8] sm:$0xff]
      %v715 = vld [vmem:[%s626 + $0x1e0] sm:$0xff]
      %v716 = vld [vmem:[%s626 + $0x1e8] sm:$0xff]
      %v717 = vld [vmem:[%s626 + $0x1f0] sm:$0xff]
      %v718 = vld [vmem:[%s626 + $0x1f8] sm:$0xff]
      %v719 = vld [vmem:[%s626 + $0x200] sm:$0xff]
      %v720 = vld [vmem:[%s626 + $0x208] sm:$0xff]
      %v721 = vld [vmem:[%s626 + $0x210] sm:$0xff]
      %v722 = vld [vmem:[%s626 + $0x218] sm:$0xff]
      %v723 = vld [vmem:[%s626 + $0x220] sm:$0xff]
      %v724 = vld [vmem:[%s626 + $0x228] sm:$0xff]
      %v725 = vld [vmem:[%s626 + $0x230] sm:$0xff]
      %v726 = vld [vmem:[%s626 + $0x238] sm:$0xff]
      %v727 = vld [vmem:[%s626 + $0x240] sm:$0xff]
      %v728 = vld [vmem:[%s626 + $0x248] sm:$0xff]
      %v729 = vld [vmem:[%s626 + $0x250] sm:$0xff]
      %v730 = vld [vmem:[%s626 + $0x258] sm:$0xff]
      %v731 = vld [vmem:[%s626 + $0x260] sm:$0xff]
      %v732 = vld [vmem:[%s626 + $0x268] sm:$0xff]
      %v733 = vld [vmem:[%s626 + $0x270] sm:$0xff]
      %v734 = vld [vmem:[%s626 + $0x278] sm:$0xff]
      %v735 = vld [vmem:[%s626 + $0x280] sm:$0xff]
      %v736 = vld [vmem:[%s626 + $0x288] sm:$0xff]
      %v737 = vld [vmem:[%s626 + $0x290] sm:$0xff]
      %v738 = vld [vmem:[%s626 + $0x298] sm:$0xff]
      %v739 = vld [vmem:[%s626 + $0x2a0] sm:$0xff]
      %v740 = vld [vmem:[%s626 + $0x2a8] sm:$0xff]
      %v741 = vld [vmem:[%s626 + $0x2b0] sm:$0xff]
      %v742 = vld [vmem:[%s626 + $0x2b8] sm:$0xff]
      %v743 = vld [vmem:[%s626 + $0x2c0] sm:$0xff]
      %v744 = vld [vmem:[%s626 + $0x2c8] sm:$0xff]
      %v745 = vld [vmem:[%s626 + $0x2d0] sm:$0xff]
      %v746 = vld [vmem:[%s626 + $0x2d8] sm:$0xff]
      %v747 = vld [vmem:[%s626 + $0x2e0] sm:$0xff]
      %v748 = vld [vmem:[%s626 + $0x2e8] sm:$0xff]
      %v749 = vld [vmem:[%s626 + $0x2f0] sm:$0xff]
      %v750 = vld [vmem:[%s626 + $0x2f8] sm:$0xff]
      %v751 = vld [vmem:[%s6] sm:$0xff]
      %v752 = vld [vmem:[%s6 + $0x8] sm:$0xff]
      %v753 = vld [vmem:[%s6 + $0x10] sm:$0xff]
      %v754 = vld [vmem:[%s6 + $0x18] sm:$0xff]
      %v755 = vld [vmem:[%s6 + $0x20] sm:$0xff]
      %v756 = vld [vmem:[%s6 + $0x28] sm:$0xff]
      %v757 = vld [vmem:[%s6 + $0x30] sm:$0xff]
      %v758 = vld [vmem:[%s6 + $0x38] sm:$0xff]
      %v759 = vld [vmem:[%s6 + $0x40] sm:$0xff]
      %v760 = vld [vmem:[%s6 + $0x48] sm:$0xff]
      %v761 = vld [vmem:[%s6 + $0x50] sm:$0xff]
      %v762 = vld [vmem:[%s6 + $0x58] sm:$0xff]
      %v763 = vld [vmem:[%s6 + $0x60] sm:$0xff]
      %v764 = vld [vmem:[%s6 + $0x68] sm:$0xff]
      %v765 = vld [vmem:[%s6 + $0x70] sm:$0xff]
      %v766 = vld [vmem:[%s6 + $0x78] sm:$0xff]
      %v767 = vld [vmem:[%s6 + $0x80] sm:$0xff]
      %v768 = vld [vmem:[%s6 + $0x88] sm:$0xff]
      %v769 = vld [vmem:[%s6 + $0x90] sm:$0xff]
      %v770 = vld [vmem:[%s6 + $0x98] sm:$0xff]
      %v771 = vld [vmem:[%s6 + $0xa0] sm:$0xff]
      %v772 = vld [vmem:[%s6 + $0xa8] sm:$0xff]
      %v773 = vld [vmem:[%s6 + $0xb0] sm:$0xff]
      %v774 = vld [vmem:[%s6 + $0xb8] sm:$0xff]
      %v775 = vld [vmem:[%s6 + $0xc0] sm:$0xff]
      %v776 = vld [vmem:[%s6 + $0xc8] sm:$0xff]
      %v777 = vld [vmem:[%s6 + $0xd0] sm:$0xff]
      %v778 = vld [vmem:[%s6 + $0xd8] sm:$0xff]
      %v779 = vld [vmem:[%s6 + $0xe0] sm:$0xff]
      %v780 = vld [vmem:[%s6 + $0xe8] sm:$0xff]
      %v781 = vld [vmem:[%s6 + $0xf0] sm:$0xff]
      %v782 = vld [vmem:[%s6 + $0xf8] sm:$0xff]
      %v783 = vld [vmem:[%s6 + $0x100] sm:$0xff]
      %v784 = vld [vmem:[%s6 + $0x108] sm:$0xff]
      %v785 = vld [vmem:[%s6 + $0x110] sm:$0xff]
      %v786 = vld [vmem:[%s6 + $0x118] sm:$0xff]
      %v787 = vld [vmem:[%s6 + $0x120] sm:$0xff]
      %v788 = vld [vmem:[%s6 + $0x128] sm:$0xff]
      %v789 = vld [vmem:[%s6 + $0x130] sm:$0xff]
      %v790 = vld [vmem:[%s6 + $0x138] sm:$0xff]
      %v791 = vld [vmem:[%s6 + $0x140] sm:$0xff]
      %v792 = vld [vmem:[%s6 + $0x148] sm:$0xff]
      %v793 = vld [vmem:[%s6 + $0x150] sm:$0xff]
      %v794 = vld [vmem:[%s6 + $0x158] sm:$0xff]
      %v795 = vld [vmem:[%s6 + $0x160] sm:$0xff]
      %v796 = vld [vmem:[%s6 + $0x168] sm:$0xff]
      %v797 = vld [vmem:[%s6 + $0x170] sm:$0xff]
      %v798 = vld [vmem:[%s6 + $0x178] sm:$0xff]
      %v799 = vld [vmem:[%s6 + $0x180] sm:$0xff]
      %v800 = vld [vmem:[%s6 + $0x188] sm:$0xff]
      %v801 = vld [vmem:[%s6 + $0x190] sm:$0xff]
      %v802 = vld [vmem:[%s6 + $0x198] sm:$0xff]
      %v803 = vld [vmem:[%s6 + $0x1a0] sm:$0xff]
      %v804 = vld [vmem:[%s6 + $0x1a8] sm:$0xff]
      %v805 = vld [vmem:[%s6 + $0x1b0] sm:$0xff]
      %v806 = vld [vmem:[%s6 + $0x1b8] sm:$0xff]
      %v807 = vld [vmem:[%s6 + $0x1c0] sm:$0xff]
      %v808 = vld [vmem:[%s6 + $0x1c8] sm:$0xff]
      %v809 = vld [vmem:[%s6 + $0x1d0] sm:$0xff]
      %v810 = vld [vmem:[%s6 + $0x1d8] sm:$0xff]
      %v811 = vld [vmem:[%s6 + $0x1e0] sm:$0xff]
      %v812 = vld [vmem:[%s6 + $0x1e8] sm:$0xff]
      %v813 = vld [vmem:[%s6 + $0x1f0] sm:$0xff]
      %v814 = vld [vmem:[%s6 + $0x1f8] sm:$0xff]
      %v815 = vld [vmem:[%s6 + $0x200] sm:$0xff]
      %v816 = vld [vmem:[%s6 + $0x208] sm:$0xff]
      %v817 = vld [vmem:[%s6 + $0x210] sm:$0xff]
      %v818 = vld [vmem:[%s6 + $0x218] sm:$0xff]
      %v819 = vld [vmem:[%s6 + $0x220] sm:$0xff]
      %v820 = vld [vmem:[%s6 + $0x228] sm:$0xff]
      %v821 = vld [vmem:[%s6 + $0x230] sm:$0xff]
      %v822 = vld [vmem:[%s6 + $0x238] sm:$0xff]
      %v823 = vld [vmem:[%s6 + $0x240] sm:$0xff]
      %v824 = vld [vmem:[%s6 + $0x248] sm:$0xff]
      %v825 = vld [vmem:[%s6 + $0x250] sm:$0xff]
      %v826 = vld [vmem:[%s6 + $0x258] sm:$0xff]
      %v827 = vld [vmem:[%s6 + $0x260] sm:$0xff]
      %v828 = vld [vmem:[%s6 + $0x268] sm:$0xff]
      %v829 = vld [vmem:[%s6 + $0x270] sm:$0xff]
      %v830 = vld [vmem:[%s6 + $0x278] sm:$0xff]
      %v831 = vld [vmem:[%s6 + $0x280] sm:$0xff]
      %v832 = vld [vmem:[%s6 + $0x288] sm:$0xff]
      %v833 = vld [vmem:[%s6 + $0x290] sm:$0xff]
      %v834 = vld [vmem:[%s6 + $0x298] sm:$0xff]
      %v835 = vld [vmem:[%s6 + $0x2a0] sm:$0xff]
      %v836 = vld [vmem:[%s633] sm:$0xff]
      %v837 = vld [vmem:[%s633 + $0x8] sm:$0xff]
      %v838 = vld [vmem:[%s633 + $0x10] sm:$0xff]
      %v839 = vld [vmem:[%s633 + $0x18] sm:$0xff]
      %v840 = vld [vmem:[%s633 + $0x20] sm:$0xff]
      %v841 = vld [vmem:[%s633 + $0x28] sm:$0xff]
      %v842 = vld [vmem:[%s633 + $0x30] sm:$0xff]
      %v843 = vld [vmem:[%s633 + $0x38] sm:$0xff]
      %v844 = vld [vmem:[%s633 + $0x40] sm:$0xff]
      %v845 = vld [vmem:[%s633 + $0x48] sm:$0xff]
      %v846 = vld [vmem:[%s633 + $0x50] sm:$0xff]
      %v847 = vld [vmem:[%s633 + $0x58] sm:$0xff]
      %v848 = vld [vmem:[%s633 + $0x60] sm:$0xff]
      %v849 = vld [vmem:[%s633 + $0x68] sm:$0xff]
      %v850 = vld [vmem:[%s633 + $0x70] sm:$0xff]
      %v851 = vld [vmem:[%s633 + $0x78] sm:$0xff]
      %v852 = vld [vmem:[%s633 + $0x80] sm:$0xff]
      %v853 = vld [vmem:[%s633 + $0x88] sm:$0xff]
      %v854 = vld [vmem:[%s633 + $0x90] sm:$0xff]
      %v855 = vld [vmem:[%s633 + $0x98] sm:$0xff]
      %v856 = vld [vmem:[%s633 + $0xa0] sm:$0xff]
      %v857 = vld [vmem:[%s633 + $0xa8] sm:$0xff]
      %v858 = vld [vmem:[%s633 + $0xb0] sm:$0xff]
      %v859 = vld [vmem:[%s633 + $0xb8] sm:$0xff]
      %v860 = vld [vmem:[%s633 + $0xc0] sm:$0xff]
      %v861 = vld [vmem:[%s633 + $0xc8] sm:$0xff]
      %v862 = vld [vmem:[%s633 + $0xd0] sm:$0xff]
      %v863 = vld [vmem:[%s633 + $0xd8] sm:$0xff]
      %v864 = vld [vmem:[%s633 + $0xe0] sm:$0xff]
      %v865 = vld [vmem:[%s633 + $0xe8] sm:$0xff]
      %v866 = vld [vmem:[%s633 + $0xf0] sm:$0xff]
      %v867 = vld [vmem:[%s633 + $0xf8] sm:$0xff]
      %v868 = vld [vmem:[%s633 + $0x100] sm:$0xff]
      %v869 = vld [vmem:[%s633 + $0x108] sm:$0xff]
      %v870 = vld [vmem:[%s633 + $0x110] sm:$0xff]
      %v871 = vld [vmem:[%s633 + $0x118] sm:$0xff]
      %v872 = vld [vmem:[%s633 + $0x120] sm:$0xff]
      %v873 = vld [vmem:[%s633 + $0x128] sm:$0xff]
      %v874 = vld [vmem:[%s633 + $0x130] sm:$0xff]
      %v875 = vld [vmem:[%s633 + $0x138] sm:$0xff]
      %v876 = vld [vmem:[%s633 + $0x140] sm:$0xff]
      %v877 = vld [vmem:[%s633 + $0x148] sm:$0xff]
      %v878 = vld [vmem:[%s633 + $0x150] sm:$0xff]
      %v879 = vld [vmem:[%s633 + $0x158] sm:$0xff]
      %v880 = vld [vmem:[%s633 + $0x160] sm:$0xff]
      %v881 = vld [vmem:[%s633 + $0x168] sm:$0xff]
      %v882 = vld [vmem:[%s633 + $0x170] sm:$0xff]
      %v883 = vld [vmem:[%s633 + $0x178] sm:$0xff]
      %v884 = vld [vmem:[%s633 + $0x180] sm:$0xff]
      %v885 = vld [vmem:[%s633 + $0x188] sm:$0xff]
      %v886 = vld [vmem:[%s633 + $0x190] sm:$0xff]
      %v887 = vld [vmem:[%s633 + $0x198] sm:$0xff]
      %v888 = vld [vmem:[%s633 + $0x1a0] sm:$0xff]
      %v889 = vld [vmem:[%s633 + $0x1a8] sm:$0xff]
      %v890 = vld [vmem:[%s633 + $0x1b0] sm:$0xff]
      %v891 = vld [vmem:[%s633 + $0x1b8] sm:$0xff]
      %v892 = vld [vmem:[%s633 + $0x1c0] sm:$0xff]
      %v893 = vld [vmem:[%s633 + $0x1c8] sm:$0xff]
      %v894 = vld [vmem:[%s633 + $0x1d0] sm:$0xff]
      %v895 = vld [vmem:[%s633 + $0x1d8] sm:$0xff]
      %v896 = vld [vmem:[%s633 + $0x1e0] sm:$0xff]
      %v897 = vld [vmem:[%s633 + $0x1e8] sm:$0xff]
      %v898 = vld [vmem:[%s633 + $0x1f0] sm:$0xff]
      %v899 = vld [vmem:[%s633 + $0x1f8] sm:$0xff]
      %v900 = vld [vmem:[%s633 + $0x200] sm:$0xff]
      %v901 = vld [vmem:[%s633 + $0x208] sm:$0xff]
      %v902 = vld [vmem:[%s633 + $0x210] sm:$0xff]
      %v903 = vld [vmem:[%s633 + $0x218] sm:$0xff]
      %v904 = vld [vmem:[%s633 + $0x220] sm:$0xff]
      %v905 = vld [vmem:[%s633 + $0x228] sm:$0xff]
      %v906 = vld [vmem:[%s633 + $0x230] sm:$0xff]
      %v907 = vld [vmem:[%s633 + $0x238] sm:$0xff]
      %v908 = vld [vmem:[%s633 + $0x240] sm:$0xff]
      %v909 = vld [vmem:[%s633 + $0x248] sm:$0xff]
      %v910 = vld [vmem:[%s633 + $0x250] sm:$0xff]
      %v911 = vld [vmem:[%s633 + $0x258] sm:$0xff]
      %v912 = vld [vmem:[%s633 + $0x260] sm:$0xff]
      %v913 = vld [vmem:[%s633 + $0x268] sm:$0xff]
      %v914 = vld [vmem:[%s633 + $0x270] sm:$0xff]
      %v915 = vld [vmem:[%s633 + $0x278] sm:$0xff]
      %v916 = vld [vmem:[%s633 + $0x280] sm:$0xff]
      %v917 = vld [vmem:[%s633 + $0x288] sm:$0xff]
      %v918 = vld [vmem:[%s633 + $0x290] sm:$0xff]
      %v919 = vld [vmem:[%s633 + $0x298] sm:$0xff]
      %v920 = vld [vmem:[%s633 + $0x2a0] sm:$0xff]
      %v921 = vld [vmem:[%s633 + $0x2a8] sm:$0xff]
      %v922 = vld [vmem:[%s633 + $0x2b0] sm:$0xff]
      %v923 = vld [vmem:[%s633 + $0x2b8] sm:$0xff]
      %v924 = vld [vmem:[%s633 + $0x2c0] sm:$0xff]
      %v925 = vld [vmem:[%s633 + $0x2c8] sm:$0xff]
      %v926 = vld [vmem:[%s633 + $0x2d0] sm:$0xff]
      %v927 = vld [vmem:[%s633 + $0x2d8] sm:$0xff]
      %v928 = vld [vmem:[%s633 + $0x2e0] sm:$0xff]
      %v929 = vld [vmem:[%s633 + $0x2e8] sm:$0xff]
      %v930 = vld [vmem:[%s633 + $0x2f0] sm:$0xff]
      %v931 = vld [vmem:[%s633 + $0x2f8] sm:$0xff]
      %v932 = vld [vmem:[%s7] sm:$0xff]
      %v933 = vld [vmem:[%s7 + $0x8] sm:$0xff]
      %v934 = vld [vmem:[%s7 + $0x10] sm:$0xff]
      %v935 = vld [vmem:[%s7 + $0x18] sm:$0xff]
      %v936 = vld [vmem:[%s7 + $0x20] sm:$0xff]
      %v937 = vld [vmem:[%s7 + $0x28] sm:$0xff]
      %v938 = vld [vmem:[%s7 + $0x30] sm:$0xff]
      %v939 = vld [vmem:[%s7 + $0x38] sm:$0xff]
      %v940 = vld [vmem:[%s7 + $0x40] sm:$0xff]
      %v941 = vld [vmem:[%s7 + $0x48] sm:$0xff]
      %v942 = vld [vmem:[%s7 + $0x50] sm:$0xff]
      %v943 = vld [vmem:[%s7 + $0x58] sm:$0xff]
      %v944 = vld [vmem:[%s7 + $0x60] sm:$0xff]
      %v945 = vld [vmem:[%s7 + $0x68] sm:$0xff]
      %v946 = vld [vmem:[%s7 + $0x70] sm:$0xff]
      %v947 = vld [vmem:[%s7 + $0x78] sm:$0xff]
      %v948 = vld [vmem:[%s7 + $0x80] sm:$0xff]
      %v949 = vld [vmem:[%s7 + $0x88] sm:$0xff]
      %v950 = vld [vmem:[%s7 + $0x90] sm:$0xff]
      %v951 = vld [vmem:[%s7 + $0x98] sm:$0xff]
      %v952 = vld [vmem:[%s7 + $0xa0] sm:$0xff]
      %v953 = vld [vmem:[%s7 + $0xa8] sm:$0xff]
      %v954 = vld [vmem:[%s7 + $0xb0] sm:$0xff]
      %v955 = vld [vmem:[%s7 + $0xb8] sm:$0xff]
      %v956 = vld [vmem:[%s7 + $0xc0] sm:$0xff]
      %v957 = vld [vmem:[%s7 + $0xc8] sm:$0xff]
      %v958 = vld [vmem:[%s7 + $0xd0] sm:$0xff]
      %v959 = vld [vmem:[%s7 + $0xd8] sm:$0xff]
      %v960 = vld [vmem:[%s7 + $0xe0] sm:$0xff]
      %v961 = vld [vmem:[%s7 + $0xe8] sm:$0xff]
      %v962 = vld [vmem:[%s7 + $0xf0] sm:$0xff]
      %v963 = vld [vmem:[%s7 + $0xf8] sm:$0xff]
      %v964 = vld [vmem:[%s7 + $0x100] sm:$0xff]
      %v965 = vld [vmem:[%s7 + $0x108] sm:$0xff]
      %v966 = vld [vmem:[%s7 + $0x110] sm:$0xff]
      %v967 = vld [vmem:[%s7 + $0x118] sm:$0xff]
      %v968 = vld [vmem:[%s7 + $0x120] sm:$0xff]
      %v969 = vld [vmem:[%s7 + $0x128] sm:$0xff]
      %v970 = vld [vmem:[%s7 + $0x130] sm:$0xff]
      %v971 = vld [vmem:[%s7 + $0x138] sm:$0xff]
      %v972 = vld [vmem:[%s7 + $0x140] sm:$0xff]
      %v973 = vld [vmem:[%s7 + $0x148] sm:$0xff]
      %v974 = vld [vmem:[%s7 + $0x150] sm:$0xff]
      %v975 = vld [vmem:[%s7 + $0x158] sm:$0xff]
      %v976 = vld [vmem:[%s7 + $0x160] sm:$0xff]
      %v977 = vld [vmem:[%s7 + $0x168] sm:$0xff]
      %v978 = vld [vmem:[%s7 + $0x170] sm:$0xff]
      %v979 = vld [vmem:[%s7 + $0x178] sm:$0xff]
      %v980 = vld [vmem:[%s7 + $0x180] sm:$0xff]
      %v981 = vld [vmem:[%s7 + $0x188] sm:$0xff]
      %v982 = vld [vmem:[%s7 + $0x190] sm:$0xff]
      %v983 = vld [vmem:[%s7 + $0x198] sm:$0xff]
      %v984 = vld [vmem:[%s7 + $0x1a0] sm:$0xff]
      %v985 = vld [vmem:[%s7 + $0x1a8] sm:$0xff]
      %v986 = vld [vmem:[%s7 + $0x1b0] sm:$0xff]
      %v987 = vld [vmem:[%s7 + $0x1b8] sm:$0xff]
      %v988 = vld [vmem:[%s7 + $0x1c0] sm:$0xff]
      %v989 = vld [vmem:[%s7 + $0x1c8] sm:$0xff]
      %v990 = vld [vmem:[%s7 + $0x1d0] sm:$0xff]
      %v991 = vld [vmem:[%s7 + $0x1d8] sm:$0xff]
      %v992 = vld [vmem:[%s7 + $0x1e0] sm:$0xff]
      %v993 = vld [vmem:[%s7 + $0x1e8] sm:$0xff]
      %v994 = vld [vmem:[%s7 + $0x1f0] sm:$0xff]
      %v995 = vld [vmem:[%s7 + $0x1f8] sm:$0xff]
      %v996 = vld [vmem:[%s7 + $0x200] sm:$0xff]
      %v997 = vld [vmem:[%s7 + $0x208] sm:$0xff]
      %v998 = vld [vmem:[%s7 + $0x210] sm:$0xff]
      %v999 = vld [vmem:[%s7 + $0x218] sm:$0xff]
      %v1000 = vld [vmem:[%s7 + $0x220] sm:$0xff]
      %v1001 = vld [vmem:[%s7 + $0x228] sm:$0xff]
      %v1002 = vld [vmem:[%s7 + $0x230] sm:$0xff]
      %v1003 = vld [vmem:[%s7 + $0x238] sm:$0xff]
      %v1004 = vld [vmem:[%s7 + $0x240] sm:$0xff]
      %v1005 = vld [vmem:[%s7 + $0x248] sm:$0xff]
      %v1006 = vld [vmem:[%s7 + $0x250] sm:$0xff]
      %v1007 = vld [vmem:[%s7 + $0x258] sm:$0xff]
      %v1008 = vld [vmem:[%s7 + $0x260] sm:$0xff]
      %v1009 = vld [vmem:[%s7 + $0x268] sm:$0xff]
      %v1010 = vld [vmem:[%s7 + $0x270] sm:$0xff]
      %v1011 = vld [vmem:[%s7 + $0x278] sm:$0xff]
      %v1012 = vld [vmem:[%s7 + $0x280] sm:$0xff]
      %v1013 = vld [vmem:[%s7 + $0x288] sm:$0xff]
      %v1014 = vld [vmem:[%s7 + $0x290] sm:$0xff]
      %v1015 = vld [vmem:[%s7 + $0x298] sm:$0xff]
      %v1016 = vld [vmem:[%s7 + $0x2a0] sm:$0xff]
      %vm1017 = vcmask 326656
      %v1019 = vsel %vm1017, %v841, 0
      %v1022 = vsel %vm1017, %v847, 0
      %v1025 = vsel %vm1017, %v853, 0
      %v1028 = vsel %vm1017, %v859, 0
      %v1031 = vsel %vm1017, %v865, 0
      %v1034 = vsel %vm1017, %v871, 0
      %v1037 = vsel %vm1017, %v877, 0
      %v1040 = vsel %vm1017, %v883, 0
      %v1043 = vsel %vm1017, %v889, 0
      %v1046 = vsel %vm1017, %v895, 0
      %v1049 = vsel %vm1017, %v901, 0
      %v1052 = vsel %vm1017, %v907, 0
      %v1055 = vsel %vm1017, %v913, 0
      %v1058 = vsel %vm1017, %v919, 0
      %v1061 = vsel %vm1017, %v925, 0
      %v1064 = vsel %vm1017, %v931, 0
      %1066 = vmatpush.msra.mxu0 %v947
      %1067 = vmatpush.msra.mxu0 %v946
      %1068 = vmatpush.msra.mxu0 %v945
      %1069 = vmatpush.msra.mxu0 %v944
      %1070 = vmatpush.msra.mxu0 %v943
      %1071 = vmatpush.msra.mxu0 %v942
      %1072 = vmatpush.msra.mxu0 %v941
      %1073 = vmatpush.msra.mxu0 %v940
      %1074 = vmatpush.msra.mxu0 %v939
      %1075 = vmatpush.msra.mxu0 %v938
      %1076 = vmatpush.msra.mxu0 %v937
      %1077 = vmatpush.msra.mxu0 %v936
      %1078 = vmatpush.msra.mxu0 %v935
      %1079 = vmatpush.msra.mxu0 %v934
      %1080 = vmatpush.msra.mxu0 %v933
      %1081 = vmatpush.msra.mxu0 %v932
      %1082 = vmatmul.f32.gmra.mxu0 %v836
      %v1083 = vpop.f32.mrf.mxu0
      %v1084 = vadd.f32 0.0, %v1083
      %1085 = vmatmul.f32.gmra.mxu0 %v842
      %v1086 = vpop.f32.mrf.mxu0
      %v1087 = vadd.f32 0.0, %v1086
      %1088 = vmatmul.f32.gmra.mxu0 %v848
      %v1089 = vpop.f32.mrf.mxu0
      %v1090 = vadd.f32 0.0, %v1089
      %1091 = vmatmul.f32.gmra.mxu0 %v854
      %v1092 = vpop.f32.mrf.mxu0
      %v1093 = vadd.f32 0.0, %v1092
      %1094 = vmatmul.f32.gmra.mxu0 %v860
      %v1095 = vpop.f32.mrf.mxu0
      %v1096 = vadd.f32 0.0, %v1095
      %1097 = vmatmul.f32.gmra.mxu0 %v866
      %v1098 = vpop.f32.mrf.mxu0
      %v1099 = vadd.f32 0.0, %v1098
      %1100 = vmatmul.f32.gmra.mxu0 %v872
      %v1101 = vpop.f32.mrf.mxu0
      %v1102 = vadd.f32 0.0, %v1101
      %1103 = vmatmul.f32.gmra.mxu0 %v878
      %v1104 = vpop.f32.mrf.mxu0
      %v1105 = vadd.f32 0.0, %v1104
      %1106 = vmatmul.f32.gmra.mxu0 %v884
      %v1107 = vpop.f32.mrf.mxu0
      %v1108 = vadd.f32 0.0, %v1107
      %1109 = vmatmul.f32.gmra.mxu0 %v890
      %v1110 = vpop.f32.mrf.mxu0
      %v1111 = vadd.f32 0.0, %v1110
      %1112 = vmatmul.f32.gmra.mxu0 %v896
      %v1113 = vpop.f32.mrf.mxu0
      %v1114 = vadd.f32 0.0, %v1113
      %1115 = vmatmul.f32.gmra.mxu0 %v902
      %v1116 = vpop.f32.mrf.mxu0
      %v1117 = vadd.f32 0.0, %v1116
      %1118 = vmatmul.f32.gmra.mxu0 %v908
      %v1119 = vpop.f32.mrf.mxu0
      %v1120 = vadd.f32 0.0, %v1119
      %1121 = vmatmul.f32.gmra.mxu0 %v914
      %v1122 = vpop.f32.mrf.mxu0
      %v1123 = vadd.f32 0.0, %v1122
      %1124 = vmatmul.f32.gmra.mxu0 %v920
      %v1125 = vpop.f32.mrf.mxu0
      %v1126 = vadd.f32 0.0, %v1125
      %1127 = vmatmul.f32.gmra.mxu0 %v926
      %v1128 = vpop.f32.mrf.mxu0
      %v1129 = vadd.f32 0.0, %v1128
      %1130 = vdwg.mxu0
      %1131 = vmatpush.msra.mxu0 %v963
      %1132 = vmatpush.msra.mxu0 %v962
      %1133 = vmatpush.msra.mxu0 %v961
      %1134 = vmatpush.msra.mxu0 %v960
      %1135 = vmatpush.msra.mxu0 %v959
      %1136 = vmatpush.msra.mxu0 %v958
      %1137 = vmatpush.msra.mxu0 %v957
      %1138 = vmatpush.msra.mxu0 %v956
      %1139 = vmatpush.msra.mxu0 %v955
      %1140 = vmatpush.msra.mxu0 %v954
      %1141 = vmatpush.msra.mxu0 %v953
      %1142 = vmatpush.msra.mxu0 %v952
      %1143 = vmatpush.msra.mxu0 %v951
      %1144 = vmatpush.msra.mxu0 %v950
      %1145 = vmatpush.msra.mxu0 %v949
      %1146 = vmatpush.msra.mxu0 %v948
      %1147 = vmatmul.f32.gmra.mxu0 %v837
      %v1148 = vpop.f32.mrf.mxu0
      %v1149 = vadd.f32 %v1084, %v1148
      %1150 = vmatmul.f32.gmra.mxu0 %v843
      %v1151 = vpop.f32.mrf.mxu0
      %v1152 = vadd.f32 %v1087, %v1151
      %1153 = vmatmul.f32.gmra.mxu0 %v849
      %v1154 = vpop.f32.mrf.mxu0
      %v1155 = vadd.f32 %v1090, %v1154
      %1156 = vmatmul.f32.gmra.mxu0 %v855
      %v1157 = vpop.f32.mrf.mxu0
      %v1158 = vadd.f32 %v1093, %v1157
      %1159 = vmatmul.f32.gmra.mxu0 %v861
      %v1160 = vpop.f32.mrf.mxu0
      %v1161 = vadd.f32 %v1096, %v1160
      %1162 = vmatmul.f32.gmra.mxu0 %v867
      %v1163 = vpop.f32.mrf.mxu0
      %v1164 = vadd.f32 %v1099, %v1163
      %1165 = vmatmul.f32.gmra.mxu0 %v873
      %v1166 = vpop.f32.mrf.mxu0
      %v1167 = vadd.f32 %v1102, %v1166
      %1168 = vmatmul.f32.gmra.mxu0 %v879
      %v1169 = vpop.f32.mrf.mxu0
      %v1170 = vadd.f32 %v1105, %v1169
      %1171 = vmatmul.f32.gmra.mxu0 %v885
      %v1172 = vpop.f32.mrf.mxu0
      %v1173 = vadd.f32 %v1108, %v1172
      %1174 = vmatmul.f32.gmra.mxu0 %v891
      %v1175 = vpop.f32.mrf.mxu0
      %v1176 = vadd.f32 %v1111, %v1175
      %1177 = vmatmul.f32.gmra.mxu0 %v897
      %v1178 = vpop.f32.mrf.mxu0
      %v1179 = vadd.f32 %v1114, %v1178
      %1180 = vmatmul.f32.gmra.mxu0 %v903
      %v1181 = vpop.f32.mrf.mxu0
      %v1182 = vadd.f32 %v1117, %v1181
      %1183 = vmatmul.f32.gmra.mxu0 %v909
      %v1184 = vpop.f32.mrf.mxu0
      %v1185 = vadd.f32 %v1120, %v1184
      %1186 = vmatmul.f32.gmra.mxu0 %v915
      %v1187 = vpop.f32.mrf.mxu0
      %v1188 = vadd.f32 %v1123, %v1187
      %1189 = vmatmul.f32.gmra.mxu0 %v921
      %v1190 = vpop.f32.mrf.mxu0
      %v1191 = vadd.f32 %v1126, %v1190
      %1192 = vmatmul.f32.gmra.mxu0 %v927
      %v1193 = vpop.f32.mrf.mxu0
      %v1194 = vadd.f32 %v1129, %v1193
      %1195 = vdwg.mxu0
      %1196 = vmatpush.msra.mxu0 %v979
      %1197 = vmatpush.msra.mxu0 %v978
      %1198 = vmatpush.msra.mxu0 %v977
      %1199 = vmatpush.msra.mxu0 %v976
      %1200 = vmatpush.msra.mxu0 %v975
      %1201 = vmatpush.msra.mxu0 %v974
      %1202 = vmatpush.msra.mxu0 %v973
      %1203 = vmatpush.msra.mxu0 %v972
      %1204 = vmatpush.msra.mxu0 %v971
      %1205 = vmatpush.msra.mxu0 %v970
      %1206 = vmatpush.msra.mxu0 %v969
      %1207 = vmatpush.msra.mxu0 %v968
      %1208 = vmatpush.msra.mxu0 %v967
      %1209 = vmatpush.msra.mxu0 %v966
      %1210 = vmatpush.msra.mxu0 %v965
      %1211 = vmatpush.msra.mxu0 %v964
      %1212 = vmatmul.f32.gmra.mxu0 %v838
      %v1213 = vpop.f32.mrf.mxu0
      %v1214 = vadd.f32 %v1149, %v1213
      %1215 = vmatmul.f32.gmra.mxu0 %v844
      %v1216 = vpop.f32.mrf.mxu0
      %v1217 = vadd.f32 %v1152, %v1216
      %1218 = vmatmul.f32.gmra.mxu0 %v850
      %v1219 = vpop.f32.mrf.mxu0
      %v1220 = vadd.f32 %v1155, %v1219
      %1221 = vmatmul.f32.gmra.mxu0 %v856
      %v1222 = vpop.f32.mrf.mxu0
      %v1223 = vadd.f32 %v1158, %v1222
      %1224 = vmatmul.f32.gmra.mxu0 %v862
      %v1225 = vpop.f32.mrf.mxu0
      %v1226 = vadd.f32 %v1161, %v1225
      %1227 = vmatmul.f32.gmra.mxu0 %v868
      %v1228 = vpop.f32.mrf.mxu0
      %v1229 = vadd.f32 %v1164, %v1228
      %1230 = vmatmul.f32.gmra.mxu0 %v874
      %v1231 = vpop.f32.mrf.mxu0
      %v1232 = vadd.f32 %v1167, %v1231
      %1233 = vmatmul.f32.gmra.mxu0 %v880
      %v1234 = vpop.f32.mrf.mxu0
      %v1235 = vadd.f32 %v1170, %v1234
      %1236 = vmatmul.f32.gmra.mxu0 %v886
      %v1237 = vpop.f32.mrf.mxu0
      %v1238 = vadd.f32 %v1173, %v1237
      %1239 = vmatmul.f32.gmra.mxu0 %v892
      %v1240 = vpop.f32.mrf.mxu0
      %v1241 = vadd.f32 %v1176, %v1240
      %1242 = vmatmul.f32.gmra.mxu0 %v898
      %v1243 = vpop.f32.mrf.mxu0
      %v1244 = vadd.f32 %v1179, %v1243
      %1245 = vmatmul.f32.gmra.mxu0 %v904
      %v1246 = vpop.f32.mrf.mxu0
      %v1247 = vadd.f32 %v1182, %v1246
      %1248 = vmatmul.f32.gmra.mxu0 %v910
      %v1249 = vpop.f32.mrf.mxu0
      %v1250 = vadd.f32 %v1185, %v1249
      %1251 = vmatmul.f32.gmra.mxu0 %v916
      %v1252 = vpop.f32.mrf.mxu0
      %v1253 = vadd.f32 %v1188, %v1252
      %1254 = vmatmul.f32.gmra.mxu0 %v922
      %v1255 = vpop.f32.mrf.mxu0
      %v1256 = vadd.f32 %v1191, %v1255
      %1257 = vmatmul.f32.gmra.mxu0 %v928
      %v1258 = vpop.f32.mrf.mxu0
      %v1259 = vadd.f32 %v1194, %v1258
      %1260 = vdwg.mxu0
      %1261 = vmatpush.msra.mxu0 %v995
      %1262 = vmatpush.msra.mxu0 %v994
      %1263 = vmatpush.msra.mxu0 %v993
      %1264 = vmatpush.msra.mxu0 %v992
      %1265 = vmatpush.msra.mxu0 %v991
      %1266 = vmatpush.msra.mxu0 %v990
      %1267 = vmatpush.msra.mxu0 %v989
      %1268 = vmatpush.msra.mxu0 %v988
      %1269 = vmatpush.msra.mxu0 %v987
      %1270 = vmatpush.msra.mxu0 %v986
      %1271 = vmatpush.msra.mxu0 %v985
      %1272 = vmatpush.msra.mxu0 %v984
      %1273 = vmatpush.msra.mxu0 %v983
      %1274 = vmatpush.msra.mxu0 %v982
      %1275 = vmatpush.msra.mxu0 %v981
      %1276 = vmatpush.msra.mxu0 %v980
      %1277 = vmatmul.f32.gmra.mxu0 %v839
      %v1278 = vpop.f32.mrf.mxu0
      %v1279 = vadd.f32 %v1214, %v1278
      %1280 = vmatmul.f32.gmra.mxu0 %v845
      %v1281 = vpop.f32.mrf.mxu0
      %v1282 = vadd.f32 %v1217, %v1281
      %1283 = vmatmul.f32.gmra.mxu0 %v851
      %v1284 = vpop.f32.mrf.mxu0
      %v1285 = vadd.f32 %v1220, %v1284
      %1286 = vmatmul.f32.gmra.mxu0 %v857
      %v1287 = vpop.f32.mrf.mxu0
      %v1288 = vadd.f32 %v1223, %v1287
      %1289 = vmatmul.f32.gmra.mxu0 %v863
      %v1290 = vpop.f32.mrf.mxu0
      %v1291 = vadd.f32 %v1226, %v1290
      %1292 = vmatmul.f32.gmra.mxu0 %v869
      %v1293 = vpop.f32.mrf.mxu0
      %v1294 = vadd.f32 %v1229, %v1293
      %1295 = vmatmul.f32.gmra.mxu0 %v875
      %v1296 = vpop.f32.mrf.mxu0
      %v1297 = vadd.f32 %v1232, %v1296
      %1298 = vmatmul.f32.gmra.mxu0 %v881
      %v1299 = vpop.f32.mrf.mxu0
      %v1300 = vadd.f32 %v1235, %v1299
      %1301 = vmatmul.f32.gmra.mxu0 %v887
      %v1302 = vpop.f32.mrf.mxu0
      %v1303 = vadd.f32 %v1238, %v1302
      %1304 = vmatmul.f32.gmra.mxu0 %v893
      %v1305 = vpop.f32.mrf.mxu0
      %v1306 = vadd.f32 %v1241, %v1305
      %1307 = vmatmul.f32.gmra.mxu0 %v899
      %v1308 = vpop.f32.mrf.mxu0
      %v1309 = vadd.f32 %v1244, %v1308
      %1310 = vmatmul.f32.gmra.mxu0 %v905
      %v1311 = vpop.f32.mrf.mxu0
      %v1312 = vadd.f32 %v1247, %v1311
      %1313 = vmatmul.f32.gmra.mxu0 %v911
      %v1314 = vpop.f32.mrf.mxu0
      %v1315 = vadd.f32 %v1250, %v1314
      %1316 = vmatmul.f32.gmra.mxu0 %v917
      %v1317 = vpop.f32.mrf.mxu0
      %v1318 = vadd.f32 %v1253, %v1317
      %1319 = vmatmul.f32.gmra.mxu0 %v923
      %v1320 = vpop.f32.mrf.mxu0
      %v1321 = vadd.f32 %v1256, %v1320
      %1322 = vmatmul.f32.gmra.mxu0 %v929
      %v1323 = vpop.f32.mrf.mxu0
      %v1324 = vadd.f32 %v1259, %v1323
      %1325 = vdwg.mxu0
      %1326 = vmatpush.msra.mxu0 %v1011
      %1327 = vmatpush.msra.mxu0 %v1010
      %1328 = vmatpush.msra.mxu0 %v1009
      %1329 = vmatpush.msra.mxu0 %v1008
      %1330 = vmatpush.msra.mxu0 %v1007
      %1331 = vmatpush.msra.mxu0 %v1006
      %1332 = vmatpush.msra.mxu0 %v1005
      %1333 = vmatpush.msra.mxu0 %v1004
      %1334 = vmatpush.msra.mxu0 %v1003
      %1335 = vmatpush.msra.mxu0 %v1002
      %1336 = vmatpush.msra.mxu0 %v1001
      %1337 = vmatpush.msra.mxu0 %v1000
      %1338 = vmatpush.msra.mxu0 %v999
      %1339 = vmatpush.msra.mxu0 %v998
      %1340 = vmatpush.msra.mxu0 %v997
      %1341 = vmatpush.msra.mxu0 %v996
      %1342 = vmatmul.f32.gmra.mxu0 %v840
      %v1343 = vpop.f32.mrf.mxu0
      %v1344 = vadd.f32 %v1279, %v1343
      %1345 = vmatmul.f32.gmra.mxu0 %v846
      %v1346 = vpop.f32.mrf.mxu0
      %v1347 = vadd.f32 %v1282, %v1346
      %1348 = vmatmul.f32.gmra.mxu0 %v852
      %v1349 = vpop.f32.mrf.mxu0
      %v1350 = vadd.f32 %v1285, %v1349
      %1351 = vmatmul.f32.gmra.mxu0 %v858
      %v1352 = vpop.f32.mrf.mxu0
      %v1353 = vadd.f32 %v1288, %v1352
      %1354 = vmatmul.f32.gmra.mxu0 %v864
      %v1355 = vpop.f32.mrf.mxu0
      %v1356 = vadd.f32 %v1291, %v1355
      %1357 = vmatmul.f32.gmra.mxu0 %v870
      %v1358 = vpop.f32.mrf.mxu0
      %v1359 = vadd.f32 %v1294, %v1358
      %1360 = vmatmul.f32.gmra.mxu0 %v876
      %v1361 = vpop.f32.mrf.mxu0
      %v1362 = vadd.f32 %v1297, %v1361
      %1363 = vmatmul.f32.gmra.mxu0 %v882
      %v1364 = vpop.f32.mrf.mxu0
      %v1365 = vadd.f32 %v1300, %v1364
      %1366 = vmatmul.f32.gmra.mxu0 %v888
      %v1367 = vpop.f32.mrf.mxu0
      %v1368 = vadd.f32 %v1303, %v1367
      %1369 = vmatmul.f32.gmra.mxu0 %v894
      %v1370 = vpop.f32.mrf.mxu0
      %v1371 = vadd.f32 %v1306, %v1370
      %1372 = vmatmul.f32.gmra.mxu0 %v900
      %v1373 = vpop.f32.mrf.mxu0
      %v1374 = vadd.f32 %v1309, %v1373
      %1375 = vmatmul.f32.gmra.mxu0 %v906
      %v1376 = vpop.f32.mrf.mxu0
      %v1377 = vadd.f32 %v1312, %v1376
      %1378 = vmatmul.f32.gmra.mxu0 %v912
      %v1379 = vpop.f32.mrf.mxu0
      %v1380 = vadd.f32 %v1315, %v1379
      %1381 = vmatmul.f32.gmra.mxu0 %v918
      %v1382 = vpop.f32.mrf.mxu0
      %v1383 = vadd.f32 %v1318, %v1382
      %1384 = vmatmul.f32.gmra.mxu0 %v924
      %v1385 = vpop.f32.mrf.mxu0
      %v1386 = vadd.f32 %v1321, %v1385
      %1387 = vmatmul.f32.gmra.mxu0 %v930
      %v1388 = vpop.f32.mrf.mxu0
      %v1389 = vadd.f32 %v1324, %v1388
      %1390 = vdwg.mxu0
      %1391 = vmatpush.msra.mxu0 0.0
      %1392 = vmatpush.msra.mxu0 0.0
      %1393 = vmatpush.msra.mxu0 0.0
      %1394 = vmatpush.msra.mxu0 0.0
      %1395 = vmatpush.msra.mxu0 0.0
      %1396 = vmatpush.msra.mxu0 0.0
      %1397 = vmatpush.msra.mxu0 0.0
      %1398 = vmatpush.msra.mxu0 0.0
      %1399 = vmatpush.msra.mxu0 0.0
      %1400 = vmatpush.msra.mxu0 0.0
      %1401 = vmatpush.msra.mxu0 0.0
      %1402 = vmatpush.msra.mxu0 %v1016
      %1403 = vmatpush.msra.mxu0 %v1015
      %1404 = vmatpush.msra.mxu0 %v1014
      %1405 = vmatpush.msra.mxu0 %v1013
      %1406 = vmatpush.msra.mxu0 %v1012
      %1407 = vmatmul.f32.gmra.mxu0 %v1019
      %v1408 = vpop.f32.mrf.mxu0
      %v1409 = vadd.f32 %v1344, %v1408
      %1410 = vmatmul.f32.gmra.mxu0 %v1022
      %v1411 = vpop.f32.mrf.mxu0
      %v1412 = vadd.f32 %v1347, %v1411
      %1413 = vmatmul.f32.gmra.mxu0 %v1025
      %v1414 = vpop.f32.mrf.mxu0
      %v1415 = vadd.f32 %v1350, %v1414
      %1416 = vmatmul.f32.gmra.mxu0 %v1028
      %v1417 = vpop.f32.mrf.mxu0
      %v1418 = vadd.f32 %v1353, %v1417
      %1419 = vmatmul.f32.gmra.mxu0 %v1031
      %v1420 = vpop.f32.mrf.mxu0
      %v1421 = vadd.f32 %v1356, %v1420
      %1422 = vmatmul.f32.gmra.mxu0 %v1034
      %v1423 = vpop.f32.mrf.mxu0
      %v1424 = vadd.f32 %v1359, %v1423
      %1425 = vmatmul.f32.gmra.mxu0 %v1037
      %v1426 = vpop.f32.mrf.mxu0
      %v1427 = vadd.f32 %v1362, %v1426
      %1428 = vmatmul.f32.gmra.mxu0 %v1040
      %v1429 = vpop.f32.mrf.mxu0
      %v1430 = vadd.f32 %v1365, %v1429
      %1431 = vmatmul.f32.gmra.mxu0 %v1043
      %v1432 = vpop.f32.mrf.mxu0
      %v1433 = vadd.f32 %v1368, %v1432
      %1434 = vmatmul.f32.gmra.mxu0 %v1046
      %v1435 = vpop.f32.mrf.mxu0
      %v1436 = vadd.f32 %v1371, %v1435
      %1437 = vmatmul.f32.gmra.mxu0 %v1049
      %v1438 = vpop.f32.mrf.mxu0
      %v1439 = vadd.f32 %v1374, %v1438
      %1440 = vmatmul.f32.gmra.mxu0 %v1052
      %v1441 = vpop.f32.mrf.mxu0
      %v1442 = vadd.f32 %v1377, %v1441
      %1443 = vmatmul.f32.gmra.mxu0 %v1055
      %v1444 = vpop.f32.mrf.mxu0
      %v1445 = vadd.f32 %v1380, %v1444
      %1446 = vmatmul.f32.gmra.mxu0 %v1058
      %v1447 = vpop.f32.mrf.mxu0
      %v1448 = vadd.f32 %v1383, %v1447
      %1449 = vmatmul.f32.gmra.mxu0 %v1061
      %v1450 = vpop.f32.mrf.mxu0
      %v1451 = vadd.f32 %v1386, %v1450
      %1452 = vmatmul.f32.gmra.mxu0 %v1064
      %v1453 = vpop.f32.mrf.mxu0
      %v1454 = vadd.f32 %v1389, %v1453
      %1455 = vdwg.mxu0
      %v1457 = vsel %vm1017, %v660, 0
      %v1460 = vsel %vm1017, %v666, 0
      %v1463 = vsel %vm1017, %v672, 0
      %v1466 = vsel %vm1017, %v678, 0
      %v1469 = vsel %vm1017, %v684, 0
      %v1472 = vsel %vm1017, %v690, 0
      %v1475 = vsel %vm1017, %v696, 0
      %v1478 = vsel %vm1017, %v702, 0
      %v1481 = vsel %vm1017, %v708, 0
      %v1484 = vsel %vm1017, %v714, 0
      %v1487 = vsel %vm1017, %v720, 0
      %v1490 = vsel %vm1017, %v726, 0
      %v1493 = vsel %vm1017, %v732, 0
      %v1496 = vsel %vm1017, %v738, 0
      %v1499 = vsel %vm1017, %v744, 0
      %v1502 = vsel %vm1017, %v750, 0
      %1504 = vmatpush.msra.mxu0 %v766
      %1505 = vmatpush.msra.mxu0 %v765
      %1506 = vmatpush.msra.mxu0 %v764
      %1507 = vmatpush.msra.mxu0 %v763
      %1508 = vmatpush.msra.mxu0 %v762
      %1509 = vmatpush.msra.mxu0 %v761
      %1510 = vmatpush.msra.mxu0 %v760
      %1511 = vmatpush.msra.mxu0 %v759
      %1512 = vmatpush.msra.mxu0 %v758
      %1513 = vmatpush.msra.mxu0 %v757
      %1514 = vmatpush.msra.mxu0 %v756
      %1515 = vmatpush.msra.mxu0 %v755
      %1516 = vmatpush.msra.mxu0 %v754
      %1517 = vmatpush.msra.mxu0 %v753
      %1518 = vmatpush.msra.mxu0 %v752
      %1519 = vmatpush.msra.mxu0 %v751
      %1520 = vmatmul.f32.gmra.mxu0 %v655
      %v1521 = vpop.f32.mrf.mxu0
      %v1522 = vadd.f32 %v1409, %v1521
      %1523 = vmatmul.f32.gmra.mxu0 %v661
      %v1524 = vpop.f32.mrf.mxu0
      %v1525 = vadd.f32 %v1412, %v1524
      %1526 = vmatmul.f32.gmra.mxu0 %v667
      %v1527 = vpop.f32.mrf.mxu0
      %v1528 = vadd.f32 %v1415, %v1527
      %1529 = vmatmul.f32.gmra.mxu0 %v673
      %v1530 = vpop.f32.mrf.mxu0
      %v1531 = vadd.f32 %v1418, %v1530
      %1532 = vmatmul.f32.gmra.mxu0 %v679
      %v1533 = vpop.f32.mrf.mxu0
      %v1534 = vadd.f32 %v1421, %v1533
      %1535 = vmatmul.f32.gmra.mxu0 %v685
      %v1536 = vpop.f32.mrf.mxu0
      %v1537 = vadd.f32 %v1424, %v1536
      %1538 = vmatmul.f32.gmra.mxu0 %v691
      %v1539 = vpop.f32.mrf.mxu0
      %v1540 = vadd.f32 %v1427, %v1539
      %1541 = vmatmul.f32.gmra.mxu0 %v697
      %v1542 = vpop.f32.mrf.mxu0
      %v1543 = vadd.f32 %v1430, %v1542
      %1544 = vmatmul.f32.gmra.mxu0 %v703
      %v1545 = vpop.f32.mrf.mxu0
      %v1546 = vadd.f32 %v1433, %v1545
      %1547 = vmatmul.f32.gmra.mxu0 %v709
      %v1548 = vpop.f32.mrf.mxu0
      %v1549 = vadd.f32 %v1436, %v1548
      %1550 = vmatmul.f32.gmra.mxu0 %v715
      %v1551 = vpop.f32.mrf.mxu0
      %v1552 = vadd.f32 %v1439, %v1551
      %1553 = vmatmul.f32.gmra.mxu0 %v721
      %v1554 = vpop.f32.mrf.mxu0
      %v1555 = vadd.f32 %v1442, %v1554
      %1556 = vmatmul.f32.gmra.mxu0 %v727
      %v1557 = vpop.f32.mrf.mxu0
      %v1558 = vadd.f32 %v1445, %v1557
      %1559 = vmatmul.f32.gmra.mxu0 %v733
      %v1560 = vpop.f32.mrf.mxu0
      %v1561 = vadd.f32 %v1448, %v1560
      %1562 = vmatmul.f32.gmra.mxu0 %v739
      %v1563 = vpop.f32.mrf.mxu0
      %v1564 = vadd.f32 %v1451, %v1563
      %1565 = vmatmul.f32.gmra.mxu0 %v745
      %v1566 = vpop.f32.mrf.mxu0
      %v1567 = vadd.f32 %v1454, %v1566
      %1568 = vdwg.mxu0
      %1569 = vmatpush.msra.mxu0 %v782
      %1570 = vmatpush.msra.mxu0 %v781
      %1571 = vmatpush.msra.mxu0 %v780
      %1572 = vmatpush.msra.mxu0 %v779
      %1573 = vmatpush.msra.mxu0 %v778
      %1574 = vmatpush.msra.mxu0 %v777
      %1575 = vmatpush.msra.mxu0 %v776
      %1576 = vmatpush.msra.mxu0 %v775
      %1577 = vmatpush.msra.mxu0 %v774
      %1578 = vmatpush.msra.mxu0 %v773
      %1579 = vmatpush.msra.mxu0 %v772
      %1580 = vmatpush.msra.mxu0 %v771
      %1581 = vmatpush.msra.mxu0 %v770
      %1582 = vmatpush.msra.mxu0 %v769
      %1583 = vmatpush.msra.mxu0 %v768
      %1584 = vmatpush.msra.mxu0 %v767
      %1585 = vmatmul.f32.gmra.mxu0 %v656
      %v1586 = vpop.f32.mrf.mxu0
      %v1587 = vadd.f32 %v1522, %v1586
      %1588 = vmatmul.f32.gmra.mxu0 %v662
      %v1589 = vpop.f32.mrf.mxu0
      %v1590 = vadd.f32 %v1525, %v1589
      %1591 = vmatmul.f32.gmra.mxu0 %v668
      %v1592 = vpop.f32.mrf.mxu0
      %v1593 = vadd.f32 %v1528, %v1592
      %1594 = vmatmul.f32.gmra.mxu0 %v674
      %v1595 = vpop.f32.mrf.mxu0
      %v1596 = vadd.f32 %v1531, %v1595
      %1597 = vmatmul.f32.gmra.mxu0 %v680
      %v1598 = vpop.f32.mrf.mxu0
      %v1599 = vadd.f32 %v1534, %v1598
      %1600 = vmatmul.f32.gmra.mxu0 %v686
      %v1601 = vpop.f32.mrf.mxu0
      %v1602 = vadd.f32 %v1537, %v1601
      %1603 = vmatmul.f32.gmra.mxu0 %v692
      %v1604 = vpop.f32.mrf.mxu0
      %v1605 = vadd.f32 %v1540, %v1604
      %1606 = vmatmul.f32.gmra.mxu0 %v698
      %v1607 = vpop.f32.mrf.mxu0
      %v1608 = vadd.f32 %v1543, %v1607
      %1609 = vmatmul.f32.gmra.mxu0 %v704
      %v1610 = vpop.f32.mrf.mxu0
      %v1611 = vadd.f32 %v1546, %v1610
      %1612 = vmatmul.f32.gmra.mxu0 %v710
      %v1613 = vpop.f32.mrf.mxu0
      %v1614 = vadd.f32 %v1549, %v1613
      %1615 = vmatmul.f32.gmra.mxu0 %v716
      %v1616 = vpop.f32.mrf.mxu0
      %v1617 = vadd.f32 %v1552, %v1616
      %1618 = vmatmul.f32.gmra.mxu0 %v722
      %v1619 = vpop.f32.mrf.mxu0
      %v1620 = vadd.f32 %v1555, %v1619
      %1621 = vmatmul.f32.gmra.mxu0 %v728
      %v1622 = vpop.f32.mrf.mxu0
      %v1623 = vadd.f32 %v1558, %v1622
      %1624 = vmatmul.f32.gmra.mxu0 %v734
      %v1625 = vpop.f32.mrf.mxu0
      %v1626 = vadd.f32 %v1561, %v1625
      %1627 = vmatmul.f32.gmra.mxu0 %v740
      %v1628 = vpop.f32.mrf.mxu0
      %v1629 = vadd.f32 %v1564, %v1628
      %1630 = vmatmul.f32.gmra.mxu0 %v746
      %v1631 = vpop.f32.mrf.mxu0
      %v1632 = vadd.f32 %v1567, %v1631
      %1633 = vdwg.mxu0
      %1634 = vmatpush.msra.mxu0 %v798
      %1635 = vmatpush.msra.mxu0 %v797
      %1636 = vmatpush.msra.mxu0 %v796
      %1637 = vmatpush.msra.mxu0 %v795
      %1638 = vmatpush.msra.mxu0 %v794
      %1639 = vmatpush.msra.mxu0 %v793
      %1640 = vmatpush.msra.mxu0 %v792
      %1641 = vmatpush.msra.mxu0 %v791
      %1642 = vmatpush.msra.mxu0 %v790
      %1643 = vmatpush.msra.mxu0 %v789
      %1644 = vmatpush.msra.mxu0 %v788
      %1645 = vmatpush.msra.mxu0 %v787
      %1646 = vmatpush.msra.mxu0 %v786
      %1647 = vmatpush.msra.mxu0 %v785
      %1648 = vmatpush.msra.mxu0 %v784
      %1649 = vmatpush.msra.mxu0 %v783
      %1650 = vmatmul.f32.gmra.mxu0 %v657
      %v1651 = vpop.f32.mrf.mxu0
      %v1652 = vadd.f32 %v1587, %v1651
      %1653 = vmatmul.f32.gmra.mxu0 %v663
      %v1654 = vpop.f32.mrf.mxu0
      %v1655 = vadd.f32 %v1590, %v1654
      %1656 = vmatmul.f32.gmra.mxu0 %v669
      %v1657 = vpop.f32.mrf.mxu0
      %v1658 = vadd.f32 %v1593, %v1657
      %1659 = vmatmul.f32.gmra.mxu0 %v675
      %v1660 = vpop.f32.mrf.mxu0
      %v1661 = vadd.f32 %v1596, %v1660
      %1662 = vmatmul.f32.gmra.mxu0 %v681
      %v1663 = vpop.f32.mrf.mxu0
      %v1664 = vadd.f32 %v1599, %v1663
      %1665 = vmatmul.f32.gmra.mxu0 %v687
      %v1666 = vpop.f32.mrf.mxu0
      %v1667 = vadd.f32 %v1602, %v1666
      %1668 = vmatmul.f32.gmra.mxu0 %v693
      %v1669 = vpop.f32.mrf.mxu0
      %v1670 = vadd.f32 %v1605, %v1669
      %1671 = vmatmul.f32.gmra.mxu0 %v699
      %v1672 = vpop.f32.mrf.mxu0
      %v1673 = vadd.f32 %v1608, %v1672
      %1674 = vmatmul.f32.gmra.mxu0 %v705
      %v1675 = vpop.f32.mrf.mxu0
      %v1676 = vadd.f32 %v1611, %v1675
      %1677 = vmatmul.f32.gmra.mxu0 %v711
      %v1678 = vpop.f32.mrf.mxu0
      %v1679 = vadd.f32 %v1614, %v1678
      %1680 = vmatmul.f32.gmra.mxu0 %v717
      %v1681 = vpop.f32.mrf.mxu0
      %v1682 = vadd.f32 %v1617, %v1681
      %1683 = vmatmul.f32.gmra.mxu0 %v723
      %v1684 = vpop.f32.mrf.mxu0
      %v1685 = vadd.f32 %v1620, %v1684
      %1686 = vmatmul.f32.gmra.mxu0 %v729
      %v1687 = vpop.f32.mrf.mxu0
      %v1688 = vadd.f32 %v1623, %v1687
      %1689 = vmatmul.f32.gmra.mxu0 %v735
      %v1690 = vpop.f32.mrf.mxu0
      %v1691 = vadd.f32 %v1626, %v1690
      %1692 = vmatmul.f32.gmra.mxu0 %v741
      %v1693 = vpop.f32.mrf.mxu0
      %v1694 = vadd.f32 %v1629, %v1693
      %1695 = vmatmul.f32.gmra.mxu0 %v747
      %v1696 = vpop.f32.mrf.mxu0
      %v1697 = vadd.f32 %v1632, %v1696
      %1698 = vdwg.mxu0
      %1699 = vmatpush.msra.mxu0 %v814
      %1700 = vmatpush.msra.mxu0 %v813
      %1701 = vmatpush.msra.mxu0 %v812
      %1702 = vmatpush.msra.mxu0 %v811
      %1703 = vmatpush.msra.mxu0 %v810
      %1704 = vmatpush.msra.mxu0 %v809
      %1705 = vmatpush.msra.mxu0 %v808
      %1706 = vmatpush.msra.mxu0 %v807
      %1707 = vmatpush.msra.mxu0 %v806
      %1708 = vmatpush.msra.mxu0 %v805
      %1709 = vmatpush.msra.mxu0 %v804
      %1710 = vmatpush.msra.mxu0 %v803
      %1711 = vmatpush.msra.mxu0 %v802
      %1712 = vmatpush.msra.mxu0 %v801
      %1713 = vmatpush.msra.mxu0 %v800
      %1714 = vmatpush.msra.mxu0 %v799
      %1715 = vmatmul.f32.gmra.mxu0 %v658
      %v1716 = vpop.f32.mrf.mxu0
      %v1717 = vadd.f32 %v1652, %v1716
      %1718 = vmatmul.f32.gmra.mxu0 %v664
      %v1719 = vpop.f32.mrf.mxu0
      %v1720 = vadd.f32 %v1655, %v1719
      %1721 = vmatmul.f32.gmra.mxu0 %v670
      %v1722 = vpop.f32.mrf.mxu0
      %v1723 = vadd.f32 %v1658, %v1722
      %1724 = vmatmul.f32.gmra.mxu0 %v676
      %v1725 = vpop.f32.mrf.mxu0
      %v1726 = vadd.f32 %v1661, %v1725
      %1727 = vmatmul.f32.gmra.mxu0 %v682
      %v1728 = vpop.f32.mrf.mxu0
      %v1729 = vadd.f32 %v1664, %v1728
      %1730 = vmatmul.f32.gmra.mxu0 %v688
      %v1731 = vpop.f32.mrf.mxu0
      %v1732 = vadd.f32 %v1667, %v1731
      %1733 = vmatmul.f32.gmra.mxu0 %v694
      %v1734 = vpop.f32.mrf.mxu0
      %v1735 = vadd.f32 %v1670, %v1734
      %1736 = vmatmul.f32.gmra.mxu0 %v700
      %v1737 = vpop.f32.mrf.mxu0
      %v1738 = vadd.f32 %v1673, %v1737
      %1739 = vmatmul.f32.gmra.mxu0 %v706
      %v1740 = vpop.f32.mrf.mxu0
      %v1741 = vadd.f32 %v1676, %v1740
      %1742 = vmatmul.f32.gmra.mxu0 %v712
      %v1743 = vpop.f32.mrf.mxu0
      %v1744 = vadd.f32 %v1679, %v1743
      %1745 = vmatmul.f32.gmra.mxu0 %v718
      %v1746 = vpop.f32.mrf.mxu0
      %v1747 = vadd.f32 %v1682, %v1746
      %1748 = vmatmul.f32.gmra.mxu0 %v724
      %v1749 = vpop.f32.mrf.mxu0
      %v1750 = vadd.f32 %v1685, %v1749
      %1751 = vmatmul.f32.gmra.mxu0 %v730
      %v1752 = vpop.f32.mrf.mxu0
      %v1753 = vadd.f32 %v1688, %v1752
      %1754 = vmatmul.f32.gmra.mxu0 %v736
      %v1755 = vpop.f32.mrf.mxu0
      %v1756 = vadd.f32 %v1691, %v1755
      %1757 = vmatmul.f32.gmra.mxu0 %v742
      %v1758 = vpop.f32.mrf.mxu0
      %v1759 = vadd.f32 %v1694, %v1758
      %1760 = vmatmul.f32.gmra.mxu0 %v748
      %v1761 = vpop.f32.mrf.mxu0
      %v1762 = vadd.f32 %v1697, %v1761
      %1763 = vdwg.mxu0
      %1764 = vmatpush.msra.mxu0 %v830
      %1765 = vmatpush.msra.mxu0 %v829
      %1766 = vmatpush.msra.mxu0 %v828
      %1767 = vmatpush.msra.mxu0 %v827
      %1768 = vmatpush.msra.mxu0 %v826
      %1769 = vmatpush.msra.mxu0 %v825
      %1770 = vmatpush.msra.mxu0 %v824
      %1771 = vmatpush.msra.mxu0 %v823
      %1772 = vmatpush.msra.mxu0 %v822
      %1773 = vmatpush.msra.mxu0 %v821
      %1774 = vmatpush.msra.mxu0 %v820
      %1775 = vmatpush.msra.mxu0 %v819
      %1776 = vmatpush.msra.mxu0 %v818
      %1777 = vmatpush.msra.mxu0 %v817
      %1778 = vmatpush.msra.mxu0 %v816
      %1779 = vmatpush.msra.mxu0 %v815
      %1780 = vmatmul.f32.gmra.mxu0 %v659
      %v1781 = vpop.f32.mrf.mxu0
      %v1782 = vadd.f32 %v1717, %v1781
      %1783 = vmatmul.f32.gmra.mxu0 %v665
      %v1784 = vpop.f32.mrf.mxu0
      %v1785 = vadd.f32 %v1720, %v1784
      %1786 = vmatmul.f32.gmra.mxu0 %v671
      %v1787 = vpop.f32.mrf.mxu0
      %v1788 = vadd.f32 %v1723, %v1787
      %1789 = vmatmul.f32.gmra.mxu0 %v677
      %v1790 = vpop.f32.mrf.mxu0
      %v1791 = vadd.f32 %v1726, %v1790
      %1792 = vmatmul.f32.gmra.mxu0 %v683
      %v1793 = vpop.f32.mrf.mxu0
      %v1794 = vadd.f32 %v1729, %v1793
      %1795 = vmatmul.f32.gmra.mxu0 %v689
      %v1796 = vpop.f32.mrf.mxu0
      %v1797 = vadd.f32 %v1732, %v1796
      %1798 = vmatmul.f32.gmra.mxu0 %v695
      %v1799 = vpop.f32.mrf.mxu0
      %v1800 = vadd.f32 %v1735, %v1799
      %1801 = vmatmul.f32.gmra.mxu0 %v701
      %v1802 = vpop.f32.mrf.mxu0
      %v1803 = vadd.f32 %v1738, %v1802
      %1804 = vmatmul.f32.gmra.mxu0 %v707
      %v1805 = vpop.f32.mrf.mxu0
      %v1806 = vadd.f32 %v1741, %v1805
      %1807 = vmatmul.f32.gmra.mxu0 %v713
      %v1808 = vpop.f32.mrf.mxu0
      %v1809 = vadd.f32 %v1744, %v1808
      %1810 = vmatmul.f32.gmra.mxu0 %v719
      %v1811 = vpop.f32.mrf.mxu0
      %v1812 = vadd.f32 %v1747, %v1811
      %1813 = vmatmul.f32.gmra.mxu0 %v725
      %v1814 = vpop.f32.mrf.mxu0
      %v1815 = vadd.f32 %v1750, %v1814
      %1816 = vmatmul.f32.gmra.mxu0 %v731
      %v1817 = vpop.f32.mrf.mxu0
      %v1818 = vadd.f32 %v1753, %v1817
      %1819 = vmatmul.f32.gmra.mxu0 %v737
      %v1820 = vpop.f32.mrf.mxu0
      %v1821 = vadd.f32 %v1756, %v1820
      %1822 = vmatmul.f32.gmra.mxu0 %v743
      %v1823 = vpop.f32.mrf.mxu0
      %v1824 = vadd.f32 %v1759, %v1823
      %1825 = vmatmul.f32.gmra.mxu0 %v749
      %v1826 = vpop.f32.mrf.mxu0
      %v1827 = vadd.f32 %v1762, %v1826
      %1828 = vdwg.mxu0
      %1829 = vmatpush.msra.mxu0 0.0
      %1830 = vmatpush.msra.mxu0 0.0
      %1831 = vmatpush.msra.mxu0 0.0
      %1832 = vmatpush.msra.mxu0 0.0
      %1833 = vmatpush.msra.mxu0 0.0
      %1834 = vmatpush.msra.mxu0 0.0
      %1835 = vmatpush.msra.mxu0 0.0
      %1836 = vmatpush.msra.mxu0 0.0
      %1837 = vmatpush.msra.mxu0 0.0
      %1838 = vmatpush.msra.mxu0 0.0
      %1839 = vmatpush.msra.mxu0 0.0
      %1840 = vmatpush.msra.mxu0 %v835
      %1841 = vmatpush.msra.mxu0 %v834
      %1842 = vmatpush.msra.mxu0 %v833
      %1843 = vmatpush.msra.mxu0 %v832
      %1844 = vmatpush.msra.mxu0 %v831
      %1845 = vmatmul.f32.gmra.mxu0 %v1457
      %v1846 = vpop.f32.mrf.mxu0
      %v1847 = vadd.f32 %v1782, %v1846
      %1848 = vmatmul.f32.gmra.mxu0 %v1460
      %v1849 = vpop.f32.mrf.mxu0
      %v1850 = vadd.f32 %v1785, %v1849
      %1851 = vmatmul.f32.gmra.mxu0 %v1463
      %v1852 = vpop.f32.mrf.mxu0
      %v1853 = vadd.f32 %v1788, %v1852
      %1854 = vmatmul.f32.gmra.mxu0 %v1466
      %v1855 = vpop.f32.mrf.mxu0
      %v1856 = vadd.f32 %v1791, %v1855
      %1857 = vmatmul.f32.gmra.mxu0 %v1469
      %v1858 = vpop.f32.mrf.mxu0
      %v1859 = vadd.f32 %v1794, %v1858
      %1860 = vmatmul.f32.gmra.mxu0 %v1472
      %v1861 = vpop.f32.mrf.mxu0
      %v1862 = vadd.f32 %v1797, %v1861
      %1863 = vmatmul.f32.gmra.mxu0 %v1475
      %v1864 = vpop.f32.mrf.mxu0
      %v1865 = vadd.f32 %v1800, %v1864
      %1866 = vmatmul.f32.gmra.mxu0 %v1478
      %v1867 = vpop.f32.mrf.mxu0
      %v1868 = vadd.f32 %v1803, %v1867
      %1869 = vmatmul.f32.gmra.mxu0 %v1481
      %v1870 = vpop.f32.mrf.mxu0
      %v1871 = vadd.f32 %v1806, %v1870
      %1872 = vmatmul.f32.gmra.mxu0 %v1484
      %v1873 = vpop.f32.mrf.mxu0
      %v1874 = vadd.f32 %v1809, %v1873
      %1875 = vmatmul.f32.gmra.mxu0 %v1487
      %v1876 = vpop.f32.mrf.mxu0
      %v1877 = vadd.f32 %v1812, %v1876
      %1878 = vmatmul.f32.gmra.mxu0 %v1490
      %v1879 = vpop.f32.mrf.mxu0
      %v1880 = vadd.f32 %v1815, %v1879
      %1881 = vmatmul.f32.gmra.mxu0 %v1493
      %v1882 = vpop.f32.mrf.mxu0
      %v1883 = vadd.f32 %v1818, %v1882
      %1884 = vmatmul.f32.gmra.mxu0 %v1496
      %v1885 = vpop.f32.mrf.mxu0
      %v1886 = vadd.f32 %v1821, %v1885
      %1887 = vmatmul.f32.gmra.mxu0 %v1499
      %v1888 = vpop.f32.mrf.mxu0
      %v1889 = vadd.f32 %v1824, %v1888
      %1890 = vmatmul.f32.gmra.mxu0 %v1502
      %v1891 = vpop.f32.mrf.mxu0
      %v1892 = vadd.f32 %v1827, %v1891
      %1893 = vdwg.mxu0
      %v1894 = vld [vmem:[%s640] sm:$0xff]
      %v1895 = vld [vmem:[%s640 + $0x8] sm:$0xff]
      %v1896 = vld [vmem:[%s640 + $0x10] sm:$0xff]
      %v1897 = vld [vmem:[%s640 + $0x18] sm:$0xff]
      %v1898 = vld [vmem:[%s640 + $0x20] sm:$0xff]
      %v1899 = vld [vmem:[%s640 + $0x28] sm:$0xff]
      %v1900 = vld [vmem:[%s640 + $0x30] sm:$0xff]
      %v1901 = vld [vmem:[%s640 + $0x38] sm:$0xff]
      %v1902 = vld [vmem:[%s640 + $0x40] sm:$0xff]
      %v1903 = vld [vmem:[%s640 + $0x48] sm:$0xff]
      %v1904 = vld [vmem:[%s640 + $0x50] sm:$0xff]
      %v1905 = vld [vmem:[%s640 + $0x58] sm:$0xff]
      %v1906 = vld [vmem:[%s640 + $0x60] sm:$0xff]
      %v1907 = vld [vmem:[%s640 + $0x68] sm:$0xff]
      %v1908 = vld [vmem:[%s640 + $0x70] sm:$0xff]
      %v1909 = vld [vmem:[%s640 + $0x78] sm:$0xff]
      %v1910 = vld [vmem:[%s640 + $0x80] sm:$0xff]
      %v1911 = vld [vmem:[%s640 + $0x88] sm:$0xff]
      %v1912 = vld [vmem:[%s640 + $0x90] sm:$0xff]
      %v1913 = vld [vmem:[%s640 + $0x98] sm:$0xff]
      %v1914 = vld [vmem:[%s640 + $0xa0] sm:$0xff]
      %v1915 = vld [vmem:[%s640 + $0xa8] sm:$0xff]
      %v1916 = vld [vmem:[%s640 + $0xb0] sm:$0xff]
      %v1917 = vld [vmem:[%s640 + $0xb8] sm:$0xff]
      %v1918 = vld [vmem:[%s640 + $0xc0] sm:$0xff]
      %v1919 = vld [vmem:[%s640 + $0xc8] sm:$0xff]
      %v1920 = vld [vmem:[%s640 + $0xd0] sm:$0xff]
      %v1921 = vld [vmem:[%s640 + $0xd8] sm:$0xff]
      %v1922 = vld [vmem:[%s640 + $0xe0] sm:$0xff]
      %v1923 = vld [vmem:[%s640 + $0xe8] sm:$0xff]
      %v1924 = vld [vmem:[%s640 + $0xf0] sm:$0xff]
      %v1925 = vld [vmem:[%s640 + $0xf8] sm:$0xff]
      %v1926 = vld [vmem:[%s640 + $0x100] sm:$0xff]
      %v1927 = vld [vmem:[%s640 + $0x108] sm:$0xff]
      %v1928 = vld [vmem:[%s640 + $0x110] sm:$0xff]
      %v1929 = vld [vmem:[%s640 + $0x118] sm:$0xff]
      %v1930 = vld [vmem:[%s640 + $0x120] sm:$0xff]
      %v1931 = vld [vmem:[%s640 + $0x128] sm:$0xff]
      %v1932 = vld [vmem:[%s640 + $0x130] sm:$0xff]
      %v1933 = vld [vmem:[%s640 + $0x138] sm:$0xff]
      %v1934 = vld [vmem:[%s640 + $0x140] sm:$0xff]
      %v1935 = vld [vmem:[%s640 + $0x148] sm:$0xff]
      %v1936 = vld [vmem:[%s640 + $0x150] sm:$0xff]
      %v1937 = vld [vmem:[%s640 + $0x158] sm:$0xff]
      %v1938 = vld [vmem:[%s640 + $0x160] sm:$0xff]
      %v1939 = vld [vmem:[%s640 + $0x168] sm:$0xff]
      %v1940 = vld [vmem:[%s640 + $0x170] sm:$0xff]
      %v1941 = vld [vmem:[%s640 + $0x178] sm:$0xff]
      %v1942 = vld [vmem:[%s640 + $0x180] sm:$0xff]
      %v1943 = vld [vmem:[%s640 + $0x188] sm:$0xff]
      %v1944 = vld [vmem:[%s640 + $0x190] sm:$0xff]
      %v1945 = vld [vmem:[%s640 + $0x198] sm:$0xff]
      %v1946 = vld [vmem:[%s640 + $0x1a0] sm:$0xff]
      %v1947 = vld [vmem:[%s640 + $0x1a8] sm:$0xff]
      %v1948 = vld [vmem:[%s640 + $0x1b0] sm:$0xff]
      %v1949 = vld [vmem:[%s640 + $0x1b8] sm:$0xff]
      %v1950 = vld [vmem:[%s640 + $0x1c0] sm:$0xff]
      %v1951 = vld [vmem:[%s640 + $0x1c8] sm:$0xff]
      %v1952 = vld [vmem:[%s640 + $0x1d0] sm:$0xff]
      %v1953 = vld [vmem:[%s640 + $0x1d8] sm:$0xff]
      %v1954 = vld [vmem:[%s640 + $0x1e0] sm:$0xff]
      %v1955 = vld [vmem:[%s640 + $0x1e8] sm:$0xff]
      %v1956 = vld [vmem:[%s640 + $0x1f0] sm:$0xff]
      %v1957 = vld [vmem:[%s640 + $0x1f8] sm:$0xff]
      %v1958 = vld [vmem:[%s640 + $0x200] sm:$0xff]
      %v1959 = vld [vmem:[%s640 + $0x208] sm:$0xff]
      %v1960 = vld [vmem:[%s640 + $0x210] sm:$0xff]
      %v1961 = vld [vmem:[%s640 + $0x218] sm:$0xff]
      %v1962 = vld [vmem:[%s640 + $0x220] sm:$0xff]
      %v1963 = vld [vmem:[%s640 + $0x228] sm:$0xff]
      %v1964 = vld [vmem:[%s640 + $0x230] sm:$0xff]
      %v1965 = vld [vmem:[%s640 + $0x238] sm:$0xff]
      %v1966 = vld [vmem:[%s640 + $0x240] sm:$0xff]
      %v1967 = vld [vmem:[%s640 + $0x248] sm:$0xff]
      %v1968 = vld [vmem:[%s640 + $0x250] sm:$0xff]
      %v1969 = vld [vmem:[%s640 + $0x258] sm:$0xff]
      %v1970 = vld [vmem:[%s640 + $0x260] sm:$0xff]
      %v1971 = vld [vmem:[%s640 + $0x268] sm:$0xff]
      %v1972 = vld [vmem:[%s640 + $0x270] sm:$0xff]
      %v1973 = vld [vmem:[%s640 + $0x278] sm:$0xff]
      %v1974 = vld [vmem:[%s640 + $0x280] sm:$0xff]
      %v1975 = vld [vmem:[%s640 + $0x288] sm:$0xff]
      %v1976 = vld [vmem:[%s640 + $0x290] sm:$0xff]
      %v1977 = vld [vmem:[%s640 + $0x298] sm:$0xff]
      %v1978 = vld [vmem:[%s640 + $0x2a0] sm:$0xff]
      %v1979 = vld [vmem:[%s640 + $0x2a8] sm:$0xff]
      %v1980 = vld [vmem:[%s640 + $0x2b0] sm:$0xff]
      %v1981 = vld [vmem:[%s640 + $0x2b8] sm:$0xff]
      %v1982 = vld [vmem:[%s640 + $0x2c0] sm:$0xff]
      %v1983 = vld [vmem:[%s640 + $0x2c8] sm:$0xff]
      %v1984 = vld [vmem:[%s640 + $0x2d0] sm:$0xff]
      %v1985 = vld [vmem:[%s640 + $0x2d8] sm:$0xff]
      %v1986 = vld [vmem:[%s640 + $0x2e0] sm:$0xff]
      %v1987 = vld [vmem:[%s640 + $0x2e8] sm:$0xff]
      %v1988 = vld [vmem:[%s640 + $0x2f0] sm:$0xff]
      %v1989 = vld [vmem:[%s640 + $0x2f8] sm:$0xff]
      %v1990 = vld [vmem:[%s8] sm:$0xff]
      %v1991 = vld [vmem:[%s8 + $0x8] sm:$0xff]
      %v1992 = vld [vmem:[%s8 + $0x10] sm:$0xff]
      %v1993 = vld [vmem:[%s8 + $0x18] sm:$0xff]
      %v1994 = vld [vmem:[%s8 + $0x20] sm:$0xff]
      %v1995 = vld [vmem:[%s8 + $0x28] sm:$0xff]
      %v1996 = vld [vmem:[%s8 + $0x30] sm:$0xff]
      %v1997 = vld [vmem:[%s8 + $0x38] sm:$0xff]
      %v1998 = vld [vmem:[%s8 + $0x40] sm:$0xff]
      %v1999 = vld [vmem:[%s8 + $0x48] sm:$0xff]
      %v2000 = vld [vmem:[%s8 + $0x50] sm:$0xff]
      %v2001 = vld [vmem:[%s8 + $0x58] sm:$0xff]
      %v2002 = vld [vmem:[%s8 + $0x60] sm:$0xff]
      %v2003 = vld [vmem:[%s8 + $0x68] sm:$0xff]
      %v2004 = vld [vmem:[%s8 + $0x70] sm:$0xff]
      %v2005 = vld [vmem:[%s8 + $0x78] sm:$0xff]
      %v2006 = vld [vmem:[%s8 + $0x80] sm:$0xff]
      %v2007 = vld [vmem:[%s8 + $0x88] sm:$0xff]
      %v2008 = vld [vmem:[%s8 + $0x90] sm:$0xff]
      %v2009 = vld [vmem:[%s8 + $0x98] sm:$0xff]
      %v2010 = vld [vmem:[%s8 + $0xa0] sm:$0xff]
      %v2011 = vld [vmem:[%s8 + $0xa8] sm:$0xff]
      %v2012 = vld [vmem:[%s8 + $0xb0] sm:$0xff]
      %v2013 = vld [vmem:[%s8 + $0xb8] sm:$0xff]
      %v2014 = vld [vmem:[%s8 + $0xc0] sm:$0xff]
      %v2015 = vld [vmem:[%s8 + $0xc8] sm:$0xff]
      %v2016 = vld [vmem:[%s8 + $0xd0] sm:$0xff]
      %v2017 = vld [vmem:[%s8 + $0xd8] sm:$0xff]
      %v2018 = vld [vmem:[%s8 + $0xe0] sm:$0xff]
      %v2019 = vld [vmem:[%s8 + $0xe8] sm:$0xff]
      %v2020 = vld [vmem:[%s8 + $0xf0] sm:$0xff]
      %v2021 = vld [vmem:[%s8 + $0xf8] sm:$0xff]
      %v2022 = vld [vmem:[%s8 + $0x100] sm:$0xff]
      %v2023 = vld [vmem:[%s8 + $0x108] sm:$0xff]
      %v2024 = vld [vmem:[%s8 + $0x110] sm:$0xff]
      %v2025 = vld [vmem:[%s8 + $0x118] sm:$0xff]
      %v2026 = vld [vmem:[%s8 + $0x120] sm:$0xff]
      %v2027 = vld [vmem:[%s8 + $0x128] sm:$0xff]
      %v2028 = vld [vmem:[%s8 + $0x130] sm:$0xff]
      %v2029 = vld [vmem:[%s8 + $0x138] sm:$0xff]
      %v2030 = vld [vmem:[%s8 + $0x140] sm:$0xff]
      %v2031 = vld [vmem:[%s8 + $0x148] sm:$0xff]
      %v2032 = vld [vmem:[%s8 + $0x150] sm:$0xff]
      %v2033 = vld [vmem:[%s8 + $0x158] sm:$0xff]
      %v2034 = vld [vmem:[%s8 + $0x160] sm:$0xff]
      %v2035 = vld [vmem:[%s8 + $0x168] sm:$0xff]
      %v2036 = vld [vmem:[%s8 + $0x170] sm:$0xff]
      %v2037 = vld [vmem:[%s8 + $0x178] sm:$0xff]
      %v2038 = vld [vmem:[%s8 + $0x180] sm:$0xff]
      %v2039 = vld [vmem:[%s8 + $0x188] sm:$0xff]
      %v2040 = vld [vmem:[%s8 + $0x190] sm:$0xff]
      %v2041 = vld [vmem:[%s8 + $0x198] sm:$0xff]
      %v2042 = vld [vmem:[%s8 + $0x1a0] sm:$0xff]
      %v2043 = vld [vmem:[%s8 + $0x1a8] sm:$0xff]
      %v2044 = vld [vmem:[%s8 + $0x1b0] sm:$0xff]
      %v2045 = vld [vmem:[%s8 + $0x1b8] sm:$0xff]
      %v2046 = vld [vmem:[%s8 + $0x1c0] sm:$0xff]
      %v2047 = vld [vmem:[%s8 + $0x1c8] sm:$0xff]
      %v2048 = vld [vmem:[%s8 + $0x1d0] sm:$0xff]
      %v2049 = vld [vmem:[%s8 + $0x1d8] sm:$0xff]
      %v2050 = vld [vmem:[%s8 + $0x1e0] sm:$0xff]
      %v2051 = vld [vmem:[%s8 + $0x1e8] sm:$0xff]
      %v2052 = vld [vmem:[%s8 + $0x1f0] sm:$0xff]
      %v2053 = vld [vmem:[%s8 + $0x1f8] sm:$0xff]
      %v2054 = vld [vmem:[%s8 + $0x200] sm:$0xff]
      %v2055 = vld [vmem:[%s8 + $0x208] sm:$0xff]
      %v2056 = vld [vmem:[%s8 + $0x210] sm:$0xff]
      %v2057 = vld [vmem:[%s8 + $0x218] sm:$0xff]
      %v2058 = vld [vmem:[%s8 + $0x220] sm:$0xff]
      %v2059 = vld [vmem:[%s8 + $0x228] sm:$0xff]
      %v2060 = vld [vmem:[%s8 + $0x230] sm:$0xff]
      %v2061 = vld [vmem:[%s8 + $0x238] sm:$0xff]
      %v2062 = vld [vmem:[%s8 + $0x240] sm:$0xff]
      %v2063 = vld [vmem:[%s8 + $0x248] sm:$0xff]
      %v2064 = vld [vmem:[%s8 + $0x250] sm:$0xff]
      %v2065 = vld [vmem:[%s8 + $0x258] sm:$0xff]
      %v2066 = vld [vmem:[%s8 + $0x260] sm:$0xff]
      %v2067 = vld [vmem:[%s8 + $0x268] sm:$0xff]
      %v2068 = vld [vmem:[%s8 + $0x270] sm:$0xff]
      %v2069 = vld [vmem:[%s8 + $0x278] sm:$0xff]
      %v2070 = vld [vmem:[%s8 + $0x280] sm:$0xff]
      %v2071 = vld [vmem:[%s8 + $0x288] sm:$0xff]
      %v2072 = vld [vmem:[%s8 + $0x290] sm:$0xff]
      %v2073 = vld [vmem:[%s8 + $0x298] sm:$0xff]
      %v2074 = vld [vmem:[%s8 + $0x2a0] sm:$0xff]
      %v2076 = vsel %vm1017, %v1899, 0
      %v2079 = vsel %vm1017, %v1905, 0
      %v2082 = vsel %vm1017, %v1911, 0
      %v2085 = vsel %vm1017, %v1917, 0
      %v2088 = vsel %vm1017, %v1923, 0
      %v2091 = vsel %vm1017, %v1929, 0
      %v2094 = vsel %vm1017, %v1935, 0
      %v2097 = vsel %vm1017, %v1941, 0
      %v2100 = vsel %vm1017, %v1947, 0
      %v2103 = vsel %vm1017, %v1953, 0
      %v2106 = vsel %vm1017, %v1959, 0
      %v2109 = vsel %vm1017, %v1965, 0
      %v2112 = vsel %vm1017, %v1971, 0
      %v2115 = vsel %vm1017, %v1977, 0
      %v2118 = vsel %vm1017, %v1983, 0
      %v2121 = vsel %vm1017, %v1989, 0
      %2123 = vmatpush.msra.mxu0 %v2005
      %2124 = vmatpush.msra.mxu0 %v2004
      %2125 = vmatpush.msra.mxu0 %v2003
      %2126 = vmatpush.msra.mxu0 %v2002
      %2127 = vmatpush.msra.mxu0 %v2001
      %2128 = vmatpush.msra.mxu0 %v2000
      %2129 = vmatpush.msra.mxu0 %v1999
      %2130 = vmatpush.msra.mxu0 %v1998
      %2131 = vmatpush.msra.mxu0 %v1997
      %2132 = vmatpush.msra.mxu0 %v1996
      %2133 = vmatpush.msra.mxu0 %v1995
      %2134 = vmatpush.msra.mxu0 %v1994
      %2135 = vmatpush.msra.mxu0 %v1993
      %2136 = vmatpush.msra.mxu0 %v1992
      %2137 = vmatpush.msra.mxu0 %v1991
      %2138 = vmatpush.msra.mxu0 %v1990
      %2139 = vmatmul.f32.gmra.mxu0 %v1894
      %v2140 = vpop.f32.mrf.mxu0
      %v2141 = vadd.f32 0.0, %v2140
      %2142 = vmatmul.f32.gmra.mxu0 %v1900
      %v2143 = vpop.f32.mrf.mxu0
      %v2144 = vadd.f32 0.0, %v2143
      %2145 = vmatmul.f32.gmra.mxu0 %v1906
      %v2146 = vpop.f32.mrf.mxu0
      %v2147 = vadd.f32 0.0, %v2146
      %2148 = vmatmul.f32.gmra.mxu0 %v1912
      %v2149 = vpop.f32.mrf.mxu0
      %v2150 = vadd.f32 0.0, %v2149
      %2151 = vmatmul.f32.gmra.mxu0 %v1918
      %v2152 = vpop.f32.mrf.mxu0
      %v2153 = vadd.f32 0.0, %v2152
      %2154 = vmatmul.f32.gmra.mxu0 %v1924
      %v2155 = vpop.f32.mrf.mxu0
      %v2156 = vadd.f32 0.0, %v2155
      %2157 = vmatmul.f32.gmra.mxu0 %v1930
      %v2158 = vpop.f32.mrf.mxu0
      %v2159 = vadd.f32 0.0, %v2158
      %2160 = vmatmul.f32.gmra.mxu0 %v1936
      %v2161 = vpop.f32.mrf.mxu0
      %v2162 = vadd.f32 0.0, %v2161
      %2163 = vmatmul.f32.gmra.mxu0 %v1942
      %v2164 = vpop.f32.mrf.mxu0
      %v2165 = vadd.f32 0.0, %v2164
      %2166 = vmatmul.f32.gmra.mxu0 %v1948
      %v2167 = vpop.f32.mrf.mxu0
      %v2168 = vadd.f32 0.0, %v2167
      %2169 = vmatmul.f32.gmra.mxu0 %v1954
      %v2170 = vpop.f32.mrf.mxu0
      %v2171 = vadd.f32 0.0, %v2170
      %2172 = vmatmul.f32.gmra.mxu0 %v1960
      %v2173 = vpop.f32.mrf.mxu0
      %v2174 = vadd.f32 0.0, %v2173
      %2175 = vmatmul.f32.gmra.mxu0 %v1966
      %v2176 = vpop.f32.mrf.mxu0
      %v2177 = vadd.f32 0.0, %v2176
      %2178 = vmatmul.f32.gmra.mxu0 %v1972
      %v2179 = vpop.f32.mrf.mxu0
      %v2180 = vadd.f32 0.0, %v2179
      %2181 = vmatmul.f32.gmra.mxu0 %v1978
      %v2182 = vpop.f32.mrf.mxu0
      %v2183 = vadd.f32 0.0, %v2182
      %2184 = vmatmul.f32.gmra.mxu0 %v1984
      %v2185 = vpop.f32.mrf.mxu0
      %v2186 = vadd.f32 0.0, %v2185
      %2187 = vdwg.mxu0
      %2188 = vmatpush.msra.mxu0 %v2021
      %2189 = vmatpush.msra.mxu0 %v2020
      %2190 = vmatpush.msra.mxu0 %v2019
      %2191 = vmatpush.msra.mxu0 %v2018
      %2192 = vmatpush.msra.mxu0 %v2017
      %2193 = vmatpush.msra.mxu0 %v2016
      %2194 = vmatpush.msra.mxu0 %v2015
      %2195 = vmatpush.msra.mxu0 %v2014
      %2196 = vmatpush.msra.mxu0 %v2013
      %2197 = vmatpush.msra.mxu0 %v2012
      %2198 = vmatpush.msra.mxu0 %v2011
      %2199 = vmatpush.msra.mxu0 %v2010
      %2200 = vmatpush.msra.mxu0 %v2009
      %2201 = vmatpush.msra.mxu0 %v2008
      %2202 = vmatpush.msra.mxu0 %v2007
      %2203 = vmatpush.msra.mxu0 %v2006
      %2204 = vmatmul.f32.gmra.mxu0 %v1895
      %v2205 = vpop.f32.mrf.mxu0
      %v2206 = vadd.f32 %v2141, %v2205
      %2207 = vmatmul.f32.gmra.mxu0 %v1901
      %v2208 = vpop.f32.mrf.mxu0
      %v2209 = vadd.f32 %v2144, %v2208
      %2210 = vmatmul.f32.gmra.mxu0 %v1907
      %v2211 = vpop.f32.mrf.mxu0
      %v2212 = vadd.f32 %v2147, %v2211
      %2213 = vmatmul.f32.gmra.mxu0 %v1913
      %v2214 = vpop.f32.mrf.mxu0
      %v2215 = vadd.f32 %v2150, %v2214
      %2216 = vmatmul.f32.gmra.mxu0 %v1919
      %v2217 = vpop.f32.mrf.mxu0
      %v2218 = vadd.f32 %v2153, %v2217
      %2219 = vmatmul.f32.gmra.mxu0 %v1925
      %v2220 = vpop.f32.mrf.mxu0
      %v2221 = vadd.f32 %v2156, %v2220
      %2222 = vmatmul.f32.gmra.mxu0 %v1931
      %v2223 = vpop.f32.mrf.mxu0
      %v2224 = vadd.f32 %v2159, %v2223
      %2225 = vmatmul.f32.gmra.mxu0 %v1937
      %v2226 = vpop.f32.mrf.mxu0
      %v2227 = vadd.f32 %v2162, %v2226
      %2228 = vmatmul.f32.gmra.mxu0 %v1943
      %v2229 = vpop.f32.mrf.mxu0
      %v2230 = vadd.f32 %v2165, %v2229
      %2231 = vmatmul.f32.gmra.mxu0 %v1949
      %v2232 = vpop.f32.mrf.mxu0
      %v2233 = vadd.f32 %v2168, %v2232
      %2234 = vmatmul.f32.gmra.mxu0 %v1955
      %v2235 = vpop.f32.mrf.mxu0
      %v2236 = vadd.f32 %v2171, %v2235
      %2237 = vmatmul.f32.gmra.mxu0 %v1961
      %v2238 = vpop.f32.mrf.mxu0
      %v2239 = vadd.f32 %v2174, %v2238
      %2240 = vmatmul.f32.gmra.mxu0 %v1967
      %v2241 = vpop.f32.mrf.mxu0
      %v2242 = vadd.f32 %v2177, %v2241
      %2243 = vmatmul.f32.gmra.mxu0 %v1973
      %v2244 = vpop.f32.mrf.mxu0
      %v2245 = vadd.f32 %v2180, %v2244
      %2246 = vmatmul.f32.gmra.mxu0 %v1979
      %v2247 = vpop.f32.mrf.mxu0
      %v2248 = vadd.f32 %v2183, %v2247
      %2249 = vmatmul.f32.gmra.mxu0 %v1985
      %v2250 = vpop.f32.mrf.mxu0
      %v2251 = vadd.f32 %v2186, %v2250
      %2252 = vdwg.mxu0
      %2253 = vmatpush.msra.mxu0 %v2037
      %2254 = vmatpush.msra.mxu0 %v2036
      %2255 = vmatpush.msra.mxu0 %v2035
      %2256 = vmatpush.msra.mxu0 %v2034
      %2257 = vmatpush.msra.mxu0 %v2033
      %2258 = vmatpush.msra.mxu0 %v2032
      %2259 = vmatpush.msra.mxu0 %v2031
      %2260 = vmatpush.msra.mxu0 %v2030
      %2261 = vmatpush.msra.mxu0 %v2029
      %2262 = vmatpush.msra.mxu0 %v2028
      %2263 = vmatpush.msra.mxu0 %v2027
      %2264 = vmatpush.msra.mxu0 %v2026
      %2265 = vmatpush.msra.mxu0 %v2025
      %2266 = vmatpush.msra.mxu0 %v2024
      %2267 = vmatpush.msra.mxu0 %v2023
      %2268 = vmatpush.msra.mxu0 %v2022
      %2269 = vmatmul.f32.gmra.mxu0 %v1896
      %v2270 = vpop.f32.mrf.mxu0
      %v2271 = vadd.f32 %v2206, %v2270
      %2272 = vmatmul.f32.gmra.mxu0 %v1902
      %v2273 = vpop.f32.mrf.mxu0
      %v2274 = vadd.f32 %v2209, %v2273
      %2275 = vmatmul.f32.gmra.mxu0 %v1908
      %v2276 = vpop.f32.mrf.mxu0
      %v2277 = vadd.f32 %v2212, %v2276
      %2278 = vmatmul.f32.gmra.mxu0 %v1914
      %v2279 = vpop.f32.mrf.mxu0
      %v2280 = vadd.f32 %v2215, %v2279
      %2281 = vmatmul.f32.gmra.mxu0 %v1920
      %v2282 = vpop.f32.mrf.mxu0
      %v2283 = vadd.f32 %v2218, %v2282
      %2284 = vmatmul.f32.gmra.mxu0 %v1926
      %v2285 = vpop.f32.mrf.mxu0
      %v2286 = vadd.f32 %v2221, %v2285
      %2287 = vmatmul.f32.gmra.mxu0 %v1932
      %v2288 = vpop.f32.mrf.mxu0
      %v2289 = vadd.f32 %v2224, %v2288
      %2290 = vmatmul.f32.gmra.mxu0 %v1938
      %v2291 = vpop.f32.mrf.mxu0
      %v2292 = vadd.f32 %v2227, %v2291
      %2293 = vmatmul.f32.gmra.mxu0 %v1944
      %v2294 = vpop.f32.mrf.mxu0
      %v2295 = vadd.f32 %v2230, %v2294
      %2296 = vmatmul.f32.gmra.mxu0 %v1950
      %v2297 = vpop.f32.mrf.mxu0
      %v2298 = vadd.f32 %v2233, %v2297
      %2299 = vmatmul.f32.gmra.mxu0 %v1956
      %v2300 = vpop.f32.mrf.mxu0
      %v2301 = vadd.f32 %v2236, %v2300
      %2302 = vmatmul.f32.gmra.mxu0 %v1962
      %v2303 = vpop.f32.mrf.mxu0
      %v2304 = vadd.f32 %v2239, %v2303
      %2305 = vmatmul.f32.gmra.mxu0 %v1968
      %v2306 = vpop.f32.mrf.mxu0
      %v2307 = vadd.f32 %v2242, %v2306
      %2308 = vmatmul.f32.gmra.mxu0 %v1974
      %v2309 = vpop.f32.mrf.mxu0
      %v2310 = vadd.f32 %v2245, %v2309
      %2311 = vmatmul.f32.gmra.mxu0 %v1980
      %v2312 = vpop.f32.mrf.mxu0
      %v2313 = vadd.f32 %v2248, %v2312
      %2314 = vmatmul.f32.gmra.mxu0 %v1986
      %v2315 = vpop.f32.mrf.mxu0
      %v2316 = vadd.f32 %v2251, %v2315
      %2317 = vdwg.mxu0
      %2318 = vmatpush.msra.mxu0 %v2053
      %2319 = vmatpush.msra.mxu0 %v2052
      %2320 = vmatpush.msra.mxu0 %v2051
      %2321 = vmatpush.msra.mxu0 %v2050
      %2322 = vmatpush.msra.mxu0 %v2049
      %2323 = vmatpush.msra.mxu0 %v2048
      %2324 = vmatpush.msra.mxu0 %v2047
      %2325 = vmatpush.msra.mxu0 %v2046
      %2326 = vmatpush.msra.mxu0 %v2045
      %2327 = vmatpush.msra.mxu0 %v2044
      %2328 = vmatpush.msra.mxu0 %v2043
      %2329 = vmatpush.msra.mxu0 %v2042
      %2330 = vmatpush.msra.mxu0 %v2041
      %2331 = vmatpush.msra.mxu0 %v2040
      %2332 = vmatpush.msra.mxu0 %v2039
      %2333 = vmatpush.msra.mxu0 %v2038
      %2334 = vmatmul.f32.gmra.mxu0 %v1897
      %v2335 = vpop.f32.mrf.mxu0
      %v2336 = vadd.f32 %v2271, %v2335
      %2337 = vmatmul.f32.gmra.mxu0 %v1903
      %v2338 = vpop.f32.mrf.mxu0
      %v2339 = vadd.f32 %v2274, %v2338
      %2340 = vmatmul.f32.gmra.mxu0 %v1909
      %v2341 = vpop.f32.mrf.mxu0
      %v2342 = vadd.f32 %v2277, %v2341
      %2343 = vmatmul.f32.gmra.mxu0 %v1915
      %v2344 = vpop.f32.mrf.mxu0
      %v2345 = vadd.f32 %v2280, %v2344
      %2346 = vmatmul.f32.gmra.mxu0 %v1921
      %v2347 = vpop.f32.mrf.mxu0
      %v2348 = vadd.f32 %v2283, %v2347
      %2349 = vmatmul.f32.gmra.mxu0 %v1927
      %v2350 = vpop.f32.mrf.mxu0
      %v2351 = vadd.f32 %v2286, %v2350
      %2352 = vmatmul.f32.gmra.mxu0 %v1933
      %v2353 = vpop.f32.mrf.mxu0
      %v2354 = vadd.f32 %v2289, %v2353
      %2355 = vmatmul.f32.gmra.mxu0 %v1939
      %v2356 = vpop.f32.mrf.mxu0
      %v2357 = vadd.f32 %v2292, %v2356
      %2358 = vmatmul.f32.gmra.mxu0 %v1945
      %v2359 = vpop.f32.mrf.mxu0
      %v2360 = vadd.f32 %v2295, %v2359
      %2361 = vmatmul.f32.gmra.mxu0 %v1951
      %v2362 = vpop.f32.mrf.mxu0
      %v2363 = vadd.f32 %v2298, %v2362
      %2364 = vmatmul.f32.gmra.mxu0 %v1957
      %v2365 = vpop.f32.mrf.mxu0
      %v2366 = vadd.f32 %v2301, %v2365
      %2367 = vmatmul.f32.gmra.mxu0 %v1963
      %v2368 = vpop.f32.mrf.mxu0
      %v2369 = vadd.f32 %v2304, %v2368
      %2370 = vmatmul.f32.gmra.mxu0 %v1969
      %v2371 = vpop.f32.mrf.mxu0
      %v2372 = vadd.f32 %v2307, %v2371
      %2373 = vmatmul.f32.gmra.mxu0 %v1975
      %v2374 = vpop.f32.mrf.mxu0
      %v2375 = vadd.f32 %v2310, %v2374
      %2376 = vmatmul.f32.gmra.mxu0 %v1981
      %v2377 = vpop.f32.mrf.mxu0
      %v2378 = vadd.f32 %v2313, %v2377
      %2379 = vmatmul.f32.gmra.mxu0 %v1987
      %v2380 = vpop.f32.mrf.mxu0
      %v2381 = vadd.f32 %v2316, %v2380
      %2382 = vdwg.mxu0
      %2383 = vmatpush.msra.mxu0 %v2069
      %2384 = vmatpush.msra.mxu0 %v2068
      %2385 = vmatpush.msra.mxu0 %v2067
      %2386 = vmatpush.msra.mxu0 %v2066
      %2387 = vmatpush.msra.mxu0 %v2065
      %2388 = vmatpush.msra.mxu0 %v2064
      %2389 = vmatpush.msra.mxu0 %v2063
      %2390 = vmatpush.msra.mxu0 %v2062
      %2391 = vmatpush.msra.mxu0 %v2061
      %2392 = vmatpush.msra.mxu0 %v2060
      %2393 = vmatpush.msra.mxu0 %v2059
      %2394 = vmatpush.msra.mxu0 %v2058
      %2395 = vmatpush.msra.mxu0 %v2057
      %2396 = vmatpush.msra.mxu0 %v2056
      %2397 = vmatpush.msra.mxu0 %v2055
      %2398 = vmatpush.msra.mxu0 %v2054
      %2399 = vmatmul.f32.gmra.mxu0 %v1898
      %v2400 = vpop.f32.mrf.mxu0
      %v2401 = vadd.f32 %v2336, %v2400
      %2402 = vmatmul.f32.gmra.mxu0 %v1904
      %v2403 = vpop.f32.mrf.mxu0
      %v2404 = vadd.f32 %v2339, %v2403
      %2405 = vmatmul.f32.gmra.mxu0 %v1910
      %v2406 = vpop.f32.mrf.mxu0
      %v2407 = vadd.f32 %v2342, %v2406
      %2408 = vmatmul.f32.gmra.mxu0 %v1916
      %v2409 = vpop.f32.mrf.mxu0
      %v2410 = vadd.f32 %v2345, %v2409
      %2411 = vmatmul.f32.gmra.mxu0 %v1922
      %v2412 = vpop.f32.mrf.mxu0
      %v2413 = vadd.f32 %v2348, %v2412
      %2414 = vmatmul.f32.gmra.mxu0 %v1928
      %v2415 = vpop.f32.mrf.mxu0
      %v2416 = vadd.f32 %v2351, %v2415
      %2417 = vmatmul.f32.gmra.mxu0 %v1934
      %v2418 = vpop.f32.mrf.mxu0
      %v2419 = vadd.f32 %v2354, %v2418
      %2420 = vmatmul.f32.gmra.mxu0 %v1940
      %v2421 = vpop.f32.mrf.mxu0
      %v2422 = vadd.f32 %v2357, %v2421
      %2423 = vmatmul.f32.gmra.mxu0 %v1946
      %v2424 = vpop.f32.mrf.mxu0
      %v2425 = vadd.f32 %v2360, %v2424
      %2426 = vmatmul.f32.gmra.mxu0 %v1952
      %v2427 = vpop.f32.mrf.mxu0
      %v2428 = vadd.f32 %v2363, %v2427
      %2429 = vmatmul.f32.gmra.mxu0 %v1958
      %v2430 = vpop.f32.mrf.mxu0
      %v2431 = vadd.f32 %v2366, %v2430
      %2432 = vmatmul.f32.gmra.mxu0 %v1964
      %v2433 = vpop.f32.mrf.mxu0
      %v2434 = vadd.f32 %v2369, %v2433
      %2435 = vmatmul.f32.gmra.mxu0 %v1970
      %v2436 = vpop.f32.mrf.mxu0
      %v2437 = vadd.f32 %v2372, %v2436
      %2438 = vmatmul.f32.gmra.mxu0 %v1976
      %v2439 = vpop.f32.mrf.mxu0
      %v2440 = vadd.f32 %v2375, %v2439
      %2441 = vmatmul.f32.gmra.mxu0 %v1982
      %v2442 = vpop.f32.mrf.mxu0
      %v2443 = vadd.f32 %v2378, %v2442
      %2444 = vmatmul.f32.gmra.mxu0 %v1988
      %v2445 = vpop.f32.mrf.mxu0
      %v2446 = vadd.f32 %v2381, %v2445
      %2447 = vdwg.mxu0
      %2448 = vmatpush.msra.mxu0 0.0
      %2449 = vmatpush.msra.mxu0 0.0
      %2450 = vmatpush.msra.mxu0 0.0
      %2451 = vmatpush.msra.mxu0 0.0
      %2452 = vmatpush.msra.mxu0 0.0
      %2453 = vmatpush.msra.mxu0 0.0
      %2454 = vmatpush.msra.mxu0 0.0
      %2455 = vmatpush.msra.mxu0 0.0
      %2456 = vmatpush.msra.mxu0 0.0
      %2457 = vmatpush.msra.mxu0 0.0
      %2458 = vmatpush.msra.mxu0 0.0
      %2459 = vmatpush.msra.mxu0 %v2074
      %2460 = vmatpush.msra.mxu0 %v2073
      %2461 = vmatpush.msra.mxu0 %v2072
      %2462 = vmatpush.msra.mxu0 %v2071
      %2463 = vmatpush.msra.mxu0 %v2070
      %2464 = vmatmul.f32.gmra.mxu0 %v2076
      %v2465 = vpop.f32.mrf.mxu0
      %v2466 = vadd.f32 %v2401, %v2465
      %2467 = vmatmul.f32.gmra.mxu0 %v2079
      %v2468 = vpop.f32.mrf.mxu0
      %v2469 = vadd.f32 %v2404, %v2468
      %2470 = vmatmul.f32.gmra.mxu0 %v2082
      %v2471 = vpop.f32.mrf.mxu0
      %v2472 = vadd.f32 %v2407, %v2471
      %2473 = vmatmul.f32.gmra.mxu0 %v2085
      %v2474 = vpop.f32.mrf.mxu0
      %v2475 = vadd.f32 %v2410, %v2474
      %2476 = vmatmul.f32.gmra.mxu0 %v2088
      %v2477 = vpop.f32.mrf.mxu0
      %v2478 = vadd.f32 %v2413, %v2477
      %2479 = vmatmul.f32.gmra.mxu0 %v2091
      %v2480 = vpop.f32.mrf.mxu0
      %v2481 = vadd.f32 %v2416, %v2480
      %2482 = vmatmul.f32.gmra.mxu0 %v2094
      %v2483 = vpop.f32.mrf.mxu0
      %v2484 = vadd.f32 %v2419, %v2483
      %2485 = vmatmul.f32.gmra.mxu0 %v2097
      %v2486 = vpop.f32.mrf.mxu0
      %v2487 = vadd.f32 %v2422, %v2486
      %2488 = vmatmul.f32.gmra.mxu0 %v2100
      %v2489 = vpop.f32.mrf.mxu0
      %v2490 = vadd.f32 %v2425, %v2489
      %2491 = vmatmul.f32.gmra.mxu0 %v2103
      %v2492 = vpop.f32.mrf.mxu0
      %v2493 = vadd.f32 %v2428, %v2492
      %2494 = vmatmul.f32.gmra.mxu0 %v2106
      %v2495 = vpop.f32.mrf.mxu0
      %v2496 = vadd.f32 %v2431, %v2495
      %2497 = vmatmul.f32.gmra.mxu0 %v2109
      %v2498 = vpop.f32.mrf.mxu0
      %v2499 = vadd.f32 %v2434, %v2498
      %2500 = vmatmul.f32.gmra.mxu0 %v2112
      %v2501 = vpop.f32.mrf.mxu0
      %v2502 = vadd.f32 %v2437, %v2501
      %2503 = vmatmul.f32.gmra.mxu0 %v2115
      %v2504 = vpop.f32.mrf.mxu0
      %v2505 = vadd.f32 %v2440, %v2504
      %2506 = vmatmul.f32.gmra.mxu0 %v2118
      %v2507 = vpop.f32.mrf.mxu0
      %v2508 = vadd.f32 %v2443, %v2507
      %2509 = vmatmul.f32.gmra.mxu0 %v2121
      %v2510 = vpop.f32.mrf.mxu0
      %v2511 = vadd.f32 %v2446, %v2510
      %2512 = vdwg.mxu0
      %v2513 = vadd.f32 %v1847, %v2466
      %v2514 = vadd.f32 %v1850, %v2469
      %v2515 = vadd.f32 %v1853, %v2472
      %v2516 = vadd.f32 %v1856, %v2475
      %v2517 = vadd.f32 %v1859, %v2478
      %v2518 = vadd.f32 %v1862, %v2481
      %v2519 = vadd.f32 %v1865, %v2484
      %v2520 = vadd.f32 %v1868, %v2487
      %v2521 = vadd.f32 %v1871, %v2490
      %v2522 = vadd.f32 %v1874, %v2493
      %v2523 = vadd.f32 %v1877, %v2496
      %v2524 = vadd.f32 %v1880, %v2499
      %v2525 = vadd.f32 %v1883, %v2502
      %v2526 = vadd.f32 %v1886, %v2505
      %v2527 = vadd.f32 %v1889, %v2508
      %v2528 = vadd.f32 %v1892, %v2511
      %v2529 = vld [vmem:[%s647] sm:$0xff]
      %v2530 = vld [vmem:[%s647 + $0x8] sm:$0xff]
      %v2531 = vld [vmem:[%s647 + $0x10] sm:$0xff]
      %v2532 = vld [vmem:[%s647 + $0x18] sm:$0xff]
      %v2533 = vld [vmem:[%s647 + $0x20] sm:$0xff]
      %v2534 = vld [vmem:[%s647 + $0x28] sm:$0xff]
      %v2535 = vld [vmem:[%s647 + $0x30] sm:$0xff]
      %v2536 = vld [vmem:[%s647 + $0x38] sm:$0xff]
      %v2537 = vld [vmem:[%s647 + $0x40] sm:$0xff]
      %v2538 = vld [vmem:[%s647 + $0x48] sm:$0xff]
      %v2539 = vld [vmem:[%s647 + $0x50] sm:$0xff]
      %v2540 = vld [vmem:[%s647 + $0x58] sm:$0xff]
      %v2541 = vld [vmem:[%s647 + $0x60] sm:$0xff]
      %v2542 = vld [vmem:[%s647 + $0x68] sm:$0xff]
      %v2543 = vld [vmem:[%s647 + $0x70] sm:$0xff]
      %v2544 = vld [vmem:[%s647 + $0x78] sm:$0xff]
      %v2545 = vld [vmem:[%s647 + $0x80] sm:$0xff]
      %v2546 = vld [vmem:[%s647 + $0x88] sm:$0xff]
      %v2547 = vld [vmem:[%s647 + $0x90] sm:$0xff]
      %v2548 = vld [vmem:[%s647 + $0x98] sm:$0xff]
      %v2549 = vld [vmem:[%s647 + $0xa0] sm:$0xff]
      %v2550 = vld [vmem:[%s647 + $0xa8] sm:$0xff]
      %v2551 = vld [vmem:[%s647 + $0xb0] sm:$0xff]
      %v2552 = vld [vmem:[%s647 + $0xb8] sm:$0xff]
      %v2553 = vld [vmem:[%s647 + $0xc0] sm:$0xff]
      %v2554 = vld [vmem:[%s647 + $0xc8] sm:$0xff]
      %v2555 = vld [vmem:[%s647 + $0xd0] sm:$0xff]
      %v2556 = vld [vmem:[%s647 + $0xd8] sm:$0xff]
      %v2557 = vld [vmem:[%s647 + $0xe0] sm:$0xff]
      %v2558 = vld [vmem:[%s647 + $0xe8] sm:$0xff]
      %v2559 = vld [vmem:[%s647 + $0xf0] sm:$0xff]
      %v2560 = vld [vmem:[%s647 + $0xf8] sm:$0xff]
      %v2561 = vld [vmem:[%s647 + $0x100] sm:$0xff]
      %v2562 = vld [vmem:[%s647 + $0x108] sm:$0xff]
      %v2563 = vld [vmem:[%s647 + $0x110] sm:$0xff]
      %v2564 = vld [vmem:[%s647 + $0x118] sm:$0xff]
      %v2565 = vld [vmem:[%s647 + $0x120] sm:$0xff]
      %v2566 = vld [vmem:[%s647 + $0x128] sm:$0xff]
      %v2567 = vld [vmem:[%s647 + $0x130] sm:$0xff]
      %v2568 = vld [vmem:[%s647 + $0x138] sm:$0xff]
      %v2569 = vld [vmem:[%s647 + $0x140] sm:$0xff]
      %v2570 = vld [vmem:[%s647 + $0x148] sm:$0xff]
      %v2571 = vld [vmem:[%s647 + $0x150] sm:$0xff]
      %v2572 = vld [vmem:[%s647 + $0x158] sm:$0xff]
      %v2573 = vld [vmem:[%s647 + $0x160] sm:$0xff]
      %v2574 = vld [vmem:[%s647 + $0x168] sm:$0xff]
      %v2575 = vld [vmem:[%s647 + $0x170] sm:$0xff]
      %v2576 = vld [vmem:[%s647 + $0x178] sm:$0xff]
      %v2577 = vld [vmem:[%s647 + $0x180] sm:$0xff]
      %v2578 = vld [vmem:[%s647 + $0x188] sm:$0xff]
      %v2579 = vld [vmem:[%s647 + $0x190] sm:$0xff]
      %v2580 = vld [vmem:[%s647 + $0x198] sm:$0xff]
      %v2581 = vld [vmem:[%s647 + $0x1a0] sm:$0xff]
      %v2582 = vld [vmem:[%s647 + $0x1a8] sm:$0xff]
      %v2583 = vld [vmem:[%s647 + $0x1b0] sm:$0xff]
      %v2584 = vld [vmem:[%s647 + $0x1b8] sm:$0xff]
      %v2585 = vld [vmem:[%s647 + $0x1c0] sm:$0xff]
      %v2586 = vld [vmem:[%s647 + $0x1c8] sm:$0xff]
      %v2587 = vld [vmem:[%s647 + $0x1d0] sm:$0xff]
      %v2588 = vld [vmem:[%s647 + $0x1d8] sm:$0xff]
      %v2589 = vld [vmem:[%s647 + $0x1e0] sm:$0xff]
      %v2590 = vld [vmem:[%s647 + $0x1e8] sm:$0xff]
      %v2591 = vld [vmem:[%s647 + $0x1f0] sm:$0xff]
      %v2592 = vld [vmem:[%s647 + $0x1f8] sm:$0xff]
      %v2593 = vld [vmem:[%s647 + $0x200] sm:$0xff]
      %v2594 = vld [vmem:[%s647 + $0x208] sm:$0xff]
      %v2595 = vld [vmem:[%s647 + $0x210] sm:$0xff]
      %v2596 = vld [vmem:[%s647 + $0x218] sm:$0xff]
      %v2597 = vld [vmem:[%s647 + $0x220] sm:$0xff]
      %v2598 = vld [vmem:[%s647 + $0x228] sm:$0xff]
      %v2599 = vld [vmem:[%s647 + $0x230] sm:$0xff]
      %v2600 = vld [vmem:[%s647 + $0x238] sm:$0xff]
      %v2601 = vld [vmem:[%s647 + $0x240] sm:$0xff]
      %v2602 = vld [vmem:[%s647 + $0x248] sm:$0xff]
      %v2603 = vld [vmem:[%s647 + $0x250] sm:$0xff]
      %v2604 = vld [vmem:[%s647 + $0x258] sm:$0xff]
      %v2605 = vld [vmem:[%s647 + $0x260] sm:$0xff]
      %v2606 = vld [vmem:[%s647 + $0x268] sm:$0xff]
      %v2607 = vld [vmem:[%s647 + $0x270] sm:$0xff]
      %v2608 = vld [vmem:[%s647 + $0x278] sm:$0xff]
      %v2609 = vld [vmem:[%s647 + $0x280] sm:$0xff]
      %v2610 = vld [vmem:[%s647 + $0x288] sm:$0xff]
      %v2611 = vld [vmem:[%s647 + $0x290] sm:$0xff]
      %v2612 = vld [vmem:[%s647 + $0x298] sm:$0xff]
      %v2613 = vld [vmem:[%s647 + $0x2a0] sm:$0xff]
      %v2614 = vld [vmem:[%s647 + $0x2a8] sm:$0xff]
      %v2615 = vld [vmem:[%s647 + $0x2b0] sm:$0xff]
      %v2616 = vld [vmem:[%s647 + $0x2b8] sm:$0xff]
      %v2617 = vld [vmem:[%s647 + $0x2c0] sm:$0xff]
      %v2618 = vld [vmem:[%s647 + $0x2c8] sm:$0xff]
      %v2619 = vld [vmem:[%s647 + $0x2d0] sm:$0xff]
      %v2620 = vld [vmem:[%s647 + $0x2d8] sm:$0xff]
      %v2621 = vld [vmem:[%s647 + $0x2e0] sm:$0xff]
      %v2622 = vld [vmem:[%s647 + $0x2e8] sm:$0xff]
      %v2623 = vld [vmem:[%s647 + $0x2f0] sm:$0xff]
      %v2624 = vld [vmem:[%s647 + $0x2f8] sm:$0xff]
      %v2625 = vld [vmem:[%s9] sm:$0xff]
      %v2626 = vld [vmem:[%s9 + $0x8] sm:$0xff]
      %v2627 = vld [vmem:[%s9 + $0x10] sm:$0xff]
      %v2628 = vld [vmem:[%s9 + $0x18] sm:$0xff]
      %v2629 = vld [vmem:[%s9 + $0x20] sm:$0xff]
      %v2630 = vld [vmem:[%s9 + $0x28] sm:$0xff]
      %v2631 = vld [vmem:[%s9 + $0x30] sm:$0xff]
      %v2632 = vld [vmem:[%s9 + $0x38] sm:$0xff]
      %v2633 = vld [vmem:[%s9 + $0x40] sm:$0xff]
      %v2634 = vld [vmem:[%s9 + $0x48] sm:$0xff]
      %v2635 = vld [vmem:[%s9 + $0x50] sm:$0xff]
      %v2636 = vld [vmem:[%s9 + $0x58] sm:$0xff]
      %v2637 = vld [vmem:[%s9 + $0x60] sm:$0xff]
      %v2638 = vld [vmem:[%s9 + $0x68] sm:$0xff]
      %v2639 = vld [vmem:[%s9 + $0x70] sm:$0xff]
      %v2640 = vld [vmem:[%s9 + $0x78] sm:$0xff]
      %v2641 = vld [vmem:[%s9 + $0x80] sm:$0xff]
      %v2642 = vld [vmem:[%s9 + $0x88] sm:$0xff]
      %v2643 = vld [vmem:[%s9 + $0x90] sm:$0xff]
      %v2644 = vld [vmem:[%s9 + $0x98] sm:$0xff]
      %v2645 = vld [vmem:[%s9 + $0xa0] sm:$0xff]
      %v2646 = vld [vmem:[%s9 + $0xa8] sm:$0xff]
      %v2647 = vld [vmem:[%s9 + $0xb0] sm:$0xff]
      %v2648 = vld [vmem:[%s9 + $0xb8] sm:$0xff]
      %v2649 = vld [vmem:[%s9 + $0xc0] sm:$0xff]
      %v2650 = vld [vmem:[%s9 + $0xc8] sm:$0xff]
      %v2651 = vld [vmem:[%s9 + $0xd0] sm:$0xff]
      %v2652 = vld [vmem:[%s9 + $0xd8] sm:$0xff]
      %v2653 = vld [vmem:[%s9 + $0xe0] sm:$0xff]
      %v2654 = vld [vmem:[%s9 + $0xe8] sm:$0xff]
      %v2655 = vld [vmem:[%s9 + $0xf0] sm:$0xff]
      %v2656 = vld [vmem:[%s9 + $0xf8] sm:$0xff]
      %v2657 = vld [vmem:[%s9 + $0x100] sm:$0xff]
      %v2658 = vld [vmem:[%s9 + $0x108] sm:$0xff]
      %v2659 = vld [vmem:[%s9 + $0x110] sm:$0xff]
      %v2660 = vld [vmem:[%s9 + $0x118] sm:$0xff]
      %v2661 = vld [vmem:[%s9 + $0x120] sm:$0xff]
      %v2662 = vld [vmem:[%s9 + $0x128] sm:$0xff]
      %v2663 = vld [vmem:[%s9 + $0x130] sm:$0xff]
      %v2664 = vld [vmem:[%s9 + $0x138] sm:$0xff]
      %v2665 = vld [vmem:[%s9 + $0x140] sm:$0xff]
      %v2666 = vld [vmem:[%s9 + $0x148] sm:$0xff]
      %v2667 = vld [vmem:[%s9 + $0x150] sm:$0xff]
      %v2668 = vld [vmem:[%s9 + $0x158] sm:$0xff]
      %v2669 = vld [vmem:[%s9 + $0x160] sm:$0xff]
      %v2670 = vld [vmem:[%s9 + $0x168] sm:$0xff]
      %v2671 = vld [vmem:[%s9 + $0x170] sm:$0xff]
      %v2672 = vld [vmem:[%s9 + $0x178] sm:$0xff]
      %v2673 = vld [vmem:[%s9 + $0x180] sm:$0xff]
      %v2674 = vld [vmem:[%s9 + $0x188] sm:$0xff]
      %v2675 = vld [vmem:[%s9 + $0x190] sm:$0xff]
      %v2676 = vld [vmem:[%s9 + $0x198] sm:$0xff]
      %v2677 = vld [vmem:[%s9 + $0x1a0] sm:$0xff]
      %v2678 = vld [vmem:[%s9 + $0x1a8] sm:$0xff]
      %v2679 = vld [vmem:[%s9 + $0x1b0] sm:$0xff]
      %v2680 = vld [vmem:[%s9 + $0x1b8] sm:$0xff]
      %v2681 = vld [vmem:[%s9 + $0x1c0] sm:$0xff]
      %v2682 = vld [vmem:[%s9 + $0x1c8] sm:$0xff]
      %v2683 = vld [vmem:[%s9 + $0x1d0] sm:$0xff]
      %v2684 = vld [vmem:[%s9 + $0x1d8] sm:$0xff]
      %v2685 = vld [vmem:[%s9 + $0x1e0] sm:$0xff]
      %v2686 = vld [vmem:[%s9 + $0x1e8] sm:$0xff]
      %v2687 = vld [vmem:[%s9 + $0x1f0] sm:$0xff]
      %v2688 = vld [vmem:[%s9 + $0x1f8] sm:$0xff]
      %v2689 = vld [vmem:[%s9 + $0x200] sm:$0xff]
      %v2690 = vld [vmem:[%s9 + $0x208] sm:$0xff]
      %v2691 = vld [vmem:[%s9 + $0x210] sm:$0xff]
      %v2692 = vld [vmem:[%s9 + $0x218] sm:$0xff]
      %v2693 = vld [vmem:[%s9 + $0x220] sm:$0xff]
      %v2694 = vld [vmem:[%s9 + $0x228] sm:$0xff]
      %v2695 = vld [vmem:[%s9 + $0x230] sm:$0xff]
      %v2696 = vld [vmem:[%s9 + $0x238] sm:$0xff]
      %v2697 = vld [vmem:[%s9 + $0x240] sm:$0xff]
      %v2698 = vld [vmem:[%s9 + $0x248] sm:$0xff]
      %v2699 = vld [vmem:[%s9 + $0x250] sm:$0xff]
      %v2700 = vld [vmem:[%s9 + $0x258] sm:$0xff]
      %v2701 = vld [vmem:[%s9 + $0x260] sm:$0xff]
      %v2702 = vld [vmem:[%s9 + $0x268] sm:$0xff]
      %v2703 = vld [vmem:[%s9 + $0x270] sm:$0xff]
      %v2704 = vld [vmem:[%s9 + $0x278] sm:$0xff]
      %v2705 = vld [vmem:[%s9 + $0x280] sm:$0xff]
      %v2706 = vld [vmem:[%s9 + $0x288] sm:$0xff]
      %v2707 = vld [vmem:[%s9 + $0x290] sm:$0xff]
      %v2708 = vld [vmem:[%s9 + $0x298] sm:$0xff]
      %v2709 = vld [vmem:[%s9 + $0x2a0] sm:$0xff]
      %v2711 = vsel %vm1017, %v2534, 0
      %v2714 = vsel %vm1017, %v2540, 0
      %v2717 = vsel %vm1017, %v2546, 0
      %v2720 = vsel %vm1017, %v2552, 0
      %v2723 = vsel %vm1017, %v2558, 0
      %v2726 = vsel %vm1017, %v2564, 0
      %v2729 = vsel %vm1017, %v2570, 0
      %v2732 = vsel %vm1017, %v2576, 0
      %v2735 = vsel %vm1017, %v2582, 0
      %v2738 = vsel %vm1017, %v2588, 0
      %v2741 = vsel %vm1017, %v2594, 0
      %v2744 = vsel %vm1017, %v2600, 0
      %v2747 = vsel %vm1017, %v2606, 0
      %v2750 = vsel %vm1017, %v2612, 0
      %v2753 = vsel %vm1017, %v2618, 0
      %v2756 = vsel %vm1017, %v2624, 0
      %2758 = vmatpush.msra.mxu0 %v2640
      %2759 = vmatpush.msra.mxu0 %v2639
      %2760 = vmatpush.msra.mxu0 %v2638
      %2761 = vmatpush.msra.mxu0 %v2637
      %2762 = vmatpush.msra.mxu0 %v2636
      %2763 = vmatpush.msra.mxu0 %v2635
      %2764 = vmatpush.msra.mxu0 %v2634
      %2765 = vmatpush.msra.mxu0 %v2633
      %2766 = vmatpush.msra.mxu0 %v2632
      %2767 = vmatpush.msra.mxu0 %v2631
      %2768 = vmatpush.msra.mxu0 %v2630
      %2769 = vmatpush.msra.mxu0 %v2629
      %2770 = vmatpush.msra.mxu0 %v2628
      %2771 = vmatpush.msra.mxu0 %v2627
      %2772 = vmatpush.msra.mxu0 %v2626
      %2773 = vmatpush.msra.mxu0 %v2625
      %2774 = vmatmul.f32.gmra.mxu0 %v2529
      %v2775 = vpop.f32.mrf.mxu0
      %v2776 = vadd.f32 0.0, %v2775
      %2777 = vmatmul.f32.gmra.mxu0 %v2535
      %v2778 = vpop.f32.mrf.mxu0
      %v2779 = vadd.f32 0.0, %v2778
      %2780 = vmatmul.f32.gmra.mxu0 %v2541
      %v2781 = vpop.f32.mrf.mxu0
      %v2782 = vadd.f32 0.0, %v2781
      %2783 = vmatmul.f32.gmra.mxu0 %v2547
      %v2784 = vpop.f32.mrf.mxu0
      %v2785 = vadd.f32 0.0, %v2784
      %2786 = vmatmul.f32.gmra.mxu0 %v2553
      %v2787 = vpop.f32.mrf.mxu0
      %v2788 = vadd.f32 0.0, %v2787
      %2789 = vmatmul.f32.gmra.mxu0 %v2559
      %v2790 = vpop.f32.mrf.mxu0
      %v2791 = vadd.f32 0.0, %v2790
      %2792 = vmatmul.f32.gmra.mxu0 %v2565
      %v2793 = vpop.f32.mrf.mxu0
      %v2794 = vadd.f32 0.0, %v2793
      %2795 = vmatmul.f32.gmra.mxu0 %v2571
      %v2796 = vpop.f32.mrf.mxu0
      %v2797 = vadd.f32 0.0, %v2796
      %2798 = vmatmul.f32.gmra.mxu0 %v2577
      %v2799 = vpop.f32.mrf.mxu0
      %v2800 = vadd.f32 0.0, %v2799
      %2801 = vmatmul.f32.gmra.mxu0 %v2583
      %v2802 = vpop.f32.mrf.mxu0
      %v2803 = vadd.f32 0.0, %v2802
      %2804 = vmatmul.f32.gmra.mxu0 %v2589
      %v2805 = vpop.f32.mrf.mxu0
      %v2806 = vadd.f32 0.0, %v2805
      %2807 = vmatmul.f32.gmra.mxu0 %v2595
      %v2808 = vpop.f32.mrf.mxu0
      %v2809 = vadd.f32 0.0, %v2808
      %2810 = vmatmul.f32.gmra.mxu0 %v2601
      %v2811 = vpop.f32.mrf.mxu0
      %v2812 = vadd.f32 0.0, %v2811
      %2813 = vmatmul.f32.gmra.mxu0 %v2607
      %v2814 = vpop.f32.mrf.mxu0
      %v2815 = vadd.f32 0.0, %v2814
      %2816 = vmatmul.f32.gmra.mxu0 %v2613
      %v2817 = vpop.f32.mrf.mxu0
      %v2818 = vadd.f32 0.0, %v2817
      %2819 = vmatmul.f32.gmra.mxu0 %v2619
      %v2820 = vpop.f32.mrf.mxu0
      %v2821 = vadd.f32 0.0, %v2820
      %2822 = vdwg.mxu0
      %2823 = vmatpush.msra.mxu0 %v2656
      %2824 = vmatpush.msra.mxu0 %v2655
      %2825 = vmatpush.msra.mxu0 %v2654
      %2826 = vmatpush.msra.mxu0 %v2653
      %2827 = vmatpush.msra.mxu0 %v2652
      %2828 = vmatpush.msra.mxu0 %v2651
      %2829 = vmatpush.msra.mxu0 %v2650
      %2830 = vmatpush.msra.mxu0 %v2649
      %2831 = vmatpush.msra.mxu0 %v2648
      %2832 = vmatpush.msra.mxu0 %v2647
      %2833 = vmatpush.msra.mxu0 %v2646
      %2834 = vmatpush.msra.mxu0 %v2645
      %2835 = vmatpush.msra.mxu0 %v2644
      %2836 = vmatpush.msra.mxu0 %v2643
      %2837 = vmatpush.msra.mxu0 %v2642
      %2838 = vmatpush.msra.mxu0 %v2641
      %2839 = vmatmul.f32.gmra.mxu0 %v2530
      %v2840 = vpop.f32.mrf.mxu0
      %v2841 = vadd.f32 %v2776, %v2840
      %2842 = vmatmul.f32.gmra.mxu0 %v2536
      %v2843 = vpop.f32.mrf.mxu0
      %v2844 = vadd.f32 %v2779, %v2843
      %2845 = vmatmul.f32.gmra.mxu0 %v2542
      %v2846 = vpop.f32.mrf.mxu0
      %v2847 = vadd.f32 %v2782, %v2846
      %2848 = vmatmul.f32.gmra.mxu0 %v2548
      %v2849 = vpop.f32.mrf.mxu0
      %v2850 = vadd.f32 %v2785, %v2849
      %2851 = vmatmul.f32.gmra.mxu0 %v2554
      %v2852 = vpop.f32.mrf.mxu0
      %v2853 = vadd.f32 %v2788, %v2852
      %2854 = vmatmul.f32.gmra.mxu0 %v2560
      %v2855 = vpop.f32.mrf.mxu0
      %v2856 = vadd.f32 %v2791, %v2855
      %2857 = vmatmul.f32.gmra.mxu0 %v2566
      %v2858 = vpop.f32.mrf.mxu0
      %v2859 = vadd.f32 %v2794, %v2858
      %2860 = vmatmul.f32.gmra.mxu0 %v2572
      %v2861 = vpop.f32.mrf.mxu0
      %v2862 = vadd.f32 %v2797, %v2861
      %2863 = vmatmul.f32.gmra.mxu0 %v2578
      %v2864 = vpop.f32.mrf.mxu0
      %v2865 = vadd.f32 %v2800, %v2864
      %2866 = vmatmul.f32.gmra.mxu0 %v2584
      %v2867 = vpop.f32.mrf.mxu0
      %v2868 = vadd.f32 %v2803, %v2867
      %2869 = vmatmul.f32.gmra.mxu0 %v2590
      %v2870 = vpop.f32.mrf.mxu0
      %v2871 = vadd.f32 %v2806, %v2870
      %2872 = vmatmul.f32.gmra.mxu0 %v2596
      %v2873 = vpop.f32.mrf.mxu0
      %v2874 = vadd.f32 %v2809, %v2873
      %2875 = vmatmul.f32.gmra.mxu0 %v2602
      %v2876 = vpop.f32.mrf.mxu0
      %v2877 = vadd.f32 %v2812, %v2876
      %2878 = vmatmul.f32.gmra.mxu0 %v2608
      %v2879 = vpop.f32.mrf.mxu0
      %v2880 = vadd.f32 %v2815, %v2879
      %2881 = vmatmul.f32.gmra.mxu0 %v2614
      %v2882 = vpop.f32.mrf.mxu0
      %v2883 = vadd.f32 %v2818, %v2882
      %2884 = vmatmul.f32.gmra.mxu0 %v2620
      %v2885 = vpop.f32.mrf.mxu0
      %v2886 = vadd.f32 %v2821, %v2885
      %2887 = vdwg.mxu0
      %2888 = vmatpush.msra.mxu0 %v2672
      %2889 = vmatpush.msra.mxu0 %v2671
      %2890 = vmatpush.msra.mxu0 %v2670
      %2891 = vmatpush.msra.mxu0 %v2669
      %2892 = vmatpush.msra.mxu0 %v2668
      %2893 = vmatpush.msra.mxu0 %v2667
      %2894 = vmatpush.msra.mxu0 %v2666
      %2895 = vmatpush.msra.mxu0 %v2665
      %2896 = vmatpush.msra.mxu0 %v2664
      %2897 = vmatpush.msra.mxu0 %v2663
      %2898 = vmatpush.msra.mxu0 %v2662
      %2899 = vmatpush.msra.mxu0 %v2661
      %2900 = vmatpush.msra.mxu0 %v2660
      %2901 = vmatpush.msra.mxu0 %v2659
      %2902 = vmatpush.msra.mxu0 %v2658
      %2903 = vmatpush.msra.mxu0 %v2657
      %2904 = vmatmul.f32.gmra.mxu0 %v2531
      %v2905 = vpop.f32.mrf.mxu0
      %v2906 = vadd.f32 %v2841, %v2905
      %2907 = vmatmul.f32.gmra.mxu0 %v2537
      %v2908 = vpop.f32.mrf.mxu0
      %v2909 = vadd.f32 %v2844, %v2908
      %2910 = vmatmul.f32.gmra.mxu0 %v2543
      %v2911 = vpop.f32.mrf.mxu0
      %v2912 = vadd.f32 %v2847, %v2911
      %2913 = vmatmul.f32.gmra.mxu0 %v2549
      %v2914 = vpop.f32.mrf.mxu0
      %v2915 = vadd.f32 %v2850, %v2914
      %2916 = vmatmul.f32.gmra.mxu0 %v2555
      %v2917 = vpop.f32.mrf.mxu0
      %v2918 = vadd.f32 %v2853, %v2917
      %2919 = vmatmul.f32.gmra.mxu0 %v2561
      %v2920 = vpop.f32.mrf.mxu0
      %v2921 = vadd.f32 %v2856, %v2920
      %2922 = vmatmul.f32.gmra.mxu0 %v2567
      %v2923 = vpop.f32.mrf.mxu0
      %v2924 = vadd.f32 %v2859, %v2923
      %2925 = vmatmul.f32.gmra.mxu0 %v2573
      %v2926 = vpop.f32.mrf.mxu0
      %v2927 = vadd.f32 %v2862, %v2926
      %2928 = vmatmul.f32.gmra.mxu0 %v2579
      %v2929 = vpop.f32.mrf.mxu0
      %v2930 = vadd.f32 %v2865, %v2929
      %2931 = vmatmul.f32.gmra.mxu0 %v2585
      %v2932 = vpop.f32.mrf.mxu0
      %v2933 = vadd.f32 %v2868, %v2932
      %2934 = vmatmul.f32.gmra.mxu0 %v2591
      %v2935 = vpop.f32.mrf.mxu0
      %v2936 = vadd.f32 %v2871, %v2935
      %2937 = vmatmul.f32.gmra.mxu0 %v2597
      %v2938 = vpop.f32.mrf.mxu0
      %v2939 = vadd.f32 %v2874, %v2938
      %2940 = vmatmul.f32.gmra.mxu0 %v2603
      %v2941 = vpop.f32.mrf.mxu0
      %v2942 = vadd.f32 %v2877, %v2941
      %2943 = vmatmul.f32.gmra.mxu0 %v2609
      %v2944 = vpop.f32.mrf.mxu0
      %v2945 = vadd.f32 %v2880, %v2944
      %2946 = vmatmul.f32.gmra.mxu0 %v2615
      %v2947 = vpop.f32.mrf.mxu0
      %v2948 = vadd.f32 %v2883, %v2947
      %2949 = vmatmul.f32.gmra.mxu0 %v2621
      %v2950 = vpop.f32.mrf.mxu0
      %v2951 = vadd.f32 %v2886, %v2950
      %2952 = vdwg.mxu0
      %2953 = vmatpush.msra.mxu0 %v2688
      %2954 = vmatpush.msra.mxu0 %v2687
      %2955 = vmatpush.msra.mxu0 %v2686
      %2956 = vmatpush.msra.mxu0 %v2685
      %2957 = vmatpush.msra.mxu0 %v2684
      %2958 = vmatpush.msra.mxu0 %v2683
      %2959 = vmatpush.msra.mxu0 %v2682
      %2960 = vmatpush.msra.mxu0 %v2681
      %2961 = vmatpush.msra.mxu0 %v2680
      %2962 = vmatpush.msra.mxu0 %v2679
      %2963 = vmatpush.msra.mxu0 %v2678
      %2964 = vmatpush.msra.mxu0 %v2677
      %2965 = vmatpush.msra.mxu0 %v2676
      %2966 = vmatpush.msra.mxu0 %v2675
      %2967 = vmatpush.msra.mxu0 %v2674
      %2968 = vmatpush.msra.mxu0 %v2673
      %2969 = vmatmul.f32.gmra.mxu0 %v2532
      %v2970 = vpop.f32.mrf.mxu0
      %v2971 = vadd.f32 %v2906, %v2970
      %2972 = vmatmul.f32.gmra.mxu0 %v2538
      %v2973 = vpop.f32.mrf.mxu0
      %v2974 = vadd.f32 %v2909, %v2973
      %2975 = vmatmul.f32.gmra.mxu0 %v2544
      %v2976 = vpop.f32.mrf.mxu0
      %v2977 = vadd.f32 %v2912, %v2976
      %2978 = vmatmul.f32.gmra.mxu0 %v2550
      %v2979 = vpop.f32.mrf.mxu0
      %v2980 = vadd.f32 %v2915, %v2979
      %2981 = vmatmul.f32.gmra.mxu0 %v2556
      %v2982 = vpop.f32.mrf.mxu0
      %v2983 = vadd.f32 %v2918, %v2982
      %2984 = vmatmul.f32.gmra.mxu0 %v2562
      %v2985 = vpop.f32.mrf.mxu0
      %v2986 = vadd.f32 %v2921, %v2985
      %2987 = vmatmul.f32.gmra.mxu0 %v2568
      %v2988 = vpop.f32.mrf.mxu0
      %v2989 = vadd.f32 %v2924, %v2988
      %2990 = vmatmul.f32.gmra.mxu0 %v2574
      %v2991 = vpop.f32.mrf.mxu0
      %v2992 = vadd.f32 %v2927, %v2991
      %2993 = vmatmul.f32.gmra.mxu0 %v2580
      %v2994 = vpop.f32.mrf.mxu0
      %v2995 = vadd.f32 %v2930, %v2994
      %2996 = vmatmul.f32.gmra.mxu0 %v2586
      %v2997 = vpop.f32.mrf.mxu0
      %v2998 = vadd.f32 %v2933, %v2997
      %2999 = vmatmul.f32.gmra.mxu0 %v2592
      %v3000 = vpop.f32.mrf.mxu0
      %v3001 = vadd.f32 %v2936, %v3000
      %3002 = vmatmul.f32.gmra.mxu0 %v2598
      %v3003 = vpop.f32.mrf.mxu0
      %v3004 = vadd.f32 %v2939, %v3003
      %3005 = vmatmul.f32.gmra.mxu0 %v2604
      %v3006 = vpop.f32.mrf.mxu0
      %v3007 = vadd.f32 %v2942, %v3006
      %3008 = vmatmul.f32.gmra.mxu0 %v2610
      %v3009 = vpop.f32.mrf.mxu0
      %v3010 = vadd.f32 %v2945, %v3009
      %3011 = vmatmul.f32.gmra.mxu0 %v2616
      %v3012 = vpop.f32.mrf.mxu0
      %v3013 = vadd.f32 %v2948, %v3012
      %3014 = vmatmul.f32.gmra.mxu0 %v2622
      %v3015 = vpop.f32.mrf.mxu0
      %v3016 = vadd.f32 %v2951, %v3015
      %3017 = vdwg.mxu0
      %3018 = vmatpush.msra.mxu0 %v2704
      %3019 = vmatpush.msra.mxu0 %v2703
      %3020 = vmatpush.msra.mxu0 %v2702
      %3021 = vmatpush.msra.mxu0 %v2701
      %3022 = vmatpush.msra.mxu0 %v2700
      %3023 = vmatpush.msra.mxu0 %v2699
      %3024 = vmatpush.msra.mxu0 %v2698
      %3025 = vmatpush.msra.mxu0 %v2697
      %3026 = vmatpush.msra.mxu0 %v2696
      %3027 = vmatpush.msra.mxu0 %v2695
      %3028 = vmatpush.msra.mxu0 %v2694
      %3029 = vmatpush.msra.mxu0 %v2693
      %3030 = vmatpush.msra.mxu0 %v2692
      %3031 = vmatpush.msra.mxu0 %v2691
      %3032 = vmatpush.msra.mxu0 %v2690
      %3033 = vmatpush.msra.mxu0 %v2689
      %3034 = vmatmul.f32.gmra.mxu0 %v2533
      %v3035 = vpop.f32.mrf.mxu0
      %v3036 = vadd.f32 %v2971, %v3035
      %3037 = vmatmul.f32.gmra.mxu0 %v2539
      %v3038 = vpop.f32.mrf.mxu0
      %v3039 = vadd.f32 %v2974, %v3038
      %3040 = vmatmul.f32.gmra.mxu0 %v2545
      %v3041 = vpop.f32.mrf.mxu0
      %v3042 = vadd.f32 %v2977, %v3041
      %3043 = vmatmul.f32.gmra.mxu0 %v2551
      %v3044 = vpop.f32.mrf.mxu0
      %v3045 = vadd.f32 %v2980, %v3044
      %3046 = vmatmul.f32.gmra.mxu0 %v2557
      %v3047 = vpop.f32.mrf.mxu0
      %v3048 = vadd.f32 %v2983, %v3047
      %3049 = vmatmul.f32.gmra.mxu0 %v2563
      %v3050 = vpop.f32.mrf.mxu0
      %v3051 = vadd.f32 %v2986, %v3050
      %3052 = vmatmul.f32.gmra.mxu0 %v2569
      %v3053 = vpop.f32.mrf.mxu0
      %v3054 = vadd.f32 %v2989, %v3053
      %3055 = vmatmul.f32.gmra.mxu0 %v2575
      %v3056 = vpop.f32.mrf.mxu0
      %v3057 = vadd.f32 %v2992, %v3056
      %3058 = vmatmul.f32.gmra.mxu0 %v2581
      %v3059 = vpop.f32.mrf.mxu0
      %v3060 = vadd.f32 %v2995, %v3059
      %3061 = vmatmul.f32.gmra.mxu0 %v2587
      %v3062 = vpop.f32.mrf.mxu0
      %v3063 = vadd.f32 %v2998, %v3062
      %3064 = vmatmul.f32.gmra.mxu0 %v2593
      %v3065 = vpop.f32.mrf.mxu0
      %v3066 = vadd.f32 %v3001, %v3065
      %3067 = vmatmul.f32.gmra.mxu0 %v2599
      %v3068 = vpop.f32.mrf.mxu0
      %v3069 = vadd.f32 %v3004, %v3068
      %3070 = vmatmul.f32.gmra.mxu0 %v2605
      %v3071 = vpop.f32.mrf.mxu0
      %v3072 = vadd.f32 %v3007, %v3071
      %3073 = vmatmul.f32.gmra.mxu0 %v2611
      %v3074 = vpop.f32.mrf.mxu0
      %v3075 = vadd.f32 %v3010, %v3074
      %3076 = vmatmul.f32.gmra.mxu0 %v2617
      %v3077 = vpop.f32.mrf.mxu0
      %v3078 = vadd.f32 %v3013, %v3077
      %3079 = vmatmul.f32.gmra.mxu0 %v2623
      %v3080 = vpop.f32.mrf.mxu0
      %v3081 = vadd.f32 %v3016, %v3080
      %3082 = vdwg.mxu0
      %3083 = vmatpush.msra.mxu0 0.0
      %3084 = vmatpush.msra.mxu0 0.0
      %3085 = vmatpush.msra.mxu0 0.0
      %3086 = vmatpush.msra.mxu0 0.0
      %3087 = vmatpush.msra.mxu0 0.0
      %3088 = vmatpush.msra.mxu0 0.0
      %3089 = vmatpush.msra.mxu0 0.0
      %3090 = vmatpush.msra.mxu0 0.0
      %3091 = vmatpush.msra.mxu0 0.0
      %3092 = vmatpush.msra.mxu0 0.0
      %3093 = vmatpush.msra.mxu0 0.0
      %3094 = vmatpush.msra.mxu0 %v2709
      %3095 = vmatpush.msra.mxu0 %v2708
      %3096 = vmatpush.msra.mxu0 %v2707
      %3097 = vmatpush.msra.mxu0 %v2706
      %3098 = vmatpush.msra.mxu0 %v2705
      %3099 = vmatmul.f32.gmra.mxu0 %v2711
      %v3100 = vpop.f32.mrf.mxu0
      %v3101 = vadd.f32 %v3036, %v3100
      %3102 = vmatmul.f32.gmra.mxu0 %v2714
      %v3103 = vpop.f32.mrf.mxu0
      %v3104 = vadd.f32 %v3039, %v3103
      %3105 = vmatmul.f32.gmra.mxu0 %v2717
      %v3106 = vpop.f32.mrf.mxu0
      %v3107 = vadd.f32 %v3042, %v3106
      %3108 = vmatmul.f32.gmra.mxu0 %v2720
      %v3109 = vpop.f32.mrf.mxu0
      %v3110 = vadd.f32 %v3045, %v3109
      %3111 = vmatmul.f32.gmra.mxu0 %v2723
      %v3112 = vpop.f32.mrf.mxu0
      %v3113 = vadd.f32 %v3048, %v3112
      %3114 = vmatmul.f32.gmra.mxu0 %v2726
      %v3115 = vpop.f32.mrf.mxu0
      %v3116 = vadd.f32 %v3051, %v3115
      %3117 = vmatmul.f32.gmra.mxu0 %v2729
      %v3118 = vpop.f32.mrf.mxu0
      %v3119 = vadd.f32 %v3054, %v3118
      %3120 = vmatmul.f32.gmra.mxu0 %v2732
      %v3121 = vpop.f32.mrf.mxu0
      %v3122 = vadd.f32 %v3057, %v3121
      %3123 = vmatmul.f32.gmra.mxu0 %v2735
      %v3124 = vpop.f32.mrf.mxu0
      %v3125 = vadd.f32 %v3060, %v3124
      %3126 = vmatmul.f32.gmra.mxu0 %v2738
      %v3127 = vpop.f32.mrf.mxu0
      %v3128 = vadd.f32 %v3063, %v3127
      %3129 = vmatmul.f32.gmra.mxu0 %v2741
      %v3130 = vpop.f32.mrf.mxu0
      %v3131 = vadd.f32 %v3066, %v3130
      %3132 = vmatmul.f32.gmra.mxu0 %v2744
      %v3133 = vpop.f32.mrf.mxu0
      %v3134 = vadd.f32 %v3069, %v3133
      %3135 = vmatmul.f32.gmra.mxu0 %v2747
      %v3136 = vpop.f32.mrf.mxu0
      %v3137 = vadd.f32 %v3072, %v3136
      %3138 = vmatmul.f32.gmra.mxu0 %v2750
      %v3139 = vpop.f32.mrf.mxu0
      %v3140 = vadd.f32 %v3075, %v3139
      %3141 = vmatmul.f32.gmra.mxu0 %v2753
      %v3142 = vpop.f32.mrf.mxu0
      %v3143 = vadd.f32 %v3078, %v3142
      %3144 = vmatmul.f32.gmra.mxu0 %v2756
      %v3145 = vpop.f32.mrf.mxu0
      %v3146 = vadd.f32 %v3081, %v3145
      %3147 = vdwg.mxu0
      %v3148 = vadd.f32 %v2513, %v3101
      %v3149 = vadd.f32 %v2514, %v3104
      %v3150 = vadd.f32 %v2515, %v3107
      %v3151 = vadd.f32 %v2516, %v3110
      %v3152 = vadd.f32 %v2517, %v3113
      %v3153 = vadd.f32 %v2518, %v3116
      %v3154 = vadd.f32 %v2519, %v3119
      %v3155 = vadd.f32 %v2520, %v3122
      %v3156 = vadd.f32 %v2521, %v3125
      %v3157 = vadd.f32 %v2522, %v3128
      %v3158 = vadd.f32 %v2523, %v3131
      %v3159 = vadd.f32 %v2524, %v3134
      %v3160 = vadd.f32 %v2525, %v3137
      %v3161 = vadd.f32 %v2526, %v3140
      %v3162 = vadd.f32 %v2527, %v3143
      %v3163 = vadd.f32 %v2528, %v3146
      %v3164 = vld [vmem:[%s13] sm:$0x1]
      %v3166 = vperm.slane %v3164, 0
      %v3168 = vadd.f32 %v3148, %v3166
      %v3169 = vadd.f32 %v3149, %v3166
      %v3170 = vadd.f32 %v3150, %v3166
      %v3171 = vadd.f32 %v3151, %v3166
      %v3172 = vadd.f32 %v3152, %v3166
      %v3173 = vadd.f32 %v3153, %v3166
      %v3174 = vadd.f32 %v3154, %v3166
      %v3175 = vadd.f32 %v3155, %v3166
      %v3176 = vadd.f32 %v3156, %v3166
      %v3177 = vadd.f32 %v3157, %v3166
      %v3178 = vadd.f32 %v3158, %v3166
      %v3179 = vadd.f32 %v3159, %v3166
      %v3180 = vadd.f32 %v3160, %v3166
      %v3181 = vadd.f32 %v3161, %v3166
      %v3182 = vadd.f32 %v3162, %v3166
      %v3183 = vadd.f32 %v3163, %v3166
      %v3184 = vtanh.pop %v3168
      %v3185 = vtanh.pop %v3169
      %v3186 = vtanh.pop %v3170
      %v3187 = vtanh.pop %v3171
      %v3188 = vtanh.pop %v3172
      %v3189 = vtanh.pop %v3173
      %v3190 = vtanh.pop %v3174
      %v3191 = vtanh.pop %v3175
      %v3192 = vtanh.pop %v3176
      %v3193 = vtanh.pop %v3177
      %v3194 = vtanh.pop %v3178
      %v3195 = vtanh.pop %v3179
      %v3196 = vtanh.pop %v3180
      %v3197 = vtanh.pop %v3181
      %v3198 = vtanh.pop %v3182
      %v3199 = vtanh.pop %v3183
      %v3200 = vld [vmem:[%s619] sm:$0xff]
      %v3201 = vld [vmem:[%s619 + $0x8] sm:$0xff]
      %v3202 = vld [vmem:[%s619 + $0x10] sm:$0xff]
      %v3203 = vld [vmem:[%s619 + $0x18] sm:$0xff]
      %v3204 = vld [vmem:[%s619 + $0x20] sm:$0xff]
      %v3205 = vld [vmem:[%s619 + $0x28] sm:$0xff]
      %v3206 = vld [vmem:[%s619 + $0x30] sm:$0xff]
      %v3207 = vld [vmem:[%s619 + $0x38] sm:$0xff]
      %v3208 = vld [vmem:[%s619 + $0x40] sm:$0xff]
      %v3209 = vld [vmem:[%s619 + $0x48] sm:$0xff]
      %v3210 = vld [vmem:[%s619 + $0x50] sm:$0xff]
      %v3211 = vld [vmem:[%s619 + $0x58] sm:$0xff]
      %v3212 = vld [vmem:[%s619 + $0x60] sm:$0xff]
      %v3213 = vld [vmem:[%s619 + $0x68] sm:$0xff]
      %v3214 = vld [vmem:[%s619 + $0x70] sm:$0xff]
      %v3215 = vld [vmem:[%s619 + $0x78] sm:$0xff]
      %v3216 = vld [vmem:[%s619 + $0x80] sm:$0xff]
      %v3217 = vld [vmem:[%s619 + $0x88] sm:$0xff]
      %v3218 = vld [vmem:[%s619 + $0x90] sm:$0xff]
      %v3219 = vld [vmem:[%s619 + $0x98] sm:$0xff]
      %v3220 = vld [vmem:[%s619 + $0xa0] sm:$0xff]
      %v3221 = vld [vmem:[%s619 + $0xa8] sm:$0xff]
      %v3222 = vld [vmem:[%s619 + $0xb0] sm:$0xff]
      %v3223 = vld [vmem:[%s619 + $0xb8] sm:$0xff]
      %v3224 = vld [vmem:[%s619 + $0xc0] sm:$0xff]
      %v3225 = vld [vmem:[%s619 + $0xc8] sm:$0xff]
      %v3226 = vld [vmem:[%s619 + $0xd0] sm:$0xff]
      %v3227 = vld [vmem:[%s619 + $0xd8] sm:$0xff]
      %v3228 = vld [vmem:[%s619 + $0xe0] sm:$0xff]
      %v3229 = vld [vmem:[%s619 + $0xe8] sm:$0xff]
      %v3230 = vld [vmem:[%s619 + $0xf0] sm:$0xff]
      %v3231 = vld [vmem:[%s619 + $0xf8] sm:$0xff]
      %v3232 = vld [vmem:[%s619 + $0x100] sm:$0xff]
      %v3233 = vld [vmem:[%s619 + $0x108] sm:$0xff]
      %v3234 = vld [vmem:[%s619 + $0x110] sm:$0xff]
      %v3235 = vld [vmem:[%s619 + $0x118] sm:$0xff]
      %v3236 = vld [vmem:[%s619 + $0x120] sm:$0xff]
      %v3237 = vld [vmem:[%s619 + $0x128] sm:$0xff]
      %v3238 = vld [vmem:[%s619 + $0x130] sm:$0xff]
      %v3239 = vld [vmem:[%s619 + $0x138] sm:$0xff]
      %v3240 = vld [vmem:[%s619 + $0x140] sm:$0xff]
      %v3241 = vld [vmem:[%s619 + $0x148] sm:$0xff]
      %v3242 = vld [vmem:[%s619 + $0x150] sm:$0xff]
      %v3243 = vld [vmem:[%s619 + $0x158] sm:$0xff]
      %v3244 = vld [vmem:[%s619 + $0x160] sm:$0xff]
      %v3245 = vld [vmem:[%s619 + $0x168] sm:$0xff]
      %v3246 = vld [vmem:[%s619 + $0x170] sm:$0xff]
      %v3247 = vld [vmem:[%s619 + $0x178] sm:$0xff]
      %v3248 = vld [vmem:[%s619 + $0x180] sm:$0xff]
      %v3249 = vld [vmem:[%s619 + $0x188] sm:$0xff]
      %v3250 = vld [vmem:[%s619 + $0x190] sm:$0xff]
      %v3251 = vld [vmem:[%s619 + $0x198] sm:$0xff]
      %v3252 = vld [vmem:[%s619 + $0x1a0] sm:$0xff]
      %v3253 = vld [vmem:[%s619 + $0x1a8] sm:$0xff]
      %v3254 = vld [vmem:[%s619 + $0x1b0] sm:$0xff]
      %v3255 = vld [vmem:[%s619 + $0x1b8] sm:$0xff]
      %v3256 = vld [vmem:[%s619 + $0x1c0] sm:$0xff]
      %v3257 = vld [vmem:[%s619 + $0x1c8] sm:$0xff]
      %v3258 = vld [vmem:[%s619 + $0x1d0] sm:$0xff]
      %v3259 = vld [vmem:[%s619 + $0x1d8] sm:$0xff]
      %v3260 = vld [vmem:[%s619 + $0x1e0] sm:$0xff]
      %v3261 = vld [vmem:[%s619 + $0x1e8] sm:$0xff]
      %v3262 = vld [vmem:[%s619 + $0x1f0] sm:$0xff]
      %v3263 = vld [vmem:[%s619 + $0x1f8] sm:$0xff]
      %v3264 = vld [vmem:[%s619 + $0x200] sm:$0xff]
      %v3265 = vld [vmem:[%s619 + $0x208] sm:$0xff]
      %v3266 = vld [vmem:[%s619 + $0x210] sm:$0xff]
      %v3267 = vld [vmem:[%s619 + $0x218] sm:$0xff]
      %v3268 = vld [vmem:[%s619 + $0x220] sm:$0xff]
      %v3269 = vld [vmem:[%s619 + $0x228] sm:$0xff]
      %v3270 = vld [vmem:[%s619 + $0x230] sm:$0xff]
      %v3271 = vld [vmem:[%s619 + $0x238] sm:$0xff]
      %v3272 = vld [vmem:[%s619 + $0x240] sm:$0xff]
      %v3273 = vld [vmem:[%s619 + $0x248] sm:$0xff]
      %v3274 = vld [vmem:[%s619 + $0x250] sm:$0xff]
      %v3275 = vld [vmem:[%s619 + $0x258] sm:$0xff]
      %v3276 = vld [vmem:[%s619 + $0x260] sm:$0xff]
      %v3277 = vld [vmem:[%s619 + $0x268] sm:$0xff]
      %v3278 = vld [vmem:[%s619 + $0x270] sm:$0xff]
      %v3279 = vld [vmem:[%s619 + $0x278] sm:$0xff]
      %v3280 = vld [vmem:[%s5] sm:$0xff]
      %v3281 = vld [vmem:[%s5 + $0x8] sm:$0xff]
      %v3282 = vld [vmem:[%s5 + $0x10] sm:$0xff]
      %v3283 = vld [vmem:[%s5 + $0x18] sm:$0xff]
      %v3284 = vld [vmem:[%s5 + $0x20] sm:$0xff]
      %v3285 = vld [vmem:[%s5 + $0x28] sm:$0xff]
      %v3286 = vld [vmem:[%s5 + $0x30] sm:$0xff]
      %v3287 = vld [vmem:[%s5 + $0x38] sm:$0xff]
      %v3288 = vld [vmem:[%s5 + $0x40] sm:$0xff]
      %v3289 = vld [vmem:[%s5 + $0x48] sm:$0xff]
      %v3290 = vld [vmem:[%s5 + $0x50] sm:$0xff]
      %v3291 = vld [vmem:[%s5 + $0x58] sm:$0xff]
      %v3292 = vld [vmem:[%s5 + $0x60] sm:$0xff]
      %v3293 = vld [vmem:[%s5 + $0x68] sm:$0xff]
      %v3294 = vld [vmem:[%s5 + $0x70] sm:$0xff]
      %v3295 = vld [vmem:[%s5 + $0x78] sm:$0xff]
      %v3296 = vld [vmem:[%s5 + $0x80] sm:$0xff]
      %v3297 = vld [vmem:[%s5 + $0x88] sm:$0xff]
      %v3298 = vld [vmem:[%s5 + $0x90] sm:$0xff]
      %v3299 = vld [vmem:[%s5 + $0x98] sm:$0xff]
      %v3300 = vld [vmem:[%s5 + $0xa0] sm:$0xff]
      %v3301 = vld [vmem:[%s5 + $0xa8] sm:$0xff]
      %v3302 = vld [vmem:[%s5 + $0xb0] sm:$0xff]
      %v3303 = vld [vmem:[%s5 + $0xb8] sm:$0xff]
      %v3304 = vld [vmem:[%s5 + $0xc0] sm:$0xff]
      %v3305 = vld [vmem:[%s5 + $0xc8] sm:$0xff]
      %v3306 = vld [vmem:[%s5 + $0xd0] sm:$0xff]
      %v3307 = vld [vmem:[%s5 + $0xd8] sm:$0xff]
      %v3308 = vld [vmem:[%s5 + $0xe0] sm:$0xff]
      %v3309 = vld [vmem:[%s5 + $0xe8] sm:$0xff]
      %v3310 = vld [vmem:[%s5 + $0xf0] sm:$0xff]
      %v3311 = vld [vmem:[%s5 + $0xf8] sm:$0xff]
      %v3312 = vld [vmem:[%s5 + $0x100] sm:$0xff]
      %v3313 = vld [vmem:[%s5 + $0x108] sm:$0xff]
      %v3314 = vld [vmem:[%s5 + $0x110] sm:$0xff]
      %v3315 = vld [vmem:[%s5 + $0x118] sm:$0xff]
      %v3316 = vld [vmem:[%s5 + $0x120] sm:$0xff]
      %v3317 = vld [vmem:[%s5 + $0x128] sm:$0xff]
      %v3318 = vld [vmem:[%s5 + $0x130] sm:$0xff]
      %v3319 = vld [vmem:[%s5 + $0x138] sm:$0xff]
      %v3320 = vld [vmem:[%s5 + $0x140] sm:$0xff]
      %v3321 = vld [vmem:[%s5 + $0x148] sm:$0xff]
      %v3322 = vld [vmem:[%s5 + $0x150] sm:$0xff]
      %v3323 = vld [vmem:[%s5 + $0x158] sm:$0xff]
      %v3324 = vld [vmem:[%s5 + $0x160] sm:$0xff]
      %v3325 = vld [vmem:[%s5 + $0x168] sm:$0xff]
      %v3326 = vld [vmem:[%s5 + $0x170] sm:$0xff]
      %v3327 = vld [vmem:[%s5 + $0x178] sm:$0xff]
      %v3328 = vld [vmem:[%s5 + $0x180] sm:$0xff]
      %v3329 = vld [vmem:[%s5 + $0x188] sm:$0xff]
      %v3330 = vld [vmem:[%s5 + $0x190] sm:$0xff]
      %v3331 = vld [vmem:[%s5 + $0x198] sm:$0xff]
      %v3332 = vld [vmem:[%s5 + $0x1a0] sm:$0xff]
      %v3333 = vld [vmem:[%s5 + $0x1a8] sm:$0xff]
      %v3334 = vld [vmem:[%s5 + $0x1b0] sm:$0xff]
      %v3335 = vld [vmem:[%s5 + $0x1b8] sm:$0xff]
      %v3336 = vld [vmem:[%s5 + $0x1c0] sm:$0xff]
      %v3337 = vld [vmem:[%s5 + $0x1c8] sm:$0xff]
      %v3338 = vld [vmem:[%s5 + $0x1d0] sm:$0xff]
      %v3339 = vld [vmem:[%s5 + $0x1d8] sm:$0xff]
      %v3340 = vld [vmem:[%s5 + $0x1e0] sm:$0xff]
      %v3341 = vld [vmem:[%s5 + $0x1e8] sm:$0xff]
      %v3342 = vld [vmem:[%s5 + $0x1f0] sm:$0xff]
      %v3343 = vld [vmem:[%s5 + $0x1f8] sm:$0xff]
      %v3344 = vld [vmem:[%s5 + $0x200] sm:$0xff]
      %v3345 = vld [vmem:[%s5 + $0x208] sm:$0xff]
      %v3346 = vld [vmem:[%s5 + $0x210] sm:$0xff]
      %v3347 = vld [vmem:[%s5 + $0x218] sm:$0xf]
      %v3348 = vld [vmem:[%s10] sm:$0xff]
      %v3349 = vld [vmem:[%s10 + $0x8] sm:$0x3]
      %vm3350 = vcmask 80896
      %v3352 = vsel %vm3350, %v3184, 0
      %v3355 = vsel %vm3350, %v3185, 0
      %v3358 = vsel %vm3350, %v3186, 0
      %v3361 = vsel %vm3350, %v3187, 0
      %v3364 = vsel %vm3350, %v3188, 0
      %v3367 = vsel %vm3350, %v3189, 0
      %v3370 = vsel %vm3350, %v3190, 0
      %v3373 = vsel %vm3350, %v3191, 0
      %v3376 = vsel %vm3350, %v3192, 0
      %v3379 = vsel %vm3350, %v3193, 0
      %v3382 = vsel %vm3350, %v3194, 0
      %v3385 = vsel %vm3350, %v3195, 0
      %v3388 = vsel %vm3350, %v3196, 0
      %v3391 = vsel %vm3350, %v3197, 0
      %v3394 = vsel %vm3350, %v3198, 0
      %v3397 = vsel %vm3350, %v3199, 0
      %vm3399 = vcmask 1041408
      %v3401 = vsel %vm3399, %v3349, 0
      %3403 = vmatpush.msra.mxu0 0.0
      %3404 = vmatpush.msra.mxu0 0.0
      %3405 = vmatpush.msra.mxu0 0.0
      %3406 = vmatpush.msra.mxu0 0.0
      %3407 = vmatpush.msra.mxu0 0.0
      %3408 = vmatpush.msra.mxu0 0.0
      %3409 = vmatpush.msra.mxu0 0.0
      %3410 = vmatpush.msra.mxu0 0.0
      %3411 = vmatpush.msra.mxu0 0.0
      %3412 = vmatpush.msra.mxu0 0.0
      %3413 = vmatpush.msra.mxu0 0.0
      %3414 = vmatpush.msra.mxu0 0.0
      %3415 = vmatpush.msra.mxu0 0.0
      %3416 = vmatpush.msra.mxu0 0.0
      %3417 = vmatpush.msra.mxu0 %v3401
      %3418 = vmatpush.msra.mxu0 %v3348
      %3419 = vmatmul.f32.gmra.mxu0 %v3352
      %v3420 = vpop.f32.mrf.mxu0
      %v3421 = vadd.f32 0.0, %v3420
      %3422 = vmatmul.f32.gmra.mxu0 %v3355
      %v3423 = vpop.f32.mrf.mxu0
      %v3424 = vadd.f32 0.0, %v3423
      %3425 = vmatmul.f32.gmra.mxu0 %v3358
      %v3426 = vpop.f32.mrf.mxu0
      %v3427 = vadd.f32 0.0, %v3426
      %3428 = vmatmul.f32.gmra.mxu0 %v3361
      %v3429 = vpop.f32.mrf.mxu0
      %v3430 = vadd.f32 0.0, %v3429
      %3431 = vmatmul.f32.gmra.mxu0 %v3364
      %v3432 = vpop.f32.mrf.mxu0
      %v3433 = vadd.f32 0.0, %v3432
      %3434 = vmatmul.f32.gmra.mxu0 %v3367
      %v3435 = vpop.f32.mrf.mxu0
      %v3436 = vadd.f32 0.0, %v3435
      %3437 = vmatmul.f32.gmra.mxu0 %v3370
      %v3438 = vpop.f32.mrf.mxu0
      %v3439 = vadd.f32 0.0, %v3438
      %3440 = vmatmul.f32.gmra.mxu0 %v3373
      %v3441 = vpop.f32.mrf.mxu0
      %v3442 = vadd.f32 0.0, %v3441
      %3443 = vmatmul.f32.gmra.mxu0 %v3376
      %v3444 = vpop.f32.mrf.mxu0
      %v3445 = vadd.f32 0.0, %v3444
      %3446 = vmatmul.f32.gmra.mxu0 %v3379
      %v3447 = vpop.f32.mrf.mxu0
      %v3448 = vadd.f32 0.0, %v3447
      %3449 = vmatmul.f32.gmra.mxu0 %v3382
      %v3450 = vpop.f32.mrf.mxu0
      %v3451 = vadd.f32 0.0, %v3450
      %3452 = vmatmul.f32.gmra.mxu0 %v3385
      %v3453 = vpop.f32.mrf.mxu0
      %v3454 = vadd.f32 0.0, %v3453
      %3455 = vmatmul.f32.gmra.mxu0 %v3388
      %v3456 = vpop.f32.mrf.mxu0
      %v3457 = vadd.f32 0.0, %v3456
      %3458 = vmatmul.f32.gmra.mxu0 %v3391
      %v3459 = vpop.f32.mrf.mxu0
      %v3460 = vadd.f32 0.0, %v3459
      %3461 = vmatmul.f32.gmra.mxu0 %v3394
      %v3462 = vpop.f32.mrf.mxu0
      %v3463 = vadd.f32 0.0, %v3462
      %3464 = vmatmul.f32.gmra.mxu0 %v3397
      %v3465 = vpop.f32.mrf.mxu0
      %v3466 = vadd.f32 0.0, %v3465
      %3467 = vdwg.mxu0
      %vm3468 = vcmask 228352
      %v3470 = vsel %vm3468, %v3204, 0
      %v3473 = vsel %vm3468, %v3209, 0
      %v3476 = vsel %vm3468, %v3214, 0
      %v3479 = vsel %vm3468, %v3219, 0
      %v3482 = vsel %vm3468, %v3224, 0
      %v3485 = vsel %vm3468, %v3229, 0
      %v3488 = vsel %vm3468, %v3234, 0
      %v3491 = vsel %vm3468, %v3239, 0
      %v3494 = vsel %vm3468, %v3244, 0
      %v3497 = vsel %vm3468, %v3249, 0
      %v3500 = vsel %vm3468, %v3254, 0
      %v3503 = vsel %vm3468, %v3259, 0
      %v3506 = vsel %vm3468, %v3264, 0
      %v3509 = vsel %vm3468, %v3269, 0
      %v3512 = vsel %vm3468, %v3274, 0
      %v3515 = vsel %vm3468, %v3279, 0
      %vm3517 = vcmask 1043456
      %v3519 = vsel %vm3517, %v3347, 0
      %3521 = vmatpush.msra.mxu0 %v3295
      %3522 = vmatpush.msra.mxu0 %v3294
      %3523 = vmatpush.msra.mxu0 %v3293
      %3524 = vmatpush.msra.mxu0 %v3292
      %3525 = vmatpush.msra.mxu0 %v3291
      %3526 = vmatpush.msra.mxu0 %v3290
      %3527 = vmatpush.msra.mxu0 %v3289
      %3528 = vmatpush.msra.mxu0 %v3288
      %3529 = vmatpush.msra.mxu0 %v3287
      %3530 = vmatpush.msra.mxu0 %v3286
      %3531 = vmatpush.msra.mxu0 %v3285
      %3532 = vmatpush.msra.mxu0 %v3284
      %3533 = vmatpush.msra.mxu0 %v3283
      %3534 = vmatpush.msra.mxu0 %v3282
      %3535 = vmatpush.msra.mxu0 %v3281
      %3536 = vmatpush.msra.mxu0 %v3280
      %3537 = vmatmul.f32.gmra.mxu0 %v3200
      %v3538 = vpop.f32.mrf.mxu0
      %v3539 = vadd.f32 %v3421, %v3538
      %3540 = vmatmul.f32.gmra.mxu0 %v3205
      %v3541 = vpop.f32.mrf.mxu0
      %v3542 = vadd.f32 %v3424, %v3541
      %3543 = vmatmul.f32.gmra.mxu0 %v3210
      %v3544 = vpop.f32.mrf.mxu0
      %v3545 = vadd.f32 %v3427, %v3544
      %3546 = vmatmul.f32.gmra.mxu0 %v3215
      %v3547 = vpop.f32.mrf.mxu0
      %v3548 = vadd.f32 %v3430, %v3547
      %3549 = vmatmul.f32.gmra.mxu0 %v3220
      %v3550 = vpop.f32.mrf.mxu0
      %v3551 = vadd.f32 %v3433, %v3550
      %3552 = vmatmul.f32.gmra.mxu0 %v3225
      %v3553 = vpop.f32.mrf.mxu0
      %v3554 = vadd.f32 %v3436, %v3553
      %3555 = vmatmul.f32.gmra.mxu0 %v3230
      %v3556 = vpop.f32.mrf.mxu0
      %v3557 = vadd.f32 %v3439, %v3556
      %3558 = vmatmul.f32.gmra.mxu0 %v3235
      %v3559 = vpop.f32.mrf.mxu0
      %v3560 = vadd.f32 %v3442, %v3559
      %3561 = vmatmul.f32.gmra.mxu0 %v3240
      %v3562 = vpop.f32.mrf.mxu0
      %v3563 = vadd.f32 %v3445, %v3562
      %3564 = vmatmul.f32.gmra.mxu0 %v3245
      %v3565 = vpop.f32.mrf.mxu0
      %v3566 = vadd.f32 %v3448, %v3565
      %3567 = vmatmul.f32.gmra.mxu0 %v3250
      %v3568 = vpop.f32.mrf.mxu0
      %v3569 = vadd.f32 %v3451, %v3568
      %3570 = vmatmul.f32.gmra.mxu0 %v3255
      %v3571 = vpop.f32.mrf.mxu0
      %v3572 = vadd.f32 %v3454, %v3571
      %3573 = vmatmul.f32.gmra.mxu0 %v3260
      %v3574 = vpop.f32.mrf.mxu0
      %v3575 = vadd.f32 %v3457, %v3574
      %3576 = vmatmul.f32.gmra.mxu0 %v3265
      %v3577 = vpop.f32.mrf.mxu0
      %v3578 = vadd.f32 %v3460, %v3577
      %3579 = vmatmul.f32.gmra.mxu0 %v3270
      %v3580 = vpop.f32.mrf.mxu0
      %v3581 = vadd.f32 %v3463, %v3580
      %3582 = vmatmul.f32.gmra.mxu0 %v3275
      %v3583 = vpop.f32.mrf.mxu0
      %v3584 = vadd.f32 %v3466, %v3583
      %3585 = vdwg.mxu0
      %3586 = vmatpush.msra.mxu0 %v3311
      %3587 = vmatpush.msra.mxu0 %v3310
      %3588 = vmatpush.msra.mxu0 %v3309
      %3589 = vmatpush.msra.mxu0 %v3308
      %3590 = vmatpush.msra.mxu0 %v3307
      %3591 = vmatpush.msra.mxu0 %v3306
      %3592 = vmatpush.msra.mxu0 %v3305
      %3593 = vmatpush.msra.mxu0 %v3304
      %3594 = vmatpush.msra.mxu0 %v3303
      %3595 = vmatpush.msra.mxu0 %v3302
      %3596 = vmatpush.msra.mxu0 %v3301
      %3597 = vmatpush.msra.mxu0 %v3300
      %3598 = vmatpush.msra.mxu0 %v3299
      %3599 = vmatpush.msra.mxu0 %v3298
      %3600 = vmatpush.msra.mxu0 %v3297
      %3601 = vmatpush.msra.mxu0 %v3296
      %3602 = vmatmul.f32.gmra.mxu0 %v3201
      %v3603 = vpop.f32.mrf.mxu0
      %v3604 = vadd.f32 %v3539, %v3603
      %3605 = vmatmul.f32.gmra.mxu0 %v3206
      %v3606 = vpop.f32.mrf.mxu0
      %v3607 = vadd.f32 %v3542, %v3606
      %3608 = vmatmul.f32.gmra.mxu0 %v3211
      %v3609 = vpop.f32.mrf.mxu0
      %v3610 = vadd.f32 %v3545, %v3609
      %3611 = vmatmul.f32.gmra.mxu0 %v3216
      %v3612 = vpop.f32.mrf.mxu0
      %v3613 = vadd.f32 %v3548, %v3612
      %3614 = vmatmul.f32.gmra.mxu0 %v3221
      %v3615 = vpop.f32.mrf.mxu0
      %v3616 = vadd.f32 %v3551, %v3615
      %3617 = vmatmul.f32.gmra.mxu0 %v3226
      %v3618 = vpop.f32.mrf.mxu0
      %v3619 = vadd.f32 %v3554, %v3618
      %3620 = vmatmul.f32.gmra.mxu0 %v3231
      %v3621 = vpop.f32.mrf.mxu0
      %v3622 = vadd.f32 %v3557, %v3621
      %3623 = vmatmul.f32.gmra.mxu0 %v3236
      %v3624 = vpop.f32.mrf.mxu0
      %v3625 = vadd.f32 %v3560, %v3624
      %3626 = vmatmul.f32.gmra.mxu0 %v3241
      %v3627 = vpop.f32.mrf.mxu0
      %v3628 = vadd.f32 %v3563, %v3627
      %3629 = vmatmul.f32.gmra.mxu0 %v3246
      %v3630 = vpop.f32.mrf.mxu0
      %v3631 = vadd.f32 %v3566, %v3630
      %3632 = vmatmul.f32.gmra.mxu0 %v3251
      %v3633 = vpop.f32.mrf.mxu0
      %v3634 = vadd.f32 %v3569, %v3633
      %3635 = vmatmul.f32.gmra.mxu0 %v3256
      %v3636 = vpop.f32.mrf.mxu0
      %v3637 = vadd.f32 %v3572, %v3636
      %3638 = vmatmul.f32.gmra.mxu0 %v3261
      %v3639 = vpop.f32.mrf.mxu0
      %v3640 = vadd.f32 %v3575, %v3639
      %3641 = vmatmul.f32.gmra.mxu0 %v3266
      %v3642 = vpop.f32.mrf.mxu0
      %v3643 = vadd.f32 %v3578, %v3642
      %3644 = vmatmul.f32.gmra.mxu0 %v3271
      %v3645 = vpop.f32.mrf.mxu0
      %v3646 = vadd.f32 %v3581, %v3645
      %3647 = vmatmul.f32.gmra.mxu0 %v3276
      %v3648 = vpop.f32.mrf.mxu0
      %v3649 = vadd.f32 %v3584, %v3648
      %3650 = vdwg.mxu0
      %3651 = vmatpush.msra.mxu0 %v3327
      %3652 = vmatpush.msra.mxu0 %v3326
      %3653 = vmatpush.msra.mxu0 %v3325
      %3654 = vmatpush.msra.mxu0 %v3324
      %3655 = vmatpush.msra.mxu0 %v3323
      %3656 = vmatpush.msra.mxu0 %v3322
      %3657 = vmatpush.msra.mxu0 %v3321
      %3658 = vmatpush.msra.mxu0 %v3320
      %3659 = vmatpush.msra.mxu0 %v3319
      %3660 = vmatpush.msra.mxu0 %v3318
      %3661 = vmatpush.msra.mxu0 %v3317
      %3662 = vmatpush.msra.mxu0 %v3316
      %3663 = vmatpush.msra.mxu0 %v3315
      %3664 = vmatpush.msra.mxu0 %v3314
      %3665 = vmatpush.msra.mxu0 %v3313
      %3666 = vmatpush.msra.mxu0 %v3312
      %3667 = vmatmul.f32.gmra.mxu0 %v3202
      %v3668 = vpop.f32.mrf.mxu0
      %v3669 = vadd.f32 %v3604, %v3668
      %3670 = vmatmul.f32.gmra.mxu0 %v3207
      %v3671 = vpop.f32.mrf.mxu0
      %v3672 = vadd.f32 %v3607, %v3671
      %3673 = vmatmul.f32.gmra.mxu0 %v3212
      %v3674 = vpop.f32.mrf.mxu0
      %v3675 = vadd.f32 %v3610, %v3674
      %3676 = vmatmul.f32.gmra.mxu0 %v3217
      %v3677 = vpop.f32.mrf.mxu0
      %v3678 = vadd.f32 %v3613, %v3677
      %3679 = vmatmul.f32.gmra.mxu0 %v3222
      %v3680 = vpop.f32.mrf.mxu0
      %v3681 = vadd.f32 %v3616, %v3680
      %3682 = vmatmul.f32.gmra.mxu0 %v3227
      %v3683 = vpop.f32.mrf.mxu0
      %v3684 = vadd.f32 %v3619, %v3683
      %3685 = vmatmul.f32.gmra.mxu0 %v3232
      %v3686 = vpop.f32.mrf.mxu0
      %v3687 = vadd.f32 %v3622, %v3686
      %3688 = vmatmul.f32.gmra.mxu0 %v3237
      %v3689 = vpop.f32.mrf.mxu0
      %v3690 = vadd.f32 %v3625, %v3689
      %3691 = vmatmul.f32.gmra.mxu0 %v3242
      %v3692 = vpop.f32.mrf.mxu0
      %v3693 = vadd.f32 %v3628, %v3692
      %3694 = vmatmul.f32.gmra.mxu0 %v3247
      %v3695 = vpop.f32.mrf.mxu0
      %v3696 = vadd.f32 %v3631, %v3695
      %3697 = vmatmul.f32.gmra.mxu0 %v3252
      %v3698 = vpop.f32.mrf.mxu0
      %v3699 = vadd.f32 %v3634, %v3698
      %3700 = vmatmul.f32.gmra.mxu0 %v3257
      %v3701 = vpop.f32.mrf.mxu0
      %v3702 = vadd.f32 %v3637, %v3701
      %3703 = vmatmul.f32.gmra.mxu0 %v3262
      %v3704 = vpop.f32.mrf.mxu0
      %v3705 = vadd.f32 %v3640, %v3704
      %3706 = vmatmul.f32.gmra.mxu0 %v3267
      %v3707 = vpop.f32.mrf.mxu0
      %v3708 = vadd.f32 %v3643, %v3707
      %3709 = vmatmul.f32.gmra.mxu0 %v3272
      %v3710 = vpop.f32.mrf.mxu0
      %v3711 = vadd.f32 %v3646, %v3710
      %3712 = vmatmul.f32.gmra.mxu0 %v3277
      %v3713 = vpop.f32.mrf.mxu0
      %v3714 = vadd.f32 %v3649, %v3713
      %3715 = vdwg.mxu0
      %3716 = vmatpush.msra.mxu0 %v3343
      %3717 = vmatpush.msra.mxu0 %v3342
      %3718 = vmatpush.msra.mxu0 %v3341
      %3719 = vmatpush.msra.mxu0 %v3340
      %3720 = vmatpush.msra.mxu0 %v3339
      %3721 = vmatpush.msra.mxu0 %v3338
      %3722 = vmatpush.msra.mxu0 %v3337
      %3723 = vmatpush.msra.mxu0 %v3336
      %3724 = vmatpush.msra.mxu0 %v3335
      %3725 = vmatpush.msra.mxu0 %v3334
      %3726 = vmatpush.msra.mxu0 %v3333
      %3727 = vmatpush.msra.mxu0 %v3332
      %3728 = vmatpush.msra.mxu0 %v3331
      %3729 = vmatpush.msra.mxu0 %v3330
      %3730 = vmatpush.msra.mxu0 %v3329
      %3731 = vmatpush.msra.mxu0 %v3328
      %3732 = vmatmul.f32.gmra.mxu0 %v3203
      %v3733 = vpop.f32.mrf.mxu0
      %v3734 = vadd.f32 %v3669, %v3733
      %3735 = vmatmul.f32.gmra.mxu0 %v3208
      %v3736 = vpop.f32.mrf.mxu0
      %v3737 = vadd.f32 %v3672, %v3736
      %3738 = vmatmul.f32.gmra.mxu0 %v3213
      %v3739 = vpop.f32.mrf.mxu0
      %v3740 = vadd.f32 %v3675, %v3739
      %3741 = vmatmul.f32.gmra.mxu0 %v3218
      %v3742 = vpop.f32.mrf.mxu0
      %v3743 = vadd.f32 %v3678, %v3742
      %3744 = vmatmul.f32.gmra.mxu0 %v3223
      %v3745 = vpop.f32.mrf.mxu0
      %v3746 = vadd.f32 %v3681, %v3745
      %3747 = vmatmul.f32.gmra.mxu0 %v3228
      %v3748 = vpop.f32.mrf.mxu0
      %v3749 = vadd.f32 %v3684, %v3748
      %3750 = vmatmul.f32.gmra.mxu0 %v3233
      %v3751 = vpop.f32.mrf.mxu0
      %v3752 = vadd.f32 %v3687, %v3751
      %3753 = vmatmul.f32.gmra.mxu0 %v3238
      %v3754 = vpop.f32.mrf.mxu0
      %v3755 = vadd.f32 %v3690, %v3754
      %3756 = vmatmul.f32.gmra.mxu0 %v3243
      %v3757 = vpop.f32.mrf.mxu0
      %v3758 = vadd.f32 %v3693, %v3757
      %3759 = vmatmul.f32.gmra.mxu0 %v3248
      %v3760 = vpop.f32.mrf.mxu0
      %v3761 = vadd.f32 %v3696, %v3760
      %3762 = vmatmul.f32.gmra.mxu0 %v3253
      %v3763 = vpop.f32.mrf.mxu0
      %v3764 = vadd.f32 %v3699, %v3763
      %3765 = vmatmul.f32.gmra.mxu0 %v3258
      %v3766 = vpop.f32.mrf.mxu0
      %v3767 = vadd.f32 %v3702, %v3766
      %3768 = vmatmul.f32.gmra.mxu0 %v3263
      %v3769 = vpop.f32.mrf.mxu0
      %v3770 = vadd.f32 %v3705, %v3769
      %3771 = vmatmul.f32.gmra.mxu0 %v3268
      %v3772 = vpop.f32.mrf.mxu0
      %v3773 = vadd.f32 %v3708, %v3772
      %3774 = vmatmul.f32.gmra.mxu0 %v3273
      %v3775 = vpop.f32.mrf.mxu0
      %v3776 = vadd.f32 %v3711, %v3775
      %3777 = vmatmul.f32.gmra.mxu0 %v3278
      %v3778 = vpop.f32.mrf.mxu0
      %v3779 = vadd.f32 %v3714, %v3778
      %3780 = vdwg.mxu0
      %3781 = vmatpush.msra.mxu0 0.0
      %3782 = vmatpush.msra.mxu0 0.0
      %3783 = vmatpush.msra.mxu0 0.0
      %3784 = vmatpush.msra.mxu0 0.0
      %3785 = vmatpush.msra.mxu0 0.0
      %3786 = vmatpush.msra.mxu0 0.0
      %3787 = vmatpush.msra.mxu0 0.0
      %3788 = vmatpush.msra.mxu0 0.0
      %3789 = vmatpush.msra.mxu0 0.0
      %3790 = vmatpush.msra.mxu0 0.0
      %3791 = vmatpush.msra.mxu0 0.0
      %3792 = vmatpush.msra.mxu0 0.0
      %3793 = vmatpush.msra.mxu0 %v3519
      %3794 = vmatpush.msra.mxu0 %v3346
      %3795 = vmatpush.msra.mxu0 %v3345
      %3796 = vmatpush.msra.mxu0 %v3344
      %3797 = vmatmul.f32.gmra.mxu0 %v3470
      %v3798 = vpop.f32.mrf.mxu0
      %v3799 = vadd.f32 %v3734, %v3798
      %3800 = vmatmul.f32.gmra.mxu0 %v3473
      %v3801 = vpop.f32.mrf.mxu0
      %v3802 = vadd.f32 %v3737, %v3801
      %3803 = vmatmul.f32.gmra.mxu0 %v3476
      %v3804 = vpop.f32.mrf.mxu0
      %v3805 = vadd.f32 %v3740, %v3804
      %3806 = vmatmul.f32.gmra.mxu0 %v3479
      %v3807 = vpop.f32.mrf.mxu0
      %v3808 = vadd.f32 %v3743, %v3807
      %3809 = vmatmul.f32.gmra.mxu0 %v3482
      %v3810 = vpop.f32.mrf.mxu0
      %v3811 = vadd.f32 %v3746, %v3810
      %3812 = vmatmul.f32.gmra.mxu0 %v3485
      %v3813 = vpop.f32.mrf.mxu0
      %v3814 = vadd.f32 %v3749, %v3813
      %3815 = vmatmul.f32.gmra.mxu0 %v3488
      %v3816 = vpop.f32.mrf.mxu0
      %v3817 = vadd.f32 %v3752, %v3816
      %3818 = vmatmul.f32.gmra.mxu0 %v3491
      %v3819 = vpop.f32.mrf.mxu0
      %v3820 = vadd.f32 %v3755, %v3819
      %3821 = vmatmul.f32.gmra.mxu0 %v3494
      %v3822 = vpop.f32.mrf.mxu0
      %v3823 = vadd.f32 %v3758, %v3822
      %3824 = vmatmul.f32.gmra.mxu0 %v3497
      %v3825 = vpop.f32.mrf.mxu0
      %v3826 = vadd.f32 %v3761, %v3825
      %3827 = vmatmul.f32.gmra.mxu0 %v3500
      %v3828 = vpop.f32.mrf.mxu0
      %v3829 = vadd.f32 %v3764, %v3828
      %3830 = vmatmul.f32.gmra.mxu0 %v3503
      %v3831 = vpop.f32.mrf.mxu0
      %v3832 = vadd.f32 %v3767, %v3831
      %3833 = vmatmul.f32.gmra.mxu0 %v3506
      %v3834 = vpop.f32.mrf.mxu0
      %v3835 = vadd.f32 %v3770, %v3834
      %3836 = vmatmul.f32.gmra.mxu0 %v3509
      %v3837 = vpop.f32.mrf.mxu0
      %v3838 = vadd.f32 %v3773, %v3837
      %3839 = vmatmul.f32.gmra.mxu0 %v3512
      %v3840 = vpop.f32.mrf.mxu0
      %v3841 = vadd.f32 %v3776, %v3840
      %3842 = vmatmul.f32.gmra.mxu0 %v3515
      %v3843 = vpop.f32.mrf.mxu0
      %v3844 = vadd.f32 %v3779, %v3843
      %3845 = vdwg.mxu0
      %v3846 = vld [vmem:[%s14] sm:$0x1]
      %v3848 = vperm.slane %v3846, 0
      %v3850 = vadd.f32 %v3799, %v3848
      %v3851 = vadd.f32 %v3802, %v3848
      %v3852 = vadd.f32 %v3805, %v3848
      %v3853 = vadd.f32 %v3808, %v3848
      %v3854 = vadd.f32 %v3811, %v3848
      %v3855 = vadd.f32 %v3814, %v3848
      %v3856 = vadd.f32 %v3817, %v3848
      %v3857 = vadd.f32 %v3820, %v3848
      %v3858 = vadd.f32 %v3823, %v3848
      %v3859 = vadd.f32 %v3826, %v3848
      %v3860 = vadd.f32 %v3829, %v3848
      %v3861 = vadd.f32 %v3832, %v3848
      %v3862 = vadd.f32 %v3835, %v3848
      %v3863 = vadd.f32 %v3838, %v3848
      %v3864 = vadd.f32 %v3841, %v3848
      %v3865 = vadd.f32 %v3844, %v3848
      %v3866 = vtanh.pop %v3850
      %v3867 = vtanh.pop %v3851
      %v3868 = vtanh.pop %v3852
      %v3869 = vtanh.pop %v3853
      %v3870 = vtanh.pop %v3854
      %v3871 = vtanh.pop %v3855
      %v3872 = vtanh.pop %v3856
      %v3873 = vtanh.pop %v3857
      %v3874 = vtanh.pop %v3858
      %v3875 = vtanh.pop %v3859
      %v3876 = vtanh.pop %v3860
      %v3877 = vtanh.pop %v3861
      %v3878 = vtanh.pop %v3862
      %v3879 = vtanh.pop %v3863
      %v3880 = vtanh.pop %v3864
      %v3881 = vtanh.pop %v3865
      %v3882 = vld [vmem:[%s11] sm:$0xff]
      %v3883 = vld [vmem:[%s11 + $0x8] sm:$0xff]
      %v3884 = vld [vmem:[%s11 + $0x10] sm:$0xff]
      %v3885 = vld [vmem:[%s11 + $0x18] sm:$0x1]
      %v3886 = vld [vmem:[%s15] sm:$0x1]
      %v3888 = vperm.slane %v3886, 0
      %vm3890 = vcmask 203776
      %v3892 = vsel %vm3890, %v3866, 0
      %v3895 = vsel %vm3890, %v3867, 0
      %v3898 = vsel %vm3890, %v3868, 0
      %v3901 = vsel %vm3890, %v3869, 0
      %v3904 = vsel %vm3890, %v3870, 0
      %v3907 = vsel %vm3890, %v3871, 0
      %v3910 = vsel %vm3890, %v3872, 0
      %v3913 = vsel %vm3890, %v3873, 0
      %v3916 = vsel %vm3890, %v3874, 0
      %v3919 = vsel %vm3890, %v3875, 0
      %v3922 = vsel %vm3890, %v3876, 0
      %v3925 = vsel %vm3890, %v3877, 0
      %v3928 = vsel %vm3890, %v3878, 0
      %v3931 = vsel %vm3890, %v3879, 0
      %v3934 = vsel %vm3890, %v3880, 0
      %v3937 = vsel %vm3890, %v3881, 0
      %vm3939 = vcmask 1040384
      %v3941 = vsel %vm3939, %v3885, 0
      %3943 = vmatpush.msra.mxu0 0.0
      %3944 = vmatpush.msra.mxu0 0.0
      %3945 = vmatpush.msra.mxu0 0.0
      %3946 = vmatpush.msra.mxu0 0.0
      %3947 = vmatpush.msra.mxu0 0.0
      %3948 = vmatpush.msra.mxu0 0.0
      %3949 = vmatpush.msra.mxu0 0.0
      %3950 = vmatpush.msra.mxu0 0.0
      %3951 = vmatpush.msra.mxu0 0.0
      %3952 = vmatpush.msra.mxu0 0.0
      %3953 = vmatpush.msra.mxu0 0.0
      %3954 = vmatpush.msra.mxu0 0.0
      %3955 = vmatpush.msra.mxu0 %v3941
      %3956 = vmatpush.msra.mxu0 %v3884
      %3957 = vmatpush.msra.mxu0 %v3883
      %3958 = vmatpush.msra.mxu0 %v3882
      %3959 = vmatmul.f32.gmra.mxu0 %v3892
      %v3960 = vpop.f32.mrf.mxu0
      %v3961 = vadd.f32 %v3888, %v3960
      %3962 = vmatmul.f32.gmra.mxu0 %v3895
      %v3963 = vpop.f32.mrf.mxu0
      %v3964 = vadd.f32 %v3888, %v3963
      %3965 = vmatmul.f32.gmra.mxu0 %v3898
      %v3966 = vpop.f32.mrf.mxu0
      %v3967 = vadd.f32 %v3888, %v3966
      %3968 = vmatmul.f32.gmra.mxu0 %v3901
      %v3969 = vpop.f32.mrf.mxu0
      %v3970 = vadd.f32 %v3888, %v3969
      %3971 = vmatmul.f32.gmra.mxu0 %v3904
      %v3972 = vpop.f32.mrf.mxu0
      %v3973 = vadd.f32 %v3888, %v3972
      %3974 = vmatmul.f32.gmra.mxu0 %v3907
      %v3975 = vpop.f32.mrf.mxu0
      %v3976 = vadd.f32 %v3888, %v3975
      %3977 = vmatmul.f32.gmra.mxu0 %v3910
      %v3978 = vpop.f32.mrf.mxu0
      %v3979 = vadd.f32 %v3888, %v3978
      %3980 = vmatmul.f32.gmra.mxu0 %v3913
      %v3981 = vpop.f32.mrf.mxu0
      %v3982 = vadd.f32 %v3888, %v3981
      %3983 = vmatmul.f32.gmra.mxu0 %v3916
      %v3984 = vpop.f32.mrf.mxu0
      %v3985 = vadd.f32 %v3888, %v3984
      %3986 = vmatmul.f32.gmra.mxu0 %v3919
      %v3987 = vpop.f32.mrf.mxu0
      %v3988 = vadd.f32 %v3888, %v3987
      %3989 = vmatmul.f32.gmra.mxu0 %v3922
      %v3990 = vpop.f32.mrf.mxu0
      %v3991 = vadd.f32 %v3888, %v3990
      %3992 = vmatmul.f32.gmra.mxu0 %v3925
      %v3993 = vpop.f32.mrf.mxu0
      %v3994 = vadd.f32 %v3888, %v3993
      %3995 = vmatmul.f32.gmra.mxu0 %v3928
      %v3996 = vpop.f32.mrf.mxu0
      %v3997 = vadd.f32 %v3888, %v3996
      %3998 = vmatmul.f32.gmra.mxu0 %v3931
      %v3999 = vpop.f32.mrf.mxu0
      %v4000 = vadd.f32 %v3888, %v3999
      %4001 = vmatmul.f32.gmra.mxu0 %v3934
      %v4002 = vpop.f32.mrf.mxu0
      %v4003 = vadd.f32 %v3888, %v4002
      %4004 = vmatmul.f32.gmra.mxu0 %v3937
      %v4005 = vpop.f32.mrf.mxu0
      %v4006 = vadd.f32 %v3888, %v4005
      %4007 = vdwg.mxu0
      %v4008 = vtanh.pop %v3961
      %v4009 = vtanh.pop %v3964
      %v4010 = vtanh.pop %v3967
      %v4011 = vtanh.pop %v3970
      %v4012 = vtanh.pop %v3973
      %v4013 = vtanh.pop %v3976
      %v4014 = vtanh.pop %v3979
      %v4015 = vtanh.pop %v3982
      %v4016 = vtanh.pop %v3985
      %v4017 = vtanh.pop %v3988
      %v4018 = vtanh.pop %v3991
      %v4019 = vtanh.pop %v3994
      %v4020 = vtanh.pop %v3997
      %v4021 = vtanh.pop %v4000
      %v4022 = vtanh.pop %v4003
      %v4023 = vtanh.pop %v4006
      %v4024 = vld [vmem:[%s12] sm:$0xff]
      %v4025 = vld [vmem:[%s12 + $0x8] sm:$0x3]
      %v4026 = vld [vmem:[%s16] sm:$0x1]
      %v4028 = vperm.slane %v4026, 0
      %v4031 = vsel %vm3350, %v4008, 0
      %v4034 = vsel %vm3350, %v4009, 0
      %v4037 = vsel %vm3350, %v4010, 0
      %v4040 = vsel %vm3350, %v4011, 0
      %v4043 = vsel %vm3350, %v4012, 0
      %v4046 = vsel %vm3350, %v4013, 0
      %v4049 = vsel %vm3350, %v4014, 0
      %v4052 = vsel %vm3350, %v4015, 0
      %v4055 = vsel %vm3350, %v4016, 0
      %v4058 = vsel %vm3350, %v4017, 0
      %v4061 = vsel %vm3350, %v4018, 0
      %v4064 = vsel %vm3350, %v4019, 0
      %v4067 = vsel %vm3350, %v4020, 0
      %v4070 = vsel %vm3350, %v4021, 0
      %v4073 = vsel %vm3350, %v4022, 0
      %v4076 = vsel %vm3350, %v4023, 0
      %v4079 = vsel %vm3399, %v4025, 0
      %4081 = vmatpush.msra.mxu0 0.0
      %4082 = vmatpush.msra.mxu0 0.0
      %4083 = vmatpush.msra.mxu0 0.0
      %4084 = vmatpush.msra.mxu0 0.0
      %4085 = vmatpush.msra.mxu0 0.0
      %4086 = vmatpush.msra.mxu0 0.0
      %4087 = vmatpush.msra.mxu0 0.0
      %4088 = vmatpush.msra.mxu0 0.0
      %4089 = vmatpush.msra.mxu0 0.0
      %4090 = vmatpush.msra.mxu0 0.0
      %4091 = vmatpush.msra.mxu0 0.0
      %4092 = vmatpush.msra.mxu0 0.0
      %4093 = vmatpush.msra.mxu0 0.0
      %4094 = vmatpush.msra.mxu0 0.0
      %4095 = vmatpush.msra.mxu0 %v4079
      %4096 = vmatpush.msra.mxu0 %v4024
      %4097 = vmatmul.f32.gmra.mxu0 %v4031
      %v4098 = vpop.f32.mrf.mxu0
      %v4099 = vadd.f32 %v4028, %v4098
      %4100 = vmatmul.f32.gmra.mxu0 %v4034
      %v4101 = vpop.f32.mrf.mxu0
      %v4102 = vadd.f32 %v4028, %v4101
      %4103 = vmatmul.f32.gmra.mxu0 %v4037
      %v4104 = vpop.f32.mrf.mxu0
      %v4105 = vadd.f32 %v4028, %v4104
      %4106 = vmatmul.f32.gmra.mxu0 %v4040
      %v4107 = vpop.f32.mrf.mxu0
      %v4108 = vadd.f32 %v4028, %v4107
      %4109 = vmatmul.f32.gmra.mxu0 %v4043
      %v4110 = vpop.f32.mrf.mxu0
      %v4111 = vadd.f32 %v4028, %v4110
      %4112 = vmatmul.f32.gmra.mxu0 %v4046
      %v4113 = vpop.f32.mrf.mxu0
      %v4114 = vadd.f32 %v4028, %v4113
      %4115 = vmatmul.f32.gmra.mxu0 %v4049
      %v4116 = vpop.f32.mrf.mxu0
      %v4117 = vadd.f32 %v4028, %v4116
      %4118 = vmatmul.f32.gmra.mxu0 %v4052
      %v4119 = vpop.f32.mrf.mxu0
      %v4120 = vadd.f32 %v4028, %v4119
      %4121 = vmatmul.f32.gmra.mxu0 %v4055
      %v4122 = vpop.f32.mrf.mxu0
      %v4123 = vadd.f32 %v4028, %v4122
      %4124 = vmatmul.f32.gmra.mxu0 %v4058
      %v4125 = vpop.f32.mrf.mxu0
      %v4126 = vadd.f32 %v4028, %v4125
      %4127 = vmatmul.f32.gmra.mxu0 %v4061
      %v4128 = vpop.f32.mrf.mxu0
      %v4129 = vadd.f32 %v4028, %v4128
      %4130 = vmatmul.f32.gmra.mxu0 %v4064
      %v4131 = vpop.f32.mrf.mxu0
      %v4132 = vadd.f32 %v4028, %v4131
      %4133 = vmatmul.f32.gmra.mxu0 %v4067
      %v4134 = vpop.f32.mrf.mxu0
      %v4135 = vadd.f32 %v4028, %v4134
      %4136 = vmatmul.f32.gmra.mxu0 %v4070
      %v4137 = vpop.f32.mrf.mxu0
      %v4138 = vadd.f32 %v4028, %v4137
      %4139 = vmatmul.f32.gmra.mxu0 %v4073
      %v4140 = vpop.f32.mrf.mxu0
      %v4141 = vadd.f32 %v4028, %v4140
      %4142 = vmatmul.f32.gmra.mxu0 %v4076
      %v4143 = vpop.f32.mrf.mxu0
      %v4144 = vadd.f32 %v4028, %v4143
      %4145 = vdwg.mxu0
      %vm4146 = vcmask 64512
      %4147 = vst.msk [vmem:[%s653] sm:$0xff] %vm4146, %v4099
      %4148 = vst.msk [vmem:[%s653 + $0x8] sm:$0xff] %vm4146, %v4102
      %4149 = vst.msk [vmem:[%s653 + $0x10] sm:$0xff] %vm4146, %v4105
      %4150 = vst.msk [vmem:[%s653 + $0x18] sm:$0xff] %vm4146, %v4108
      %4151 = vst.msk [vmem:[%s653 + $0x20] sm:$0xff] %vm4146, %v4111
      %4152 = vst.msk [vmem:[%s653 + $0x28] sm:$0xff] %vm4146, %v4114
      %4153 = vst.msk [vmem:[%s653 + $0x30] sm:$0xff] %vm4146, %v4117
      %4154 = vst.msk [vmem:[%s653 + $0x38] sm:$0xff] %vm4146, %v4120
      %4155 = vst.msk [vmem:[%s653 + $0x40] sm:$0xff] %vm4146, %v4123
      %4156 = vst.msk [vmem:[%s653 + $0x48] sm:$0xff] %vm4146, %v4126
      %4157 = vst.msk [vmem:[%s653 + $0x50] sm:$0xff] %vm4146, %v4129
      %4158 = vst.msk [vmem:[%s653 + $0x58] sm:$0xff] %vm4146, %v4132
      %4159 = vst.msk [vmem:[%s653 + $0x60] sm:$0xff] %vm4146, %v4135
      %4160 = vst.msk [vmem:[%s653 + $0x68] sm:$0xff] %vm4146, %v4138
      %4161 = vst.msk [vmem:[%s653 + $0x70] sm:$0xff] %vm4146, %v4141
      %4162 = vst.msk [vmem:[%s653 + $0x78] sm:$0xff] %vm4146, %v4144
      %s4163 = smul.u32 16, %s28
      %p4164 = scmp.lt.s32.totalorder %s4163, 31
      %s4165 = scalar_select %p4164, %s4163, 31
      %s4166 = smul.addr %s4165, 8
      %s4167 = scalar_lea.vmem %s17, %s4166
      // Predicated region
      $region89: #{allseq_forward.1} parent=87 // pred_check
        %p4168 = pneg %p428
      $region90: #{allseq_forward.1} parent=87 // pred_check_branch
        %4170 = sbr.rel (%p4168) target = $region92
      $region91: #{allseq_forward.1} parent=87 // pred_region
        %s4171 = smul.u32 16, %s28
      $region92: #{allseq_forward.1} parent=87 // pred_fallthru
        _
    $region88: #{allseq_forward.1} parent=5 // pred_fallthru
      _
    %p4172 = scmp.le.s32.totalorder 2, %s23
    // Predicated region
    $region93: #{allseq_forward.1} parent=5 // pred_check
      %p4173 = pneg %p4172
    $region94: #{allseq_forward.1} parent=5 // pred_check_branch
      %4175 = sbr.rel (%p4173) target = $region96
    $region95: #{allseq_forward.1} parent=5 // pred_region
      %s4176 = ssub.s32 %s23, 2
      // Predicated region
      $region97: #{allseq_forward.1} parent=95 // pred_check
        %p4177 = pneg %p434
      $region98: #{allseq_forward.1} parent=95 // pred_check_branch
        %4179 = sbr.rel (%p4177) target = $region100
      $region99: #{allseq_forward.1} parent=95 // pred_region
        %s4180 = smul.u32 16, %s29
        %p4181 = scmp.lt.s32.totalorder %s4180, 31
        %s4182 = scalar_select %p4181, %s4180, 31
        %s4183 = smul.addr %s4182, 8
        %s4184 = scalar_lea.vmem %s17, %s4183
      $region100: #{allseq_forward.1} parent=95 // pred_fallthru
        _
    $region96: #{allseq_forward.1} parent=5 // pred_fallthru
      _
  $region6: #{allseq_forward.1} parent=0 // loop_footer
    %s27 = sadd.s32 1, %s23
  $region7: #{allseq_forward.1} parent=0 // loop_footer_branch
    %22 = sbr.rel target = $region3
  $region8: #{allseq_forward.1} parent=0 // loop_exit
    _

</llo_original>
